<compile_context>
chip_gen: v7x
topology: tpu7x:2x2x1
jax: 0.10.0
libtpu: 0.0.40
codegen_flags: <defaults>
</compile_context>

<pallas_src>
import numpy as np
import jax
import jax.numpy as jnp
from jax.experimental import pallas as pl
from jax.experimental.pallas import tpu as pltpu


# ---------------------------------------------------------------------------
# Problem configuration
# ---------------------------------------------------------------------------
BATCH = 2
IN_CH = 4
IMG = 16
NEG_SLOPE = 0.2

C0, C1, C2, C3 = 8, 8, 16, 16          # channels=(8, 8, 16, 16)
UNET_OUT = 8
FINAL_CH = (8, 8)
OUT_CH = 2                              # spatial_dims
OUT_CH_PAD = 8                          # pad 2 -> 8 so W*Cout == 128 lanes (dense store)

H16, H8, H4 = IMG, IMG // 2, IMG // 4
R16, R8, R4 = BATCH * (H16 + 2), BATCH * (H8 + 2), BATCH * (H4 + 2)   # 36, 20, 12
RV16, RV8, RV4 = R16 - 2, R8 - 2, R4 - 2                              # 34, 18, 10


# ---------------------------------------------------------------------------
# The single fused kernel
# ---------------------------------------------------------------------------
def _voxelmorph_fused_kernel(
        xpad_ref, rm16_ref, rm8_ref, rm4_ref,
        rsp16_ref, ce16_ref, co16_ref, rsp8_ref, ce8_ref, co8_ref,
        ru48_ref, ru816_ref,
        wd0_ref, bd0_ref, wd1_ref, bd1_ref, wbt_ref, bbt_ref,
        wu1a_ref, wu1b_ref, bu1_ref, wu0a_ref, wu0b_ref, bu0_ref,
        wf0_ref, bf0_ref, wf1_ref, bf1_ref, wfo_ref, bfo_ref,
        o_ref,
        b16_a0, b16_u1u, b16_w1, b16_w2, b8_a0p, b8_a1, b8_b2u, b4s):

    # Zero the padded activation buffers once: their zero top/bottom rows are
    # the vertical SAME padding for every conv at that resolution.
    for buf in (b16_a0, b16_u1u, b16_w1, b16_w2, b8_a0p, b8_a1, b8_b2u, b4s):
        buf[...] = jnp.zeros(buf.shape, buf.dtype)

    def mm(a, b):
        return jnp.dot(a, b, preferred_element_type=jnp.float32)

    def band_conv(srcs, rv, bias_ref, mask_ref, act=True):
        """3x3 SAME conv in lane-dense (rows, W*C) layout.

        Each source contributes 3 banded matmuls (one per vertical tap ky);
        horizontal taps + horizontal zero padding (+ optionally the nearest-up
        2x column duplication of the source) live inside the static
        (W_src*Cin, W*Cout) band matrices.  `mask_ref` re-zeroes the two
        separator rows between stacked images after bias + activation.
        """
        acc = None
        for src_ref, w_ref in srcs:
            for ky in range(3):
                d = mm(src_ref[ky:ky + rv, :], w_ref[ky])
                acc = d if acc is None else acc + d
        out = acc + bias_ref[...]
        if act:
            out = jnp.where(out >= 0, out, NEG_SLOPE * out)
        return out * mask_ref[...]

    def maxpool2x2(x_val, src_ref, rv, rsp_ref, ce_ref, co_ref):
        vm = jnp.maximum(x_val, src_ref[2:2 + rv, :])      # vertical pair max
        rp = mm(rsp_ref[...], vm)                          # keep even rows, per image
        return jnp.maximum(mm(rp, ce_ref[...]),            # horizontal pair max
                           mm(rp, co_ref[...]))

    # ---------------- encoder ------------------------------------------------
    a0 = band_conv([(xpad_ref, wd0_ref)], RV16, bd0_ref, rm16_ref)        # 16x16, C=8
    b16_a0[1:1 + RV16, :] = a0

    a0p = maxpool2x2(a0, b16_a0, RV16, rsp16_ref, ce16_ref, co16_ref)     # 8x8, C=8
    b8_a0p[1:1 + RV8, :] = a0p

    a1 = band_conv([(b8_a0p, wd1_ref)], RV8, bd1_ref, rm8_ref)            # 8x8, C=16
    b8_a1[1:1 + RV8, :] = a1

    a1p = maxpool2x2(a1, b8_a1, RV8, rsp8_ref, ce8_ref, co8_ref)          # 4x4, C=16
    b4s[1:1 + RV4, :] = a1p

    # ---------------- bottom -------------------------------------------------
    b2 = band_conv([(b4s, wbt_ref)], RV4, bbt_ref, rm4_ref)               # 4x4, C=16
    # nearest-up 2x: rows via 0/1 matmul, columns folded into wu1b's band.
    b8_b2u[1:1 + RV8, :] = mm(ru48_ref[...], b2)

    # ---------------- decoder (skip concat == split-weight conv sum) ---------
    u1 = band_conv([(b8_a1, wu1a_ref), (b8_b2u, wu1b_ref)],
                   RV8, bu1_ref, rm8_ref)                                 # 8x8, C=8
    b16_u1u[1:1 + RV16, :] = mm(ru816_ref[...], u1)

    u0 = band_conv([(b16_a0, wu0a_ref), (b16_u1u, wu0b_ref)],
                   RV16, bu0_ref, rm16_ref)                               # 16x16, C=8 (UNet out)
    b16_w1[1:1 + RV16, :] = u0

    # ---------------- final conv block ---------------------------------------
    f0 = band_conv([(b16_w1, wf0_ref)], RV16, bf0_ref, rm16_ref)
    b16_w2[1:1 + RV16, :] = f0
    f1 = band_conv([(b16_w2, wf1_ref)], RV16, bf1_ref, rm16_ref)
    b16_w1[1:1 + RV16, :] = f1
    out = band_conv([(b16_w1, wfo_ref)], RV16, bfo_ref, rm16_ref, act=False)
    o_ref[...] = out.astype(o_ref.dtype)    # dense 128-lane store, the only HBM write


# ---------------------------------------------------------------------------
# Trace-time constant builders (row masks, pool/upsample selection matrices)
# ---------------------------------------------------------------------------
def _row_mask(h):
    """(rv, 1) mask over the interior-rows layout; zero at the separator rows
    between consecutive images."""
    rv = BATCH * (h + 2) - 2
    m = np.ones((rv, 1), np.float32)
    for n in range(1, BATCH):
        m[n * (h + 2) - 2, 0] = 0.0
        m[n * (h + 2) - 1, 0] = 0.0
    return m


def _row_sel_pool(h):
    """(rv_out, rv_in) 0/1: picks the top row of each vertical 2x2 pair out of
    the vertical-pair-max tensor, producing the half-res interior-rows layout
    (separator rows stay zero)."""
    ho = h // 2
    rv_in = BATCH * (h + 2) - 2
    rv_out = BATCH * (ho + 2) - 2
    s = np.zeros((rv_out, rv_in), np.float32)
    for n in range(BATCH):
        for i in range(ho):
            s[n * (ho + 2) + i, n * (h + 2) + 2 * i] = 1.0
    return s


def _col_sel_pool(w, c, parity):
    """(w*c, (w//2)*c) 0/1: picks lane block 2*w_out + parity -> w_out."""
    m = np.zeros((w * c, (w // 2) * c), np.float32)
    for wo in range(w // 2):
        wi = 2 * wo + parity
        for ci in range(c):
            m[wi * c + ci, wo * c + ci] = 1.0
    return m


def _row_up2x(h):
    """(rv_out, rv_in) 0/1: nearest-neighbour row duplication h -> 2h between
    interior-rows layouts (separator rows stay zero)."""
    ho = 2 * h
    rv_in = BATCH * (h + 2) - 2
    rv_out = BATCH * (ho + 2) - 2
    u = np.zeros((rv_out, rv_in), np.float32)
    for n in range(BATCH):
        for i in range(ho):
            u[n * (ho + 2) + i, n * (h + 2) + i // 2] = 1.0
    return u


# ---------------------------------------------------------------------------
# Banded conv weights (traceable): fold horizontal taps (and optionally the
# nearest-up 2x column duplication of the source) into (W_src*Cin, W*Cout).
# ---------------------------------------------------------------------------
def _band_weights(w_hwio, width, upsampled_src=False):
    cin, cout = int(w_hwio.shape[2]), int(w_hwio.shape[3])
    src_blocks = width // 2 if upsampled_src else width
    bands = []
    for ky in range(3):
        m = None
        for kx in range(3):
            sel = np.zeros((src_blocks, width), np.float32)
            for wo in range(width):
                wi = wo + kx - 1
                if 0 <= wi < width:                  # horizontal SAME zero padding
                    sel[(wi // 2) if upsampled_src else wi, wo] = 1.0
            term = jnp.kron(jnp.asarray(sel), w_hwio[ky, kx])
            m = term if m is None else m + term
        bands.append(m)
    return jnp.stack(bands)                          # (3, src_blocks*cin, width*cout)


def _bias_row(b, width):
    return jnp.tile(b.reshape(1, -1), (1, width))    # (1, width*cout)


def _prep_kernel_weights(params):
    w_d0, b_d0 = params["down0"]     # (3,3,4,8)
    w_d1, b_d1 = params["down1"]     # (3,3,8,16)
    w_bt, b_bt = params["bottom"]    # (3,3,16,16)
    w_u1, b_u1 = params["up1"]       # (3,3,32,8): cat([a1 (16), up(bottom) (16)])
    w_u0, b_u0 = params["up0"]       # (3,3,16,8): cat([a0 (8),  up(u1) (8)])
    w_f0, b_f0 = params["fc0"]
    w_f1, b_f1 = params["fc1"]
    w_fo, b_fo = params["fc_out"]    # (3,3,8,2)

    w_u1a, w_u1b = w_u1[:, :, :C2, :], w_u1[:, :, C2:, :]
    w_u0a, w_u0b = w_u0[:, :, :C0, :], w_u0[:, :, C0:, :]

    # Pad the final conv's Cout 2 -> 8 so the output slab is a dense 128-lane store.
    w_fo_p = jnp.zeros((3, 3, FINAL_CH[-1], OUT_CH_PAD), jnp.float32).at[..., :OUT_CH].set(w_fo)
    b_fo_p = jnp.zeros((OUT_CH_PAD,), jnp.float32).at[:OUT_CH].set(b_fo)

    return [
        _band_weights(w_d0, H16), _bias_row(b_d0, H16),
        _band_weights(w_d1, H8), _bias_row(b_d1, H8),
        _band_weights(w_bt, H4), _bias_row(b_bt, H4),
        _band_weights(w_u1a, H8),
        _band_weights(w_u1b, H8, upsampled_src=True),    # col-upsample folded in
        _bias_row(b_u1, H8),
        _band_weights(w_u0a, H16),
        _band_weights(w_u0b, H16, upsampled_src=True),   # col-upsample folded in
        _bias_row(b_u0, H16),
        _band_weights(w_f0, H16), _bias_row(b_f0, H16),
        _band_weights(w_f1, H16), _bias_row(b_f1, H16),
        _band_weights(w_fo_p, H16), _bias_row(b_fo_p, H16),
    ]


# ---------------------------------------------------------------------------
# Wrapper: NCHW in -> single fused pallas_call -> NCHW out
# ---------------------------------------------------------------------------
def voxelmorph_unet_forward_pallas(x_nchw, params):
    n, cin, h, w = x_nchw.shape
    assert (n, cin, h, w) == (BATCH, IN_CH, IMG, IMG)

    # NCHW -> lane-dense (rows, W*C) layout with one zero row above/below each image.
    x_rows = jnp.transpose(x_nchw, (0, 2, 3, 1)).reshape(n, h, w * cin)
    xpad = jnp.pad(x_rows, ((0, 0), (1, 1), (0, 0))).reshape(n * (h + 2), w * cin)  # (36, 64)

    consts = [
        jnp.asarray(_row_mask(H16)), jnp.asarray(_row_mask(H8)), jnp.asarray(_row_mask(H4)),
        jnp.asarray(_row_sel_pool(H16)),
        jnp.asarray(_col_sel_pool(H16, C0, 0)), jnp.asarray(_col_sel_pool(H16, C0, 1)),
        jnp.asarray(_row_sel_pool(H8)),
        jnp.asarray(_col_sel_pool(H8, C2, 0)), jnp.asarray(_col_sel_pool(H8, C2, 1)),
        jnp.asarray(_row_up2x(H4)), jnp.asarray(_row_up2x(H8)),
    ]
    inputs = [xpad] + consts + _prep_kernel_weights(params)

    out_pad = pl.pallas_call(
        _voxelmorph_fused_kernel,
        out_shape=jax.ShapeDtypeStruct((RV16, H16 * OUT_CH_PAD), jnp.float32),   # (34, 128)
        in_specs=[pl.BlockSpec(memory_space=pltpu.MemorySpace.VMEM)] * len(inputs),
        out_specs=pl.BlockSpec(memory_space=pltpu.MemorySpace.VMEM),
        scratch_shapes=[
            pltpu.VMEM((R16, H16 * C0), jnp.float32),           # a0 (skip)          (36,128)
            pltpu.VMEM((R16, H8 * C1), jnp.float32),            # u1 row-upsampled   (36, 64)
            pltpu.VMEM((R16, H16 * UNET_OUT), jnp.float32),     # work ping          (36,128)
            pltpu.VMEM((R16, H16 * FINAL_CH[0]), jnp.float32),  # work pong          (36,128)
            pltpu.VMEM((R8, H8 * C0), jnp.float32),             # pooled a0          (20, 64)
            pltpu.VMEM((R8, H8 * C2), jnp.float32),             # a1 (skip)          (20,128)
            pltpu.VMEM((R8, H4 * C3), jnp.float32),             # bottom row-upsamp  (20, 64)
            pltpu.VMEM((R4, H4 * C2), jnp.float32),             # pooled a1          (12, 64)
        ],
    )(*inputs)

    # (34, 128) padded slab -> (N, 2, 16, 16)
    o = out_pad.reshape(RV16, H16, OUT_CH_PAD)[:, :, :OUT_CH]
    imgs = [o[b * (H16 + 2): b * (H16 + 2) + H16] for b in range(BATCH)]
    out = jnp.stack(imgs, axis=0)                        # (N, 16, 16, 2)
    return jnp.transpose(out, (0, 3, 1, 2))              # NHWC -> NCHW


# ---------------------------------------------------------------------------
# Pure-JAX reference (numerical sanity check)
# ---------------------------------------------------------------------------
def conv3x3_ref(x, w_hwio, b, *, apply_act=True, negative_slope=NEG_SLOPE):
    out = jax.lax.conv_general_dilated(
        x, w_hwio, window_strides=(1, 1), padding="SAME",
        dimension_numbers=("NHWC", "HWIO", "NHWC"),
    )
    out = out + b.reshape(1, 1, 1, -1)
    if apply_act:
        out = jnp.where(out >= 0, out, negative_slope * out)
    return out


def maxpool2x2_ref(x):
    n, h, w, c = x.shape
    return x.reshape(n, h // 2, 2, w // 2, 2, c).max(axis=(2, 4))


def upsample2x_nearest_ref(x):
    return jnp.repeat(jnp.repeat(x, 2, axis=1), 2, axis=2)


def voxelmorph_unet_forward_ref(x_nchw, params):
    x = jnp.transpose(x_nchw, (0, 2, 3, 1))
    a0 = conv3x3_ref(x, *params["down0"])
    a1 = conv3x3_ref(maxpool2x2_ref(a0), *params["down1"])
    b2 = conv3x3_ref(maxpool2x2_ref(a1), *params["bottom"])
    b2 = upsample2x_nearest_ref(b2)
    s1 = jnp.concatenate([a1, b2], axis=-1)
    u1 = conv3x3_ref(s1, *params["up1"])
    u1 = upsample2x_nearest_ref(u1)
    s0 = jnp.concatenate([a0, u1], axis=-1)
    u0 = conv3x3_ref(s0, *params["up0"])
    f = conv3x3_ref(u0, *params["fc0"])
    f = conv3x3_ref(f, *params["fc1"])
    out = conv3x3_ref(f, *params["fc_out"], apply_act=False)
    return jnp.transpose(out, (0, 3, 1, 2))


# ---------------------------------------------------------------------------
# Deterministic parameter init (shapes from the module's __init__)
# ---------------------------------------------------------------------------
def init_params(key):
    def init_conv(k, cin, cout, ksize=3, std=0.1):
        kw, kb = jax.random.split(k)
        w = jax.random.normal(kw, (ksize, ksize, cin, cout), jnp.float32) * std
        b = jax.random.normal(kb, (cout,), jnp.float32) * std
        return (w, b)

    keys = jax.random.split(key, 8)
    return {
        "down0":  init_conv(keys[0], IN_CH, C0),   # top down:   in_channels -> channels[0]
        "down1":  init_conv(keys[1], C0, C2),      # down:       channels[0] -> channels[2]
        "bottom": init_conv(keys[2], C2, C3),      # bottom:     channels[2] -> channels[3]
        "up1":    init_conv(keys[3], C2 + C3, C1),  # up:        channels[2]+channels[3] -> channels[1]
        "up0":    init_conv(keys[4], C0 + C1, UNET_OUT),  # top up: channels[0]+channels[1] -> unet_out
        "fc0":    init_conv(keys[5], UNET_OUT, FINAL_CH[0]),
        "fc1":    init_conv(keys[6], FINAL_CH[0], FINAL_CH[1]),
        "fc_out": init_conv(keys[7], FINAL_CH[1], OUT_CH),
    }


if __name__ == "__main__":
    key = jax.random.PRNGKey(0)
    k_par, k_in = jax.random.split(key)
    params = init_params(k_par)

    # concatenated (moving, fixed) pair, NCHW like the PyTorch module input.
    x = jax.random.normal(k_in, (BATCH, IN_CH, IMG, IMG), jnp.float32)

    pallas_fwd = jax.jit(lambda xx: voxelmorph_unet_forward_pallas(xx, params))
    out = jax.block_until_ready(pallas_fwd(x))

    ref_fwd = jax.jit(lambda xx: voxelmorph_unet_forward_ref(xx, params))
    ref = jax.block_until_ready(ref_fwd(x))

    assert out.shape == (BATCH, OUT_CH, IMG, IMG), out.shape
    # Both sides run f32 matmuls/convs at the TPU's default MXU precision,
    # so an absolute bound of 1e-2 is the safe comparison here.
    max_err = float(jnp.max(jnp.abs(out - ref)))
    if not (bool(jnp.isfinite(out).all()) and max_err < 1e-2):
        raise RuntimeError(f"mismatch vs reference, max abs err = {max_err}")

    print("KERNEL_OK")
</pallas_src>

<mosaic_0001>
module attributes {stable_mosaic.version = 11 : i64} {
  func.func @_voxelmorph_fused_kernel(%arg0: memref<36x64xf32, #tpu.memory_space<vmem>>, %arg1: memref<34x1xf32, #tpu.memory_space<vmem>>, %arg2: memref<18x1xf32, #tpu.memory_space<vmem>>, %arg3: memref<10x1xf32, #tpu.memory_space<vmem>>, %arg4: memref<18x34xf32, #tpu.memory_space<vmem>>, %arg5: memref<128x64xf32, #tpu.memory_space<vmem>>, %arg6: memref<128x64xf32, #tpu.memory_space<vmem>>, %arg7: memref<10x18xf32, #tpu.memory_space<vmem>>, %arg8: memref<128x64xf32, #tpu.memory_space<vmem>>, %arg9: memref<128x64xf32, #tpu.memory_space<vmem>>, %arg10: memref<18x10xf32, #tpu.memory_space<vmem>>, %arg11: memref<34x18xf32, #tpu.memory_space<vmem>>, %arg12: memref<3x64x128xf32, #tpu.memory_space<vmem>>, %arg13: memref<1x128xf32, #tpu.memory_space<vmem>>, %arg14: memref<3x64x128xf32, #tpu.memory_space<vmem>>, %arg15: memref<1x128xf32, #tpu.memory_space<vmem>>, %arg16: memref<3x64x64xf32, #tpu.memory_space<vmem>>, %arg17: memref<1x64xf32, #tpu.memory_space<vmem>>, %arg18: memref<3x128x64xf32, #tpu.memory_space<vmem>>, %arg19: memref<3x64x64xf32, #tpu.memory_space<vmem>>, %arg20: memref<1x64xf32, #tpu.memory_space<vmem>>, %arg21: memref<3x128x128xf32, #tpu.memory_space<vmem>>, %arg22: memref<3x64x128xf32, #tpu.memory_space<vmem>>, %arg23: memref<1x128xf32, #tpu.memory_space<vmem>>, %arg24: memref<3x128x128xf32, #tpu.memory_space<vmem>>, %arg25: memref<1x128xf32, #tpu.memory_space<vmem>>, %arg26: memref<3x128x128xf32, #tpu.memory_space<vmem>>, %arg27: memref<1x128xf32, #tpu.memory_space<vmem>>, %arg28: memref<3x128x128xf32, #tpu.memory_space<vmem>>, %arg29: memref<1x128xf32, #tpu.memory_space<vmem>>, %arg30: memref<34x128xf32, #tpu.memory_space<vmem>>, %arg31: memref<36x128xf32, #tpu.memory_space<vmem>>, %arg32: memref<36x64xf32, #tpu.memory_space<vmem>>, %arg33: memref<36x128xf32, #tpu.memory_space<vmem>>, %arg34: memref<36x128xf32, #tpu.memory_space<vmem>>, %arg35: memref<20x64xf32, #tpu.memory_space<vmem>>, %arg36: memref<20x128xf32, #tpu.memory_space<vmem>>, %arg37: memref<20x64xf32, #tpu.memory_space<vmem>>, %arg38: memref<12x64xf32, #tpu.memory_space<vmem>>) attributes {dimension_semantics = [], scalar_prefetch = 0 : i64, scratch_operands = 8 : i64, tpu.core_type = #tpu.core_type<tc>} {
    %cst = arith.constant 0.000000e+00 : f32
    %0 = vector.broadcast %cst : f32 to vector<36x128xf32>
    %c0 = arith.constant 0 : index
    %c0_0 = arith.constant 0 : index
    %1 = vector.load %arg31[%c0, %c0_0] : memref<36x128xf32, #tpu.memory_space<vmem>>, vector<36x128xf32>
    tpu.vector_store %arg31[%c0, %c0_0], %0 {strides = array<i32>} : memref<36x128xf32, #tpu.memory_space<vmem>>, vector<36x128xf32>,
    %cst_1 = arith.constant 0.000000e+00 : f32
    %2 = vector.broadcast %cst_1 : f32 to vector<36x64xf32>
    %c0_2 = arith.constant 0 : index
    %c0_3 = arith.constant 0 : index
    %3 = vector.load %arg32[%c0_2, %c0_3] : memref<36x64xf32, #tpu.memory_space<vmem>>, vector<36x64xf32>
    tpu.vector_store %arg32[%c0_2, %c0_3], %2 {strides = array<i32>} : memref<36x64xf32, #tpu.memory_space<vmem>>, vector<36x64xf32>,
    %cst_4 = arith.constant 0.000000e+00 : f32
    %4 = vector.broadcast %cst_4 : f32 to vector<36x128xf32>
    %c0_5 = arith.constant 0 : index
    %c0_6 = arith.constant 0 : index
    %5 = vector.load %arg33[%c0_5, %c0_6] : memref<36x128xf32, #tpu.memory_space<vmem>>, vector<36x128xf32>
    tpu.vector_store %arg33[%c0_5, %c0_6], %4 {strides = array<i32>} : memref<36x128xf32, #tpu.memory_space<vmem>>, vector<36x128xf32>,
    %cst_7 = arith.constant 0.000000e+00 : f32
    %6 = vector.broadcast %cst_7 : f32 to vector<36x128xf32>
    %c0_8 = arith.constant 0 : index
    %c0_9 = arith.constant 0 : index
    %7 = vector.load %arg34[%c0_8, %c0_9] : memref<36x128xf32, #tpu.memory_space<vmem>>, vector<36x128xf32>
    tpu.vector_store %arg34[%c0_8, %c0_9], %6 {strides = array<i32>} : memref<36x128xf32, #tpu.memory_space<vmem>>, vector<36x128xf32>,
    %cst_10 = arith.constant 0.000000e+00 : f32
    %8 = vector.broadcast %cst_10 : f32 to vector<20x64xf32>
    %c0_11 = arith.constant 0 : index
    %c0_12 = arith.constant 0 : index
    %9 = vector.load %arg35[%c0_11, %c0_12] : memref<20x64xf32, #tpu.memory_space<vmem>>, vector<20x64xf32>
    tpu.vector_store %arg35[%c0_11, %c0_12], %8 {strides = array<i32>} : memref<20x64xf32, #tpu.memory_space<vmem>>, vector<20x64xf32>,
    %cst_13 = arith.constant 0.000000e+00 : f32
    %10 = vector.broadcast %cst_13 : f32 to vector<20x128xf32>
    %c0_14 = arith.constant 0 : index
    %c0_15 = arith.constant 0 : index
    %11 = vector.load %arg36[%c0_14, %c0_15] : memref<20x128xf32, #tpu.memory_space<vmem>>, vector<20x128xf32>
    tpu.vector_store %arg36[%c0_14, %c0_15], %10 {strides = array<i32>} : memref<20x128xf32, #tpu.memory_space<vmem>>, vector<20x128xf32>,
    %cst_16 = arith.constant 0.000000e+00 : f32
    %12 = vector.broadcast %cst_16 : f32 to vector<20x64xf32>
    %c0_17 = arith.constant 0 : index
    %c0_18 = arith.constant 0 : index
    %13 = vector.load %arg37[%c0_17, %c0_18] : memref<20x64xf32, #tpu.memory_space<vmem>>, vector<20x64xf32>
    tpu.vector_store %arg37[%c0_17, %c0_18], %12 {strides = array<i32>} : memref<20x64xf32, #tpu.memory_space<vmem>>, vector<20x64xf32>,
    %cst_19 = arith.constant 0.000000e+00 : f32
    %14 = vector.broadcast %cst_19 : f32 to vector<12x64xf32>
    %c0_20 = arith.constant 0 : index
    %c0_21 = arith.constant 0 : index
    %15 = vector.load %arg38[%c0_20, %c0_21] : memref<12x64xf32, #tpu.memory_space<vmem>>, vector<12x64xf32>
    tpu.vector_store %arg38[%c0_20, %c0_21], %14 {strides = array<i32>} : memref<12x64xf32, #tpu.memory_space<vmem>>, vector<12x64xf32>,
    %c0_22 = arith.constant 0 : index
    %c0_23 = arith.constant 0 : index
    %16 = vector.load %arg0[%c0_22, %c0_23] : memref<36x64xf32, #tpu.memory_space<vmem>>, vector<34x64xf32>
    %c0_24 = arith.constant 0 : index
    %c0_25 = arith.constant 0 : index
    %c0_26 = arith.constant 0 : index
    %17 = vector.load %arg12[%c0_24, %c0_25, %c0_26] : memref<3x64x128xf32, #tpu.memory_space<vmem>>, vector<1x64x128xf32>
    %18 = vector.shape_cast %17 : vector<1x64x128xf32> to vector<64x128xf32>
    %cst_27 = arith.constant dense<0.000000e+00> : vector<34x128xf32>
    %19 = tpu.matmul %16, %18, %cst_27 {dimension_numbers = #tpu.dot_dimension_numbers<[1], [0], [0], [1], [0, 0, 1, 1], [], []>} : vector<34x64xf32>, vector<64x128xf32>, vector<34x128xf32> -> vector<34x128xf32>
    %c1 = arith.constant 1 : index
    %c0_28 = arith.constant 0 : index
    %20 = vector.load %arg0[%c1, %c0_28] : memref<36x64xf32, #tpu.memory_space<vmem>>, vector<34x64xf32>
    %c1_29 = arith.constant 1 : index
    %c0_30 = arith.constant 0 : index
    %c0_31 = arith.constant 0 : index
    %21 = vector.load %arg12[%c1_29, %c0_30, %c0_31] : memref<3x64x128xf32, #tpu.memory_space<vmem>>, vector<1x64x128xf32>
    %22 = vector.shape_cast %21 : vector<1x64x128xf32> to vector<64x128xf32>
    %cst_32 = arith.constant dense<0.000000e+00> : vector<34x128xf32>
    %23 = tpu.matmul %20, %22, %cst_32 {dimension_numbers = #tpu.dot_dimension_numbers<[1], [0], [0], [1], [0, 0, 1, 1], [], []>} : vector<34x64xf32>, vector<64x128xf32>, vector<34x128xf32> -> vector<34x128xf32>
    %24 = arith.addf %19, %23 : vector<34x128xf32>
    %c2 = arith.constant 2 : index
    %c0_33 = arith.constant 0 : index
    %25 = vector.load %arg0[%c2, %c0_33] : memref<36x64xf32, #tpu.memory_space<vmem>>, vector<34x64xf32>
    %c2_34 = arith.constant 2 : index
    %c0_35 = arith.constant 0 : index
    %c0_36 = arith.constant 0 : index
    %26 = vector.load %arg12[%c2_34, %c0_35, %c0_36] : memref<3x64x128xf32, #tpu.memory_space<vmem>>, vector<1x64x128xf32>
    %27 = vector.shape_cast %26 : vector<1x64x128xf32> to vector<64x128xf32>
    %cst_37 = arith.constant dense<0.000000e+00> : vector<34x128xf32>
    %28 = tpu.matmul %25, %27, %cst_37 {dimension_numbers = #tpu.dot_dimension_numbers<[1], [0], [0], [1], [0, 0, 1, 1], [], []>} : vector<34x64xf32>, vector<64x128xf32>, vector<34x128xf32> -> vector<34x128xf32>
    %29 = arith.addf %24, %28 : vector<34x128xf32>
    %c0_38 = arith.constant 0 : index
    %c0_39 = arith.constant 0 : index
    %30 = vector.load %arg13[%c0_38, %c0_39] : memref<1x128xf32, #tpu.memory_space<vmem>>, vector<1x128xf32>
    %31 = vector.broadcast %30 : vector<1x128xf32> to vector<34x128xf32>
    %32 = arith.addf %29, %31 : vector<34x128xf32>
    %cst_40 = arith.constant 0.000000e+00 : f32
    %33 = vector.broadcast %cst_40 : f32 to vector<34x128xf32>
    %34 = arith.cmpf oge, %32, %33 : vector<34x128xf32>
    %cst_41 = arith.constant 2.000000e-01 : f32
    %35 = vector.broadcast %cst_41 : f32 to vector<34x128xf32>
    %36 = arith.mulf %35, %32 : vector<34x128xf32>
    %37 = arith.select %34, %32, %36 : vector<34x128xi1>, vector<34x128xf32>
    %c0_42 = arith.constant 0 : index
    %c0_43 = arith.constant 0 : index
    %38 = vector.load %arg1[%c0_42, %c0_43] : memref<34x1xf32, #tpu.memory_space<vmem>>, vector<34x1xf32>
    %39 = vector.broadcast %38 : vector<34x1xf32> to vector<34x128xf32>
    %40 = arith.mulf %37, %39 : vector<34x128xf32>
    %c1_44 = arith.constant 1 : index
    %c0_45 = arith.constant 0 : index
    %41 = vector.load %arg31[%c1_44, %c0_45] : memref<36x128xf32, #tpu.memory_space<vmem>>, vector<34x128xf32>
    tpu.vector_store %arg31[%c1_44, %c0_45], %40 {strides = array<i32>} : memref<36x128xf32, #tpu.memory_space<vmem>>, vector<34x128xf32>,
    %c2_46 = arith.constant 2 : index
    %c0_47 = arith.constant 0 : index
    %42 = vector.load %arg31[%c2_46, %c0_47] : memref<36x128xf32, #tpu.memory_space<vmem>>, vector<34x128xf32>
    %43 = arith.maximumf %40, %42 : vector<34x128xf32>
    %c0_48 = arith.constant 0 : index
    %c0_49 = arith.constant 0 : index
    %44 = vector.load %arg4[%c0_48, %c0_49] : memref<18x34xf32, #tpu.memory_space<vmem>>, vector<18x34xf32>
    %cst_50 = arith.constant dense<0.000000e+00> : vector<18x128xf32>
    %45 = tpu.matmul %44, %43, %cst_50 {dimension_numbers = #tpu.dot_dimension_numbers<[1], [0], [0], [1], [0, 0, 1, 1], [], []>} : vector<18x34xf32>, vector<34x128xf32>, vector<18x128xf32> -> vector<18x128xf32>
    %c0_51 = arith.constant 0 : index
    %c0_52 = arith.constant 0 : index
    %46 = vector.load %arg5[%c0_51, %c0_52] : memref<128x64xf32, #tpu.memory_space<vmem>>, vector<128x64xf32>
    %cst_53 = arith.constant dense<0.000000e+00> : vector<18x64xf32>
    %47 = tpu.matmul %45, %46, %cst_53 {dimension_numbers = #tpu.dot_dimension_numbers<[1], [0], [0], [1], [0, 0, 1, 1], [], []>} : vector<18x128xf32>, vector<128x64xf32>, vector<18x64xf32> -> vector<18x64xf32>
    %c0_54 = arith.constant 0 : index
    %c0_55 = arith.constant 0 : index
    %48 = vector.load %arg6[%c0_54, %c0_55] : memref<128x64xf32, #tpu.memory_space<vmem>>, vector<128x64xf32>
    %cst_56 = arith.constant dense<0.000000e+00> : vector<18x64xf32>
    %49 = tpu.matmul %45, %48, %cst_56 {dimension_numbers = #tpu.dot_dimension_numbers<[1], [0], [0], [1], [0, 0, 1, 1], [], []>} : vector<18x128xf32>, vector<128x64xf32>, vector<18x64xf32> -> vector<18x64xf32>
    %50 = arith.maximumf %47, %49 : vector<18x64xf32>
    %c1_57 = arith.constant 1 : index
    %c0_58 = arith.constant 0 : index
    %51 = vector.load %arg35[%c1_57, %c0_58] : memref<20x64xf32, #tpu.memory_space<vmem>>, vector<18x64xf32>
    tpu.vector_store %arg35[%c1_57, %c0_58], %50 {strides = array<i32>} : memref<20x64xf32, #tpu.memory_space<vmem>>, vector<18x64xf32>,
    %c0_59 = arith.constant 0 : index
    %c0_60 = arith.constant 0 : index
    %52 = vector.load %arg35[%c0_59, %c0_60] : memref<20x64xf32, #tpu.memory_space<vmem>>, vector<18x64xf32>
    %c0_61 = arith.constant 0 : index
    %c0_62 = arith.constant 0 : index
    %c0_63 = arith.constant 0 : index
    %53 = vector.load %arg14[%c0_61, %c0_62, %c0_63] : memref<3x64x128xf32, #tpu.memory_space<vmem>>, vector<1x64x128xf32>
    %54 = vector.shape_cast %53 : vector<1x64x128xf32> to vector<64x128xf32>
    %cst_64 = arith.constant dense<0.000000e+00> : vector<18x128xf32>
    %55 = tpu.matmul %52, %54, %cst_64 {dimension_numbers = #tpu.dot_dimension_numbers<[1], [0], [0], [1], [0, 0, 1, 1], [], []>} : vector<18x64xf32>, vector<64x128xf32>, vector<18x128xf32> -> vector<18x128xf32>
    %c1_65 = arith.constant 1 : index
    %c0_66 = arith.constant 0 : index
    %56 = vector.load %arg35[%c1_65, %c0_66] : memref<20x64xf32, #tpu.memory_space<vmem>>, vector<18x64xf32>
    %c1_67 = arith.constant 1 : index
    %c0_68 = arith.constant 0 : index
    %c0_69 = arith.constant 0 : index
    %57 = vector.load %arg14[%c1_67, %c0_68, %c0_69] : memref<3x64x128xf32, #tpu.memory_space<vmem>>, vector<1x64x128xf32>
    %58 = vector.shape_cast %57 : vector<1x64x128xf32> to vector<64x128xf32>
    %cst_70 = arith.constant dense<0.000000e+00> : vector<18x128xf32>
    %59 = tpu.matmul %56, %58, %cst_70 {dimension_numbers = #tpu.dot_dimension_numbers<[1], [0], [0], [1], [0, 0, 1, 1], [], []>} : vector<18x64xf32>, vector<64x128xf32>, vector<18x128xf32> -> vector<18x128xf32>
    %60 = arith.addf %55, %59 : vector<18x128xf32>
    %c2_71 = arith.constant 2 : index
    %c0_72 = arith.constant 0 : index
    %61 = vector.load %arg35[%c2_71, %c0_72] : memref<20x64xf32, #tpu.memory_space<vmem>>, vector<18x64xf32>
    %c2_73 = arith.constant 2 : index
    %c0_74 = arith.constant 0 : index
    %c0_75 = arith.constant 0 : index
    %62 = vector.load %arg14[%c2_73, %c0_74, %c0_75] : memref<3x64x128xf32, #tpu.memory_space<vmem>>, vector<1x64x128xf32>
    %63 = vector.shape_cast %62 : vector<1x64x128xf32> to vector<64x128xf32>
    %cst_76 = arith.constant dense<0.000000e+00> : vector<18x128xf32>
    %64 = tpu.matmul %61, %63, %cst_76 {dimension_numbers = #tpu.dot_dimension_numbers<[1], [0], [0], [1], [0, 0, 1, 1], [], []>} : vector<18x64xf32>, vector<64x128xf32>, vector<18x128xf32> -> vector<18x128xf32>
    %65 = arith.addf %60, %64 : vector<18x128xf32>
    %c0_77 = arith.constant 0 : index
    %c0_78 = arith.constant 0 : index
    %66 = vector.load %arg15[%c0_77, %c0_78] : memref<1x128xf32, #tpu.memory_space<vmem>>, vector<1x128xf32>
    %67 = vector.broadcast %66 : vector<1x128xf32> to vector<18x128xf32>
    %68 = arith.addf %65, %67 : vector<18x128xf32>
    %cst_79 = arith.constant 0.000000e+00 : f32
    %69 = vector.broadcast %cst_79 : f32 to vector<18x128xf32>
    %70 = arith.cmpf oge, %68, %69 : vector<18x128xf32>
    %cst_80 = arith.constant 2.000000e-01 : f32
    %71 = vector.broadcast %cst_80 : f32 to vector<18x128xf32>
    %72 = arith.mulf %71, %68 : vector<18x128xf32>
    %73 = arith.select %70, %68, %72 : vector<18x128xi1>, vector<18x128xf32>
    %c0_81 = arith.constant 0 : index
    %c0_82 = arith.constant 0 : index
    %74 = vector.load %arg2[%c0_81, %c0_82] : memref<18x1xf32, #tpu.memory_space<vmem>>, vector<18x1xf32>
    %75 = vector.broadcast %74 : vector<18x1xf32> to vector<18x128xf32>
    %76 = arith.mulf %73, %75 : vector<18x128xf32>
    %c1_83 = arith.constant 1 : index
    %c0_84 = arith.constant 0 : index
    %77 = vector.load %arg36[%c1_83, %c0_84] : memref<20x128xf32, #tpu.memory_space<vmem>>, vector<18x128xf32>
    tpu.vector_store %arg36[%c1_83, %c0_84], %76 {strides = array<i32>} : memref<20x128xf32, #tpu.memory_space<vmem>>, vector<18x128xf32>,
    %c2_85 = arith.constant 2 : index
    %c0_86 = arith.constant 0 : index
    %78 = vector.load %arg36[%c2_85, %c0_86] : memref<20x128xf32, #tpu.memory_space<vmem>>, vector<18x128xf32>
    %79 = arith.maximumf %76, %78 : vector<18x128xf32>
    %c0_87 = arith.constant 0 : index
    %c0_88 = arith.constant 0 : index
    %80 = vector.load %arg7[%c0_87, %c0_88] : memref<10x18xf32, #tpu.memory_space<vmem>>, vector<10x18xf32>
    %cst_89 = arith.constant dense<0.000000e+00> : vector<10x128xf32>
    %81 = tpu.matmul %80, %79, %cst_89 {dimension_numbers = #tpu.dot_dimension_numbers<[1], [0], [0], [1], [0, 0, 1, 1], [], []>} : vector<10x18xf32>, vector<18x128xf32>, vector<10x128xf32> -> vector<10x128xf32>
    %c0_90 = arith.constant 0 : index
    %c0_91 = arith.constant 0 : index
    %82 = vector.load %arg8[%c0_90, %c0_91] : memref<128x64xf32, #tpu.memory_space<vmem>>, vector<128x64xf32>
    %cst_92 = arith.constant dense<0.000000e+00> : vector<10x64xf32>
    %83 = tpu.matmul %81, %82, %cst_92 {dimension_numbers = #tpu.dot_dimension_numbers<[1], [0], [0], [1], [0, 0, 1, 1], [], []>} : vector<10x128xf32>, vector<128x64xf32>, vector<10x64xf32> -> vector<10x64xf32>
    %c0_93 = arith.constant 0 : index
    %c0_94 = arith.constant 0 : index
    %84 = vector.load %arg9[%c0_93, %c0_94] : memref<128x64xf32, #tpu.memory_space<vmem>>, vector<128x64xf32>
    %cst_95 = arith.constant dense<0.000000e+00> : vector<10x64xf32>
    %85 = tpu.matmul %81, %84, %cst_95 {dimension_numbers = #tpu.dot_dimension_numbers<[1], [0], [0], [1], [0, 0, 1, 1], [], []>} : vector<10x128xf32>, vector<128x64xf32>, vector<10x64xf32> -> vector<10x64xf32>
    %86 = arith.maximumf %83, %85 : vector<10x64xf32>
    %c1_96 = arith.constant 1 : index
    %c0_97 = arith.constant 0 : index
    %87 = vector.load %arg38[%c1_96, %c0_97] : memref<12x64xf32, #tpu.memory_space<vmem>>, vector<10x64xf32>
    tpu.vector_store %arg38[%c1_96, %c0_97], %86 {strides = array<i32>} : memref<12x64xf32, #tpu.memory_space<vmem>>, vector<10x64xf32>,
    %c0_98 = arith.constant 0 : index
    %c0_99 = arith.constant 0 : index
    %88 = vector.load %arg38[%c0_98, %c0_99] : memref<12x64xf32, #tpu.memory_space<vmem>>, vector<10x64xf32>
    %c0_100 = arith.constant 0 : index
    %c0_101 = arith.constant 0 : index
    %c0_102 = arith.constant 0 : index
    %89 = vector.load %arg16[%c0_100, %c0_101, %c0_102] : memref<3x64x64xf32, #tpu.memory_space<vmem>>, vector<1x64x64xf32>
    %90 = vector.shape_cast %89 : vector<1x64x64xf32> to vector<64x64xf32>
    %cst_103 = arith.constant dense<0.000000e+00> : vector<10x64xf32>
    %91 = tpu.matmul %88, %90, %cst_103 {dimension_numbers = #tpu.dot_dimension_numbers<[1], [0], [0], [1], [0, 0, 1, 1], [], []>} : vector<10x64xf32>, vector<64x64xf32>, vector<10x64xf32> -> vector<10x64xf32>
    %c1_104 = arith.constant 1 : index
    %c0_105 = arith.constant 0 : index
    %92 = vector.load %arg38[%c1_104, %c0_105] : memref<12x64xf32, #tpu.memory_space<vmem>>, vector<10x64xf32>
    %c1_106 = arith.constant 1 : index
    %c0_107 = arith.constant 0 : index
    %c0_108 = arith.constant 0 : index
    %93 = vector.load %arg16[%c1_106, %c0_107, %c0_108] : memref<3x64x64xf32, #tpu.memory_space<vmem>>, vector<1x64x64xf32>
    %94 = vector.shape_cast %93 : vector<1x64x64xf32> to vector<64x64xf32>
    %cst_109 = arith.constant dense<0.000000e+00> : vector<10x64xf32>
    %95 = tpu.matmul %92, %94, %cst_109 {dimension_numbers = #tpu.dot_dimension_numbers<[1], [0], [0], [1], [0, 0, 1, 1], [], []>} : vector<10x64xf32>, vector<64x64xf32>, vector<10x64xf32> -> vector<10x64xf32>
    %96 = arith.addf %91, %95 : vector<10x64xf32>
    %c2_110 = arith.constant 2 : index
    %c0_111 = arith.constant 0 : index
    %97 = vector.load %arg38[%c2_110, %c0_111] : memref<12x64xf32, #tpu.memory_space<vmem>>, vector<10x64xf32>
    %c2_112 = arith.constant 2 : index
    %c0_113 = arith.constant 0 : index
    %c0_114 = arith.constant 0 : index
    %98 = vector.load %arg16[%c2_112, %c0_113, %c0_114] : memref<3x64x64xf32, #tpu.memory_space<vmem>>, vector<1x64x64xf32>
    %99 = vector.shape_cast %98 : vector<1x64x64xf32> to vector<64x64xf32>
    %cst_115 = arith.constant dense<0.000000e+00> : vector<10x64xf32>
    %100 = tpu.matmul %97, %99, %cst_115 {dimension_numbers = #tpu.dot_dimension_numbers<[1], [0], [0], [1], [0, 0, 1, 1], [], []>} : vector<10x64xf32>, vector<64x64xf32>, vector<10x64xf32> -> vector<10x64xf32>
    %101 = arith.addf %96, %100 : vector<10x64xf32>
    %c0_116 = arith.constant 0 : index
    %c0_117 = arith.constant 0 : index
    %102 = vector.load %arg17[%c0_116, %c0_117] : memref<1x64xf32, #tpu.memory_space<vmem>>, vector<1x64xf32>
    %103 = vector.broadcast %102 : vector<1x64xf32> to vector<10x64xf32>
    %104 = arith.addf %101, %103 : vector<10x64xf32>
    %cst_118 = arith.constant 0.000000e+00 : f32
    %105 = vector.broadcast %cst_118 : f32 to vector<10x64xf32>
    %106 = arith.cmpf oge, %104, %105 : vector<10x64xf32>
    %cst_119 = arith.constant 2.000000e-01 : f32
    %107 = vector.broadcast %cst_119 : f32 to vector<10x64xf32>
    %108 = arith.mulf %107, %104 : vector<10x64xf32>
    %109 = arith.select %106, %104, %108 : vector<10x64xi1>, vector<10x64xf32>
    %c0_120 = arith.constant 0 : index
    %c0_121 = arith.constant 0 : index
    %110 = vector.load %arg3[%c0_120, %c0_121] : memref<10x1xf32, #tpu.memory_space<vmem>>, vector<10x1xf32>
    %111 = vector.broadcast %110 : vector<10x1xf32> to vector<10x64xf32>
    %112 = arith.mulf %109, %111 : vector<10x64xf32>
    %c0_122 = arith.constant 0 : index
    %c0_123 = arith.constant 0 : index
    %113 = vector.load %arg10[%c0_122, %c0_123] : memref<18x10xf32, #tpu.memory_space<vmem>>, vector<18x10xf32>
    %cst_124 = arith.constant dense<0.000000e+00> : vector<18x64xf32>
    %114 = tpu.matmul %113, %112, %cst_124 {dimension_numbers = #tpu.dot_dimension_numbers<[1], [0], [0], [1], [0, 0, 1, 1], [], []>} : vector<18x10xf32>, vector<10x64xf32>, vector<18x64xf32> -> vector<18x64xf32>
    %c1_125 = arith.constant 1 : index
    %c0_126 = arith.constant 0 : index
    %115 = vector.load %arg37[%c1_125, %c0_126] : memref<20x64xf32, #tpu.memory_space<vmem>>, vector<18x64xf32>
    tpu.vector_store %arg37[%c1_125, %c0_126], %114 {strides = array<i32>} : memref<20x64xf32, #tpu.memory_space<vmem>>, vector<18x64xf32>,
    %c0_127 = arith.constant 0 : index
    %c0_128 = arith.constant 0 : index
    %116 = vector.load %arg36[%c0_127, %c0_128] : memref<20x128xf32, #tpu.memory_space<vmem>>, vector<18x128xf32>
    %c0_129 = arith.constant 0 : index
    %c0_130 = arith.constant 0 : index
    %c0_131 = arith.constant 0 : index
    %117 = vector.load %arg18[%c0_129, %c0_130, %c0_131] : memref<3x128x64xf32, #tpu.memory_space<vmem>>, vector<1x128x64xf32>
    %118 = vector.shape_cast %117 : vector<1x128x64xf32> to vector<128x64xf32>
    %cst_132 = arith.constant dense<0.000000e+00> : vector<18x64xf32>
    %119 = tpu.matmul %116, %118, %cst_132 {dimension_numbers = #tpu.dot_dimension_numbers<[1], [0], [0], [1], [0, 0, 1, 1], [], []>} : vector<18x128xf32>, vector<128x64xf32>, vector<18x64xf32> -> vector<18x64xf32>
    %c1_133 = arith.constant 1 : index
    %c0_134 = arith.constant 0 : index
    %120 = vector.load %arg36[%c1_133, %c0_134] : memref<20x128xf32, #tpu.memory_space<vmem>>, vector<18x128xf32>
    %c1_135 = arith.constant 1 : index
    %c0_136 = arith.constant 0 : index
    %c0_137 = arith.constant 0 : index
    %121 = vector.load %arg18[%c1_135, %c0_136, %c0_137] : memref<3x128x64xf32, #tpu.memory_space<vmem>>, vector<1x128x64xf32>
    %122 = vector.shape_cast %121 : vector<1x128x64xf32> to vector<128x64xf32>
    %cst_138 = arith.constant dense<0.000000e+00> : vector<18x64xf32>
    %123 = tpu.matmul %120, %122, %cst_138 {dimension_numbers = #tpu.dot_dimension_numbers<[1], [0], [0], [1], [0, 0, 1, 1], [], []>} : vector<18x128xf32>, vector<128x64xf32>, vector<18x64xf32> -> vector<18x64xf32>
    %124 = arith.addf %119, %123 : vector<18x64xf32>
    %c2_139 = arith.constant 2 : index
    %c0_140 = arith.constant 0 : index
    %125 = vector.load %arg36[%c2_139, %c0_140] : memref<20x128xf32, #tpu.memory_space<vmem>>, vector<18x128xf32>
    %c2_141 = arith.constant 2 : index
    %c0_142 = arith.constant 0 : index
    %c0_143 = arith.constant 0 : index
    %126 = vector.load %arg18[%c2_141, %c0_142, %c0_143] : memref<3x128x64xf32, #tpu.memory_space<vmem>>, vector<1x128x64xf32>
    %127 = vector.shape_cast %126 : vector<1x128x64xf32> to vector<128x64xf32>
    %cst_144 = arith.constant dense<0.000000e+00> : vector<18x64xf32>
    %128 = tpu.matmul %125, %127, %cst_144 {dimension_numbers = #tpu.dot_dimension_numbers<[1], [0], [0], [1], [0, 0, 1, 1], [], []>} : vector<18x128xf32>, vector<128x64xf32>, vector<18x64xf32> -> vector<18x64xf32>
    %129 = arith.addf %124, %128 : vector<18x64xf32>
    %c0_145 = arith.constant 0 : index
    %c0_146 = arith.constant 0 : index
    %130 = vector.load %arg37[%c0_145, %c0_146] : memref<20x64xf32, #tpu.memory_space<vmem>>, vector<18x64xf32>
    %c0_147 = arith.constant 0 : index
    %c0_148 = arith.constant 0 : index
    %c0_149 = arith.constant 0 : index
    %131 = vector.load %arg19[%c0_147, %c0_148, %c0_149] : memref<3x64x64xf32, #tpu.memory_space<vmem>>, vector<1x64x64xf32>
    %132 = vector.shape_cast %131 : vector<1x64x64xf32> to vector<64x64xf32>
    %cst_150 = arith.constant dense<0.000000e+00> : vector<18x64xf32>
    %133 = tpu.matmul %130, %132, %cst_150 {dimension_numbers = #tpu.dot_dimension_numbers<[1], [0], [0], [1], [0, 0, 1, 1], [], []>} : vector<18x64xf32>, vector<64x64xf32>, vector<18x64xf32> -> vector<18x64xf32>
    %134 = arith.addf %129, %133 : vector<18x64xf32>
    %c1_151 = arith.constant 1 : index
    %c0_152 = arith.constant 0 : index
    %135 = vector.load %arg37[%c1_151, %c0_152] : memref<20x64xf32, #tpu.memory_space<vmem>>, vector<18x64xf32>
    %c1_153 = arith.constant 1 : index
    %c0_154 = arith.constant 0 : index
    %c0_155 = arith.constant 0 : index
    %136 = vector.load %arg19[%c1_153, %c0_154, %c0_155] : memref<3x64x64xf32, #tpu.memory_space<vmem>>, vector<1x64x64xf32>
    %137 = vector.shape_cast %136 : vector<1x64x64xf32> to vector<64x64xf32>
    %cst_156 = arith.constant dense<0.000000e+00> : vector<18x64xf32>
    %138 = tpu.matmul %135, %137, %cst_156 {dimension_numbers = #tpu.dot_dimension_numbers<[1], [0], [0], [1], [0, 0, 1, 1], [], []>} : vector<18x64xf32>, vector<64x64xf32>, vector<18x64xf32> -> vector<18x64xf32>
    %139 = arith.addf %134, %138 : vector<18x64xf32>
    %c2_157 = arith.constant 2 : index
    %c0_158 = arith.constant 0 : index
    %140 = vector.load %arg37[%c2_157, %c0_158] : memref<20x64xf32, #tpu.memory_space<vmem>>, vector<18x64xf32>
    %c2_159 = arith.constant 2 : index
    %c0_160 = arith.constant 0 : index
    %c0_161 = arith.constant 0 : index
    %141 = vector.load %arg19[%c2_159, %c0_160, %c0_161] : memref<3x64x64xf32, #tpu.memory_space<vmem>>, vector<1x64x64xf32>
    %142 = vector.shape_cast %141 : vector<1x64x64xf32> to vector<64x64xf32>
    %cst_162 = arith.constant dense<0.000000e+00> : vector<18x64xf32>
    %143 = tpu.matmul %140, %142, %cst_162 {dimension_numbers = #tpu.dot_dimension_numbers<[1], [0], [0], [1], [0, 0, 1, 1], [], []>} : vector<18x64xf32>, vector<64x64xf32>, vector<18x64xf32> -> vector<18x64xf32>
    %144 = arith.addf %139, %143 : vector<18x64xf32>
    %c0_163 = arith.constant 0 : index
    %c0_164 = arith.constant 0 : index
    %145 = vector.load %arg20[%c0_163, %c0_164] : memref<1x64xf32, #tpu.memory_space<vmem>>, vector<1x64xf32>
    %146 = vector.broadcast %145 : vector<1x64xf32> to vector<18x64xf32>
    %147 = arith.addf %144, %146 : vector<18x64xf32>
    %cst_165 = arith.constant 0.000000e+00 : f32
    %148 = vector.broadcast %cst_165 : f32 to vector<18x64xf32>
    %149 = arith.cmpf oge, %147, %148 : vector<18x64xf32>
    %cst_166 = arith.constant 2.000000e-01 : f32
    %150 = vector.broadcast %cst_166 : f32 to vector<18x64xf32>
    %151 = arith.mulf %150, %147 : vector<18x64xf32>
    %152 = arith.select %149, %147, %151 : vector<18x64xi1>, vector<18x64xf32>
    %c0_167 = arith.constant 0 : index
    %c0_168 = arith.constant 0 : index
    %153 = vector.load %arg2[%c0_167, %c0_168] : memref<18x1xf32, #tpu.memory_space<vmem>>, vector<18x1xf32>
    %154 = vector.broadcast %153 : vector<18x1xf32> to vector<18x64xf32>
    %155 = arith.mulf %152, %154 : vector<18x64xf32>
    %c0_169 = arith.constant 0 : index
    %c0_170 = arith.constant 0 : index
    %156 = vector.load %arg11[%c0_169, %c0_170] : memref<34x18xf32, #tpu.memory_space<vmem>>, vector<34x18xf32>
    %cst_171 = arith.constant dense<0.000000e+00> : vector<34x64xf32>
    %157 = tpu.matmul %156, %155, %cst_171 {dimension_numbers = #tpu.dot_dimension_numbers<[1], [0], [0], [1], [0, 0, 1, 1], [], []>} : vector<34x18xf32>, vector<18x64xf32>, vector<34x64xf32> -> vector<34x64xf32>
    %c1_172 = arith.constant 1 : index
    %c0_173 = arith.constant 0 : index
    %158 = vector.load %arg32[%c1_172, %c0_173] : memref<36x64xf32, #tpu.memory_space<vmem>>, vector<34x64xf32>
    tpu.vector_store %arg32[%c1_172, %c0_173], %157 {strides = array<i32>} : memref<36x64xf32, #tpu.memory_space<vmem>>, vector<34x64xf32>,
    %c0_174 = arith.constant 0 : index
    %c0_175 = arith.constant 0 : index
    %159 = vector.load %arg31[%c0_174, %c0_175] : memref<36x128xf32, #tpu.memory_space<vmem>>, vector<34x128xf32>
    %c0_176 = arith.constant 0 : index
    %c0_177 = arith.constant 0 : index
    %c0_178 = arith.constant 0 : index
    %160 = vector.load %arg21[%c0_176, %c0_177, %c0_178] : memref<3x128x128xf32, #tpu.memory_space<vmem>>, vector<1x128x128xf32>
    %161 = vector.shape_cast %160 : vector<1x128x128xf32> to vector<128x128xf32>
    %cst_179 = arith.constant dense<0.000000e+00> : vector<34x128xf32>
    %162 = tpu.matmul %159, %161, %cst_179 {dimension_numbers = #tpu.dot_dimension_numbers<[1], [0], [0], [1], [0, 0, 1, 1], [], []>} : vector<34x128xf32>, vector<128x128xf32>, vector<34x128xf32> -> vector<34x128xf32>
    %c1_180 = arith.constant 1 : index
    %c0_181 = arith.constant 0 : index
    %163 = vector.load %arg31[%c1_180, %c0_181] : memref<36x128xf32, #tpu.memory_space<vmem>>, vector<34x128xf32>
    %c1_182 = arith.constant 1 : index
    %c0_183 = arith.constant 0 : index
    %c0_184 = arith.constant 0 : index
    %164 = vector.load %arg21[%c1_182, %c0_183, %c0_184] : memref<3x128x128xf32, #tpu.memory_space<vmem>>, vector<1x128x128xf32>
    %165 = vector.shape_cast %164 : vector<1x128x128xf32> to vector<128x128xf32>
    %cst_185 = arith.constant dense<0.000000e+00> : vector<34x128xf32>
    %166 = tpu.matmul %163, %165, %cst_185 {dimension_numbers = #tpu.dot_dimension_numbers<[1], [0], [0], [1], [0, 0, 1, 1], [], []>} : vector<34x128xf32>, vector<128x128xf32>, vector<34x128xf32> -> vector<34x128xf32>
    %167 = arith.addf %162, %166 : vector<34x128xf32>
    %c2_186 = arith.constant 2 : index
    %c0_187 = arith.constant 0 : index
    %168 = vector.load %arg31[%c2_186, %c0_187] : memref<36x128xf32, #tpu.memory_space<vmem>>, vector<34x128xf32>
    %c2_188 = arith.constant 2 : index
    %c0_189 = arith.constant 0 : index
    %c0_190 = arith.constant 0 : index
    %169 = vector.load %arg21[%c2_188, %c0_189, %c0_190] : memref<3x128x128xf32, #tpu.memory_space<vmem>>, vector<1x128x128xf32>
    %170 = vector.shape_cast %169 : vector<1x128x128xf32> to vector<128x128xf32>
    %cst_191 = arith.constant dense<0.000000e+00> : vector<34x128xf32>
    %171 = tpu.matmul %168, %170, %cst_191 {dimension_numbers = #tpu.dot_dimension_numbers<[1], [0], [0], [1], [0, 0, 1, 1], [], []>} : vector<34x128xf32>, vector<128x128xf32>, vector<34x128xf32> -> vector<34x128xf32>
    %172 = arith.addf %167, %171 : vector<34x128xf32>
    %c0_192 = arith.constant 0 : index
    %c0_193 = arith.constant 0 : index
    %173 = vector.load %arg32[%c0_192, %c0_193] : memref<36x64xf32, #tpu.memory_space<vmem>>, vector<34x64xf32>
    %c0_194 = arith.constant 0 : index
    %c0_195 = arith.constant 0 : index
    %c0_196 = arith.constant 0 : index
    %174 = vector.load %arg22[%c0_194, %c0_195, %c0_196] : memref<3x64x128xf32, #tpu.memory_space<vmem>>, vector<1x64x128xf32>
    %175 = vector.shape_cast %174 : vector<1x64x128xf32> to vector<64x128xf32>
    %cst_197 = arith.constant dense<0.000000e+00> : vector<34x128xf32>
    %176 = tpu.matmul %173, %175, %cst_197 {dimension_numbers = #tpu.dot_dimension_numbers<[1], [0], [0], [1], [0, 0, 1, 1], [], []>} : vector<34x64xf32>, vector<64x128xf32>, vector<34x128xf32> -> vector<34x128xf32>
    %177 = arith.addf %172, %176 : vector<34x128xf32>
    %c1_198 = arith.constant 1 : index
    %c0_199 = arith.constant 0 : index
    %178 = vector.load %arg32[%c1_198, %c0_199] : memref<36x64xf32, #tpu.memory_space<vmem>>, vector<34x64xf32>
    %c1_200 = arith.constant 1 : index
    %c0_201 = arith.constant 0 : index
    %c0_202 = arith.constant 0 : index
    %179 = vector.load %arg22[%c1_200, %c0_201, %c0_202] : memref<3x64x128xf32, #tpu.memory_space<vmem>>, vector<1x64x128xf32>
    %180 = vector.shape_cast %179 : vector<1x64x128xf32> to vector<64x128xf32>
    %cst_203 = arith.constant dense<0.000000e+00> : vector<34x128xf32>
    %181 = tpu.matmul %178, %180, %cst_203 {dimension_numbers = #tpu.dot_dimension_numbers<[1], [0], [0], [1], [0, 0, 1, 1], [], []>} : vector<34x64xf32>, vector<64x128xf32>, vector<34x128xf32> -> vector<34x128xf32>
    %182 = arith.addf %177, %181 : vector<34x128xf32>
    %c2_204 = arith.constant 2 : index
    %c0_205 = arith.constant 0 : index
    %183 = vector.load %arg32[%c2_204, %c0_205] : memref<36x64xf32, #tpu.memory_space<vmem>>, vector<34x64xf32>
    %c2_206 = arith.constant 2 : index
    %c0_207 = arith.constant 0 : index
    %c0_208 = arith.constant 0 : index
    %184 = vector.load %arg22[%c2_206, %c0_207, %c0_208] : memref<3x64x128xf32, #tpu.memory_space<vmem>>, vector<1x64x128xf32>
    %185 = vector.shape_cast %184 : vector<1x64x128xf32> to vector<64x128xf32>
    %cst_209 = arith.constant dense<0.000000e+00> : vector<34x128xf32>
    %186 = tpu.matmul %183, %185, %cst_209 {dimension_numbers = #tpu.dot_dimension_numbers<[1], [0], [0], [1], [0, 0, 1, 1], [], []>} : vector<34x64xf32>, vector<64x128xf32>, vector<34x128xf32> -> vector<34x128xf32>
    %187 = arith.addf %182, %186 : vector<34x128xf32>
    %c0_210 = arith.constant 0 : index
    %c0_211 = arith.constant 0 : index
    %188 = vector.load %arg23[%c0_210, %c0_211] : memref<1x128xf32, #tpu.memory_space<vmem>>, vector<1x128xf32>
    %189 = vector.broadcast %188 : vector<1x128xf32> to vector<34x128xf32>
    %190 = arith.addf %187, %189 : vector<34x128xf32>
    %cst_212 = arith.constant 0.000000e+00 : f32
    %191 = vector.broadcast %cst_212 : f32 to vector<34x128xf32>
    %192 = arith.cmpf oge, %190, %191 : vector<34x128xf32>
    %cst_213 = arith.constant 2.000000e-01 : f32
    %193 = vector.broadcast %cst_213 : f32 to vector<34x128xf32>
    %194 = arith.mulf %193, %190 : vector<34x128xf32>
    %195 = arith.select %192, %190, %194 : vector<34x128xi1>, vector<34x128xf32>
    %c0_214 = arith.constant 0 : index
    %c0_215 = arith.constant 0 : index
    %196 = vector.load %arg1[%c0_214, %c0_215] : memref<34x1xf32, #tpu.memory_space<vmem>>, vector<34x1xf32>
    %197 = vector.broadcast %196 : vector<34x1xf32> to vector<34x128xf32>
    %198 = arith.mulf %195, %197 : vector<34x128xf32>
    %c1_216 = arith.constant 1 : index
    %c0_217 = arith.constant 0 : index
    %199 = vector.load %arg33[%c1_216, %c0_217] : memref<36x128xf32, #tpu.memory_space<vmem>>, vector<34x128xf32>
    tpu.vector_store %arg33[%c1_216, %c0_217], %198 {strides = array<i32>} : memref<36x128xf32, #tpu.memory_space<vmem>>, vector<34x128xf32>,
    %c0_218 = arith.constant 0 : index
    %c0_219 = arith.constant 0 : index
    %200 = vector.load %arg33[%c0_218, %c0_219] : memref<36x128xf32, #tpu.memory_space<vmem>>, vector<34x128xf32>
    %c0_220 = arith.constant 0 : index
    %c0_221 = arith.constant 0 : index
    %c0_222 = arith.constant 0 : index
    %201 = vector.load %arg24[%c0_220, %c0_221, %c0_222] : memref<3x128x128xf32, #tpu.memory_space<vmem>>, vector<1x128x128xf32>
    %202 = vector.shape_cast %201 : vector<1x128x128xf32> to vector<128x128xf32>
    %cst_223 = arith.constant dense<0.000000e+00> : vector<34x128xf32>
    %203 = tpu.matmul %200, %202, %cst_223 {dimension_numbers = #tpu.dot_dimension_numbers<[1], [0], [0], [1], [0, 0, 1, 1], [], []>} : vector<34x128xf32>, vector<128x128xf32>, vector<34x128xf32> -> vector<34x128xf32>
    %c1_224 = arith.constant 1 : index
    %c0_225 = arith.constant 0 : index
    %204 = vector.load %arg33[%c1_224, %c0_225] : memref<36x128xf32, #tpu.memory_space<vmem>>, vector<34x128xf32>
    %c1_226 = arith.constant 1 : index
    %c0_227 = arith.constant 0 : index
    %c0_228 = arith.constant 0 : index
    %205 = vector.load %arg24[%c1_226, %c0_227, %c0_228] : memref<3x128x128xf32, #tpu.memory_space<vmem>>, vector<1x128x128xf32>
    %206 = vector.shape_cast %205 : vector<1x128x128xf32> to vector<128x128xf32>
    %cst_229 = arith.constant dense<0.000000e+00> : vector<34x128xf32>
    %207 = tpu.matmul %204, %206, %cst_229 {dimension_numbers = #tpu.dot_dimension_numbers<[1], [0], [0], [1], [0, 0, 1, 1], [], []>} : vector<34x128xf32>, vector<128x128xf32>, vector<34x128xf32> -> vector<34x128xf32>
    %208 = arith.addf %203, %207 : vector<34x128xf32>
    %c2_230 = arith.constant 2 : index
    %c0_231 = arith.constant 0 : index
    %209 = vector.load %arg33[%c2_230, %c0_231] : memref<36x128xf32, #tpu.memory_space<vmem>>, vector<34x128xf32>
    %c2_232 = arith.constant 2 : index
    %c0_233 = arith.constant 0 : index
    %c0_234 = arith.constant 0 : index
    %210 = vector.load %arg24[%c2_232, %c0_233, %c0_234] : memref<3x128x128xf32, #tpu.memory_space<vmem>>, vector<1x128x128xf32>
    %211 = vector.shape_cast %210 : vector<1x128x128xf32> to vector<128x128xf32>
    %cst_235 = arith.constant dense<0.000000e+00> : vector<34x128xf32>
    %212 = tpu.matmul %209, %211, %cst_235 {dimension_numbers = #tpu.dot_dimension_numbers<[1], [0], [0], [1], [0, 0, 1, 1], [], []>} : vector<34x128xf32>, vector<128x128xf32>, vector<34x128xf32> -> vector<34x128xf32>
    %213 = arith.addf %208, %212 : vector<34x128xf32>
    %c0_236 = arith.constant 0 : index
    %c0_237 = arith.constant 0 : index
    %214 = vector.load %arg25[%c0_236, %c0_237] : memref<1x128xf32, #tpu.memory_space<vmem>>, vector<1x128xf32>
    %215 = vector.broadcast %214 : vector<1x128xf32> to vector<34x128xf32>
    %216 = arith.addf %213, %215 : vector<34x128xf32>
    %cst_238 = arith.constant 0.000000e+00 : f32
    %217 = vector.broadcast %cst_238 : f32 to vector<34x128xf32>
    %218 = arith.cmpf oge, %216, %217 : vector<34x128xf32>
    %cst_239 = arith.constant 2.000000e-01 : f32
    %219 = vector.broadcast %cst_239 : f32 to vector<34x128xf32>
    %220 = arith.mulf %219, %216 : vector<34x128xf32>
    %221 = arith.select %218, %216, %220 : vector<34x128xi1>, vector<34x128xf32>
    %c0_240 = arith.constant 0 : index
    %c0_241 = arith.constant 0 : index
    %222 = vector.load %arg1[%c0_240, %c0_241] : memref<34x1xf32, #tpu.memory_space<vmem>>, vector<34x1xf32>
    %223 = vector.broadcast %222 : vector<34x1xf32> to vector<34x128xf32>
    %224 = arith.mulf %221, %223 : vector<34x128xf32>
    %c1_242 = arith.constant 1 : index
    %c0_243 = arith.constant 0 : index
    %225 = vector.load %arg34[%c1_242, %c0_243] : memref<36x128xf32, #tpu.memory_space<vmem>>, vector<34x128xf32>
    tpu.vector_store %arg34[%c1_242, %c0_243], %224 {strides = array<i32>} : memref<36x128xf32, #tpu.memory_space<vmem>>, vector<34x128xf32>,
    %c0_244 = arith.constant 0 : index
    %c0_245 = arith.constant 0 : index
    %226 = vector.load %arg34[%c0_244, %c0_245] : memref<36x128xf32, #tpu.memory_space<vmem>>, vector<34x128xf32>
    %c0_246 = arith.constant 0 : index
    %c0_247 = arith.constant 0 : index
    %c0_248 = arith.constant 0 : index
    %227 = vector.load %arg26[%c0_246, %c0_247, %c0_248] : memref<3x128x128xf32, #tpu.memory_space<vmem>>, vector<1x128x128xf32>
    %228 = vector.shape_cast %227 : vector<1x128x128xf32> to vector<128x128xf32>
    %cst_249 = arith.constant dense<0.000000e+00> : vector<34x128xf32>
    %229 = tpu.matmul %226, %228, %cst_249 {dimension_numbers = #tpu.dot_dimension_numbers<[1], [0], [0], [1], [0, 0, 1, 1], [], []>} : vector<34x128xf32>, vector<128x128xf32>, vector<34x128xf32> -> vector<34x128xf32>
    %c1_250 = arith.constant 1 : index
    %c0_251 = arith.constant 0 : index
    %230 = vector.load %arg34[%c1_250, %c0_251] : memref<36x128xf32, #tpu.memory_space<vmem>>, vector<34x128xf32>
    %c1_252 = arith.constant 1 : index
    %c0_253 = arith.constant 0 : index
    %c0_254 = arith.constant 0 : index
    %231 = vector.load %arg26[%c1_252, %c0_253, %c0_254] : memref<3x128x128xf32, #tpu.memory_space<vmem>>, vector<1x128x128xf32>
    %232 = vector.shape_cast %231 : vector<1x128x128xf32> to vector<128x128xf32>
    %cst_255 = arith.constant dense<0.000000e+00> : vector<34x128xf32>
    %233 = tpu.matmul %230, %232, %cst_255 {dimension_numbers = #tpu.dot_dimension_numbers<[1], [0], [0], [1], [0, 0, 1, 1], [], []>} : vector<34x128xf32>, vector<128x128xf32>, vector<34x128xf32> -> vector<34x128xf32>
    %234 = arith.addf %229, %233 : vector<34x128xf32>
    %c2_256 = arith.constant 2 : index
    %c0_257 = arith.constant 0 : index
    %235 = vector.load %arg34[%c2_256, %c0_257] : memref<36x128xf32, #tpu.memory_space<vmem>>, vector<34x128xf32>
    %c2_258 = arith.constant 2 : index
    %c0_259 = arith.constant 0 : index
    %c0_260 = arith.constant 0 : index
    %236 = vector.load %arg26[%c2_258, %c0_259, %c0_260] : memref<3x128x128xf32, #tpu.memory_space<vmem>>, vector<1x128x128xf32>
    %237 = vector.shape_cast %236 : vector<1x128x128xf32> to vector<128x128xf32>
    %cst_261 = arith.constant dense<0.000000e+00> : vector<34x128xf32>
    %238 = tpu.matmul %235, %237, %cst_261 {dimension_numbers = #tpu.dot_dimension_numbers<[1], [0], [0], [1], [0, 0, 1, 1], [], []>} : vector<34x128xf32>, vector<128x128xf32>, vector<34x128xf32> -> vector<34x128xf32>
    %239 = arith.addf %234, %238 : vector<34x128xf32>
    %c0_262 = arith.constant 0 : index
    %c0_263 = arith.constant 0 : index
    %240 = vector.load %arg27[%c0_262, %c0_263] : memref<1x128xf32, #tpu.memory_space<vmem>>, vector<1x128xf32>
    %241 = vector.broadcast %240 : vector<1x128xf32> to vector<34x128xf32>
    %242 = arith.addf %239, %241 : vector<34x128xf32>
    %cst_264 = arith.constant 0.000000e+00 : f32
    %243 = vector.broadcast %cst_264 : f32 to vector<34x128xf32>
    %244 = arith.cmpf oge, %242, %243 : vector<34x128xf32>
    %cst_265 = arith.constant 2.000000e-01 : f32
    %245 = vector.broadcast %cst_265 : f32 to vector<34x128xf32>
    %246 = arith.mulf %245, %242 : vector<34x128xf32>
    %247 = arith.select %244, %242, %246 : vector<34x128xi1>, vector<34x128xf32>
    %c0_266 = arith.constant 0 : index
    %c0_267 = arith.constant 0 : index
    %248 = vector.load %arg1[%c0_266, %c0_267] : memref<34x1xf32, #tpu.memory_space<vmem>>, vector<34x1xf32>
    %249 = vector.broadcast %248 : vector<34x1xf32> to vector<34x128xf32>
    %250 = arith.mulf %247, %249 : vector<34x128xf32>
    %c1_268 = arith.constant 1 : index
    %c0_269 = arith.constant 0 : index
    %251 = vector.load %arg33[%c1_268, %c0_269] : memref<36x128xf32, #tpu.memory_space<vmem>>, vector<34x128xf32>
    tpu.vector_store %arg33[%c1_268, %c0_269], %250 {strides = array<i32>} : memref<36x128xf32, #tpu.memory_space<vmem>>, vector<34x128xf32>,
    %c0_270 = arith.constant 0 : index
    %c0_271 = arith.constant 0 : index
    %252 = vector.load %arg33[%c0_270, %c0_271] : memref<36x128xf32, #tpu.memory_space<vmem>>, vector<34x128xf32>
    %c0_272 = arith.constant 0 : index
    %c0_273 = arith.constant 0 : index
    %c0_274 = arith.constant 0 : index
    %253 = vector.load %arg28[%c0_272, %c0_273, %c0_274] : memref<3x128x128xf32, #tpu.memory_space<vmem>>, vector<1x128x128xf32>
    %254 = vector.shape_cast %253 : vector<1x128x128xf32> to vector<128x128xf32>
    %cst_275 = arith.constant dense<0.000000e+00> : vector<34x128xf32>
    %255 = tpu.matmul %252, %254, %cst_275 {dimension_numbers = #tpu.dot_dimension_numbers<[1], [0], [0], [1], [0, 0, 1, 1], [], []>} : vector<34x128xf32>, vector<128x128xf32>, vector<34x128xf32> -> vector<34x128xf32>
    %c1_276 = arith.constant 1 : index
    %c0_277 = arith.constant 0 : index
    %256 = vector.load %arg33[%c1_276, %c0_277] : memref<36x128xf32, #tpu.memory_space<vmem>>, vector<34x128xf32>
    %c1_278 = arith.constant 1 : index
    %c0_279 = arith.constant 0 : index
    %c0_280 = arith.constant 0 : index
    %257 = vector.load %arg28[%c1_278, %c0_279, %c0_280] : memref<3x128x128xf32, #tpu.memory_space<vmem>>, vector<1x128x128xf32>
    %258 = vector.shape_cast %257 : vector<1x128x128xf32> to vector<128x128xf32>
    %cst_281 = arith.constant dense<0.000000e+00> : vector<34x128xf32>
    %259 = tpu.matmul %256, %258, %cst_281 {dimension_numbers = #tpu.dot_dimension_numbers<[1], [0], [0], [1], [0, 0, 1, 1], [], []>} : vector<34x128xf32>, vector<128x128xf32>, vector<34x128xf32> -> vector<34x128xf32>
    %260 = arith.addf %255, %259 : vector<34x128xf32>
    %c2_282 = arith.constant 2 : index
    %c0_283 = arith.constant 0 : index
    %261 = vector.load %arg33[%c2_282, %c0_283] : memref<36x128xf32, #tpu.memory_space<vmem>>, vector<34x128xf32>
    %c2_284 = arith.constant 2 : index
    %c0_285 = arith.constant 0 : index
    %c0_286 = arith.constant 0 : index
    %262 = vector.load %arg28[%c2_284, %c0_285, %c0_286] : memref<3x128x128xf32, #tpu.memory_space<vmem>>, vector<1x128x128xf32>
    %263 = vector.shape_cast %262 : vector<1x128x128xf32> to vector<128x128xf32>
    %cst_287 = arith.constant dense<0.000000e+00> : vector<34x128xf32>
    %264 = tpu.matmul %261, %263, %cst_287 {dimension_numbers = #tpu.dot_dimension_numbers<[1], [0], [0], [1], [0, 0, 1, 1], [], []>} : vector<34x128xf32>, vector<128x128xf32>, vector<34x128xf32> -> vector<34x128xf32>
    %265 = arith.addf %260, %264 : vector<34x128xf32>
    %c0_288 = arith.constant 0 : index
    %c0_289 = arith.constant 0 : index
    %266 = vector.load %arg29[%c0_288, %c0_289] : memref<1x128xf32, #tpu.memory_space<vmem>>, vector<1x128xf32>
    %267 = vector.broadcast %266 : vector<1x128xf32> to vector<34x128xf32>
    %268 = arith.addf %265, %267 : vector<34x128xf32>
    %c0_290 = arith.constant 0 : index
    %c0_291 = arith.constant 0 : index
    %269 = vector.load %arg1[%c0_290, %c0_291] : memref<34x1xf32, #tpu.memory_space<vmem>>, vector<34x1xf32>
    %270 = vector.broadcast %269 : vector<34x1xf32> to vector<34x128xf32>
    %271 = arith.mulf %268, %270 : vector<34x128xf32>
    %c0_292 = arith.constant 0 : index
    %c0_293 = arith.constant 0 : index
    %272 = vector.load %arg30[%c0_292, %c0_293] : memref<34x128xf32, #tpu.memory_space<vmem>>, vector<34x128xf32>
    tpu.vector_store %arg30[%c0_292, %c0_293], %271 {strides = array<i32>} : memref<34x128xf32, #tpu.memory_space<vmem>>, vector<34x128xf32>,
    return
  }
}

</mosaic_0001>

<llo_original>
// kernel: _lambda_.1
$region0: #{_lambda_.1}
  #allocation0 [shape = 'u32[]', space=smem, size = 0x4, offset = 0x4, fixed_abs, tag = 'smem constant byte address 0x4 - core index']
  #allocation1 [shape = 'u32[144,128]{1,0:T(1,128)}', space=vmem, size = 0x12000, scoped, tag = 'internal scratch']
  #allocation2 [shape = 'f32[36,128]{1,0:T(8,128)}', space=vmem, size = 0x5000, scoped, tag = 'scratch operand']
  #allocation3 [shape = 'f32[36,64]{1,0:T(8,128)}', space=vmem, size = 0x5000, scoped, tag = 'scratch operand']
  #allocation4 [shape = 'f32[36,128]{1,0:T(8,128)}', space=vmem, size = 0x5000, scoped, tag = 'scratch operand']
  #allocation5 [shape = 'f32[36,128]{1,0:T(8,128)}', space=vmem, size = 0x5000, scoped, tag = 'scratch operand']
  #allocation6 [shape = 'f32[20,64]{1,0:T(8,128)}', space=vmem, size = 0x3000, scoped, tag = 'scratch operand']
  #allocation7 [shape = 'f32[20,128]{1,0:T(8,128)}', space=vmem, size = 0x3000, scoped, tag = 'scratch operand']
  #allocation8 [shape = 'f32[20,64]{1,0:T(8,128)}', space=vmem, size = 0x3000, scoped, tag = 'scratch operand']
  #allocation9 [shape = 'f32[12,64]{1,0:T(8,128)}', space=vmem, size = 0x2000, scoped, tag = 'scratch operand']
  %s0 = inlined_call_operand.smem [shape: u32[31], index: -1, kind: input, shape index: {}]
  %s1 = sld [smem:[%s0]]
  %s2 = scalar_lea.smem %s0, 1
  %s3 = sld [smem:[%s2]]
  %s4 = scalar_lea.smem %s0, 2
  %s5 = sld [smem:[%s4]]
  %s6 = scalar_lea.smem %s0, 3
  %s7 = sld [smem:[%s6]]
  %s8 = scalar_lea.smem %s0, 4
  %s9 = sld [smem:[%s8]]
  %s10 = scalar_lea.smem %s0, 5
  %s11 = sld [smem:[%s10]]
  %s12 = scalar_lea.smem %s0, 6
  %s13 = sld [smem:[%s12]]
  %s14 = scalar_lea.smem %s0, 7
  %s15 = sld [smem:[%s14]]
  %s16 = scalar_lea.smem %s0, 8
  %s17 = sld [smem:[%s16]]
  %s18 = scalar_lea.smem %s0, 9
  %s19 = sld [smem:[%s18]]
  %s20 = scalar_lea.smem %s0, 10
  %s21 = sld [smem:[%s20]]
  %s22 = scalar_lea.smem %s0, 11
  %s23 = sld [smem:[%s22]]
  %s24 = scalar_lea.smem %s0, 12
  %s25 = sld [smem:[%s24]]
  %s26 = scalar_lea.smem %s0, 13
  %s27 = sld [smem:[%s26]]
  %s28 = scalar_lea.smem %s0, 14
  %s29 = sld [smem:[%s28]]
  %s30 = scalar_lea.smem %s0, 15
  %s31 = sld [smem:[%s30]]
  %s32 = scalar_lea.smem %s0, 16
  %s33 = sld [smem:[%s32]]
  %s34 = scalar_lea.smem %s0, 17
  %s35 = sld [smem:[%s34]]
  %s36 = scalar_lea.smem %s0, 18
  %s37 = sld [smem:[%s36]]
  %s38 = scalar_lea.smem %s0, 19
  %s39 = sld [smem:[%s38]]
  %s40 = scalar_lea.smem %s0, 20
  %s41 = sld [smem:[%s40]]
  %s42 = scalar_lea.smem %s0, 21
  %s43 = sld [smem:[%s42]]
  %s44 = scalar_lea.smem %s0, 22
  %s45 = sld [smem:[%s44]]
  %s46 = scalar_lea.smem %s0, 23
  %s47 = sld [smem:[%s46]]
  %s48 = scalar_lea.smem %s0, 24
  %s49 = sld [smem:[%s48]]
  %s50 = scalar_lea.smem %s0, 25
  %s51 = sld [smem:[%s50]]
  %s52 = scalar_lea.smem %s0, 26
  %s53 = sld [smem:[%s52]]
  %s54 = scalar_lea.smem %s0, 27
  %s55 = sld [smem:[%s54]]
  %s56 = scalar_lea.smem %s0, 28
  %s57 = sld [smem:[%s56]]
  %s58 = scalar_lea.smem %s0, 29
  %s59 = sld [smem:[%s58]]
  %s60 = scalar_lea.smem %s0, 30
  %s61 = sld [smem:[%s60]]
  %s62 = sld [smem:[#allocation0]]
  $region130: #{_lambda_.1} parent=0
    _
  %s64 = ssub.s32 1, %s62
  %s65 = scalar_select 0, %s64, %s62
  // Predicated region
  $region2: #{_lambda_.1} parent=0 // pred_check
    _
  $region3: #{_lambda_.1} parent=0 // pred_check_branch
    %67 = sbr.rel (0) target = $region5
  $region4: #{_lambda_.1} parent=0 // pred_region
    _
  $region5: #{_lambda_.1} parent=0 // pred_fallthru
    _
  // Predicated region
  $region6: #{_lambda_.1} parent=0 // pred_check
    _
  $region7: #{_lambda_.1} parent=0 // pred_check_branch
    %69 = sbr.rel (0) target = $region9
  $region8: #{_lambda_.1} parent=0 // pred_region
    _
  $region9: #{_lambda_.1} parent=0 // pred_fallthru
    _
  // Predicated region
  $region10: #{_lambda_.1} parent=0 // pred_check
    _
  $region11: #{_lambda_.1} parent=0 // pred_check_branch
    %71 = sbr.rel (0) target = $region13
  $region12: #{_lambda_.1} parent=0 // pred_region
    _
  $region13: #{_lambda_.1} parent=0 // pred_fallthru
    _
  // Predicated region
  $region14: #{_lambda_.1} parent=0 // pred_check
    _
  $region15: #{_lambda_.1} parent=0 // pred_check_branch
    %73 = sbr.rel (0) target = $region17
  $region16: #{_lambda_.1} parent=0 // pred_region
    _
  $region17: #{_lambda_.1} parent=0 // pred_fallthru
    _
  // Predicated region
  $region18: #{_lambda_.1} parent=0 // pred_check
    _
  $region19: #{_lambda_.1} parent=0 // pred_check_branch
    %75 = sbr.rel (0) target = $region21
  $region20: #{_lambda_.1} parent=0 // pred_region
    _
  $region21: #{_lambda_.1} parent=0 // pred_fallthru
    _
  // Predicated region
  $region22: #{_lambda_.1} parent=0 // pred_check
    _
  $region23: #{_lambda_.1} parent=0 // pred_check_branch
    %77 = sbr.rel (0) target = $region25
  $region24: #{_lambda_.1} parent=0 // pred_region
    _
  $region25: #{_lambda_.1} parent=0 // pred_fallthru
    _
  // Predicated region
  $region26: #{_lambda_.1} parent=0 // pred_check
    _
  $region27: #{_lambda_.1} parent=0 // pred_check_branch
    %79 = sbr.rel (0) target = $region29
  $region28: #{_lambda_.1} parent=0 // pred_region
    _
  $region29: #{_lambda_.1} parent=0 // pred_fallthru
    _
  // Predicated region
  $region30: #{_lambda_.1} parent=0 // pred_check
    _
  $region31: #{_lambda_.1} parent=0 // pred_check_branch
    %81 = sbr.rel (0) target = $region33
  $region32: #{_lambda_.1} parent=0 // pred_region
    _
  $region33: #{_lambda_.1} parent=0 // pred_fallthru
    _
  // Predicated region
  $region34: #{_lambda_.1} parent=0 // pred_check
    _
  $region35: #{_lambda_.1} parent=0 // pred_check_branch
    %83 = sbr.rel (0) target = $region37
  $region36: #{_lambda_.1} parent=0 // pred_region
    _
  $region37: #{_lambda_.1} parent=0 // pred_fallthru
    _
  // Predicated region
  $region38: #{_lambda_.1} parent=0 // pred_check
    _
  $region39: #{_lambda_.1} parent=0 // pred_check_branch
    %85 = sbr.rel (0) target = $region41
  $region40: #{_lambda_.1} parent=0 // pred_region
    _
  $region41: #{_lambda_.1} parent=0 // pred_fallthru
    _
  // Predicated region
  $region42: #{_lambda_.1} parent=0 // pred_check
    _
  $region43: #{_lambda_.1} parent=0 // pred_check_branch
    %87 = sbr.rel (0) target = $region45
  $region44: #{_lambda_.1} parent=0 // pred_region
    _
  $region45: #{_lambda_.1} parent=0 // pred_fallthru
    _
  // Predicated region
  $region46: #{_lambda_.1} parent=0 // pred_check
    _
  $region47: #{_lambda_.1} parent=0 // pred_check_branch
    %89 = sbr.rel (0) target = $region49
  $region48: #{_lambda_.1} parent=0 // pred_region
    _
  $region49: #{_lambda_.1} parent=0 // pred_fallthru
    _
  // Predicated region
  $region50: #{_lambda_.1} parent=0 // pred_check
    _
  $region51: #{_lambda_.1} parent=0 // pred_check_branch
    %91 = sbr.rel (0) target = $region53
  $region52: #{_lambda_.1} parent=0 // pred_region
    _
  $region53: #{_lambda_.1} parent=0 // pred_fallthru
    _
  // Predicated region
  $region54: #{_lambda_.1} parent=0 // pred_check
    _
  $region55: #{_lambda_.1} parent=0 // pred_check_branch
    %93 = sbr.rel (0) target = $region57
  $region56: #{_lambda_.1} parent=0 // pred_region
    _
  $region57: #{_lambda_.1} parent=0 // pred_fallthru
    _
  // Predicated region
  $region58: #{_lambda_.1} parent=0 // pred_check
    _
  $region59: #{_lambda_.1} parent=0 // pred_check_branch
    %95 = sbr.rel (0) target = $region61
  $region60: #{_lambda_.1} parent=0 // pred_region
    _
  $region61: #{_lambda_.1} parent=0 // pred_fallthru
    _
  // Predicated region
  $region62: #{_lambda_.1} parent=0 // pred_check
    _
  $region63: #{_lambda_.1} parent=0 // pred_check_branch
    %97 = sbr.rel (0) target = $region65
  $region64: #{_lambda_.1} parent=0 // pred_region
    _
  $region65: #{_lambda_.1} parent=0 // pred_fallthru
    _
  // Predicated region
  $region66: #{_lambda_.1} parent=0 // pred_check
    _
  $region67: #{_lambda_.1} parent=0 // pred_check_branch
    %99 = sbr.rel (0) target = $region69
  $region68: #{_lambda_.1} parent=0 // pred_region
    _
  $region69: #{_lambda_.1} parent=0 // pred_fallthru
    _
  // Predicated region
  $region70: #{_lambda_.1} parent=0 // pred_check
    _
  $region71: #{_lambda_.1} parent=0 // pred_check_branch
    %101 = sbr.rel (0) target = $region73
  $region72: #{_lambda_.1} parent=0 // pred_region
    _
  $region73: #{_lambda_.1} parent=0 // pred_fallthru
    _
  // Predicated region
  $region74: #{_lambda_.1} parent=0 // pred_check
    _
  $region75: #{_lambda_.1} parent=0 // pred_check_branch
    %103 = sbr.rel (0) target = $region77
  $region76: #{_lambda_.1} parent=0 // pred_region
    _
  $region77: #{_lambda_.1} parent=0 // pred_fallthru
    _
  // Predicated region
  $region78: #{_lambda_.1} parent=0 // pred_check
    _
  $region79: #{_lambda_.1} parent=0 // pred_check_branch
    %105 = sbr.rel (0) target = $region81
  $region80: #{_lambda_.1} parent=0 // pred_region
    _
  $region81: #{_lambda_.1} parent=0 // pred_fallthru
    _
  // Predicated region
  $region82: #{_lambda_.1} parent=0 // pred_check
    _
  $region83: #{_lambda_.1} parent=0 // pred_check_branch
    %107 = sbr.rel (0) target = $region85
  $region84: #{_lambda_.1} parent=0 // pred_region
    _
  $region85: #{_lambda_.1} parent=0 // pred_fallthru
    _
  // Predicated region
  $region86: #{_lambda_.1} parent=0 // pred_check
    _
  $region87: #{_lambda_.1} parent=0 // pred_check_branch
    %109 = sbr.rel (0) target = $region89
  $region88: #{_lambda_.1} parent=0 // pred_region
    _
  $region89: #{_lambda_.1} parent=0 // pred_fallthru
    _
  // Predicated region
  $region90: #{_lambda_.1} parent=0 // pred_check
    _
  $region91: #{_lambda_.1} parent=0 // pred_check_branch
    %111 = sbr.rel (0) target = $region93
  $region92: #{_lambda_.1} parent=0 // pred_region
    _
  $region93: #{_lambda_.1} parent=0 // pred_fallthru
    _
  // Predicated region
  $region94: #{_lambda_.1} parent=0 // pred_check
    _
  $region95: #{_lambda_.1} parent=0 // pred_check_branch
    %113 = sbr.rel (0) target = $region97
  $region96: #{_lambda_.1} parent=0 // pred_region
    _
  $region97: #{_lambda_.1} parent=0 // pred_fallthru
    _
  // Predicated region
  $region98: #{_lambda_.1} parent=0 // pred_check
    _
  $region99: #{_lambda_.1} parent=0 // pred_check_branch
    %115 = sbr.rel (0) target = $region101
  $region100: #{_lambda_.1} parent=0 // pred_region
    _
  $region101: #{_lambda_.1} parent=0 // pred_fallthru
    _
  // Predicated region
  $region102: #{_lambda_.1} parent=0 // pred_check
    _
  $region103: #{_lambda_.1} parent=0 // pred_check_branch
    %117 = sbr.rel (0) target = $region105
  $region104: #{_lambda_.1} parent=0 // pred_region
    _
  $region105: #{_lambda_.1} parent=0 // pred_fallthru
    _
  // Predicated region
  $region106: #{_lambda_.1} parent=0 // pred_check
    _
  $region107: #{_lambda_.1} parent=0 // pred_check_branch
    %119 = sbr.rel (0) target = $region109
  $region108: #{_lambda_.1} parent=0 // pred_region
    _
  $region109: #{_lambda_.1} parent=0 // pred_fallthru
    _
  // Predicated region
  $region110: #{_lambda_.1} parent=0 // pred_check
    _
  $region111: #{_lambda_.1} parent=0 // pred_check_branch
    %121 = sbr.rel (0) target = $region113
  $region112: #{_lambda_.1} parent=0 // pred_region
    _
  $region113: #{_lambda_.1} parent=0 // pred_fallthru
    _
  // Predicated region
  $region114: #{_lambda_.1} parent=0 // pred_check
    _
  $region115: #{_lambda_.1} parent=0 // pred_check_branch
    %123 = sbr.rel (0) target = $region117
  $region116: #{_lambda_.1} parent=0 // pred_region
    _
  $region117: #{_lambda_.1} parent=0 // pred_fallthru
    _
  // Predicated region
  $region118: #{_lambda_.1} parent=0 // pred_check
    _
  $region119: #{_lambda_.1} parent=0 // pred_check_branch
    %125 = sbr.rel (0) target = $region121
  $region120: #{_lambda_.1} parent=0 // pred_region
    _
  $region121: #{_lambda_.1} parent=0 // pred_fallthru
    _
  %126 = vst [vmem:[#allocation2] sm:$0xff] 0.0
  %127 = vst [vmem:[#allocation2 + $0x8] sm:$0xff] 0.0
  %128 = vst [vmem:[#allocation2 + $0x10] sm:$0xff] 0.0
  %129 = vst [vmem:[#allocation2 + $0x18] sm:$0xff] 0.0
  %130 = vst [vmem:[#allocation2 + $0x20] sm:$0xf] 0.0
  %vm131 = vcmask 523264
  %132 = vst.msk [vmem:[#allocation3] sm:$0xff] %vm131, 0.0
  %133 = vst.msk [vmem:[#allocation3 + $0x8] sm:$0xff] %vm131, 0.0
  %134 = vst.msk [vmem:[#allocation3 + $0x10] sm:$0xff] %vm131, 0.0
  %135 = vst.msk [vmem:[#allocation3 + $0x18] sm:$0xff] %vm131, 0.0
  %vm136 = vcmask 519168
  %137 = vst.msk [vmem:[#allocation3 + $0x20] sm:$0xf] %vm136, 0.0
  %138 = vst [vmem:[#allocation4] sm:$0xff] 0.0
  %139 = vst [vmem:[#allocation4 + $0x8] sm:$0xff] 0.0
  %140 = vst [vmem:[#allocation4 + $0x10] sm:$0xff] 0.0
  %141 = vst [vmem:[#allocation4 + $0x18] sm:$0xff] 0.0
  %142 = vst [vmem:[#allocation4 + $0x20] sm:$0xf] 0.0
  %143 = vst [vmem:[#allocation5] sm:$0xff] 0.0
  %144 = vst [vmem:[#allocation5 + $0x8] sm:$0xff] 0.0
  %145 = vst [vmem:[#allocation5 + $0x10] sm:$0xff] 0.0
  %146 = vst [vmem:[#allocation5 + $0x18] sm:$0xff] 0.0
  %147 = vst [vmem:[#allocation5 + $0x20] sm:$0xf] 0.0
  %148 = vst.msk [vmem:[#allocation6] sm:$0xff] %vm131, 0.0
  %149 = vst.msk [vmem:[#allocation6 + $0x8] sm:$0xff] %vm131, 0.0
  %150 = vst.msk [vmem:[#allocation6 + $0x10] sm:$0xf] %vm136, 0.0
  %151 = vst [vmem:[#allocation7] sm:$0xff] 0.0
  %152 = vst [vmem:[#allocation7 + $0x8] sm:$0xff] 0.0
  %153 = vst [vmem:[#allocation7 + $0x10] sm:$0xf] 0.0
  %154 = vst.msk [vmem:[#allocation8] sm:$0xff] %vm131, 0.0
  %155 = vst.msk [vmem:[#allocation8 + $0x8] sm:$0xff] %vm131, 0.0
  %156 = vst.msk [vmem:[#allocation8 + $0x10] sm:$0xf] %vm136, 0.0
  %157 = vst.msk [vmem:[#allocation9] sm:$0xff] %vm131, 0.0
  %158 = vst.msk [vmem:[#allocation9 + $0x8] sm:$0xf] %vm136, 0.0
  %v159 = vld [vmem:[%s1] sm:$0xff]
  %v160 = vld [vmem:[%s1 + $0x8] sm:$0xff]
  %v161 = vld [vmem:[%s1 + $0x10] sm:$0xff]
  %v162 = vld [vmem:[%s1 + $0x18] sm:$0xff]
  %v163 = vld [vmem:[%s1 + $0x20] sm:$0x3]
  %v164 = vld [vmem:[%s25] sm:$0xff]
  %v165 = vld [vmem:[%s25 + $0x8] sm:$0xff]
  %v166 = vld [vmem:[%s25 + $0x10] sm:$0xff]
  %v167 = vld [vmem:[%s25 + $0x18] sm:$0xff]
  %v168 = vld [vmem:[%s25 + $0x20] sm:$0xff]
  %v169 = vld [vmem:[%s25 + $0x28] sm:$0xff]
  %v170 = vld [vmem:[%s25 + $0x30] sm:$0xff]
  %v171 = vld [vmem:[%s25 + $0x38] sm:$0xff]
  %v172 = vld [vmem:[%s1 + $0x1] sm:$0xff]
  %v173 = vld [vmem:[%s1 + $0x9] sm:$0xff]
  %v174 = vld [vmem:[%s1 + $0x11] sm:$0xff]
  %v175 = vld [vmem:[%s1 + $0x19] sm:$0xff]
  %v176 = vld [vmem:[%s1 + $0x21] sm:$0x3]
  %s177 = scalar_lea.vmem %s25, 64
  %v178 = vld [vmem:[%s177] sm:$0xff]
  %v179 = vld [vmem:[%s177 + $0x8] sm:$0xff]
  %v180 = vld [vmem:[%s177 + $0x10] sm:$0xff]
  %v181 = vld [vmem:[%s177 + $0x18] sm:$0xff]
  %v182 = vld [vmem:[%s177 + $0x20] sm:$0xff]
  %v183 = vld [vmem:[%s177 + $0x28] sm:$0xff]
  %v184 = vld [vmem:[%s177 + $0x30] sm:$0xff]
  %v185 = vld [vmem:[%s177 + $0x38] sm:$0xff]
  %v187 = vsel %vm131, %v172, 0
  %v190 = vsel %vm131, %v173, 0
  %v193 = vsel %vm131, %v174, 0
  %v196 = vsel %vm131, %v175, 0
  %v199 = vsel %vm131, %v176, 0
  %201 = vmatprep.subr.mxu0 0.0
  %202 = vmatpush1.msra.mxu0 %v178
  %203 = vmatprep.subr.mxu0 0.0
  %204 = vmatpush1.msra.mxu0 %v179
  %205 = vmatprep.subr.mxu0 0.0
  %206 = vmatpush1.msra.mxu0 %v180
  %207 = vmatprep.subr.mxu0 0.0
  %208 = vmatpush1.msra.mxu0 %v181
  %209 = vmatprep.subr.mxu0 0.0
  %210 = vmatpush1.msra.mxu0 %v182
  %211 = vmatprep.subr.mxu0 0.0
  %212 = vmatpush1.msra.mxu0 %v183
  %213 = vmatprep.subr.mxu0 0.0
  %214 = vmatpush1.msra.mxu0 %v184
  %215 = vmatprep.subr.mxu0 0.0
  %216 = vmatpush1.msra.mxu0 %v185
  %217 = vmatprep.subr.mxu0 0.0
  %218 = vmatpush1.msra.mxu0 0.0
  %219 = vmatprep.subr.mxu0 0.0
  %220 = vmatpush1.msra.mxu0 0.0
  %221 = vmatprep.subr.mxu0 0.0
  %222 = vmatpush1.msra.mxu0 0.0
  %223 = vmatprep.subr.mxu0 0.0
  %224 = vmatpush1.msra.mxu0 0.0
  %225 = vmatprep.subr.mxu0 0.0
  %226 = vmatpush1.msra.mxu0 0.0
  %227 = vmatprep.subr.mxu0 0.0
  %228 = vmatpush1.msra.mxu0 0.0
  %229 = vmatprep.subr.mxu0 0.0
  %230 = vmatpush1.msra.mxu0 0.0
  %231 = vmatprep.subr.mxu0 0.0
  %232 = vmatpush1.msra.mxu0 0.0
  %233 = vmatprep.subr.mxu0 0.0
  %234 = vmatpush1.msra.mxu0 0.0
  %235 = vmatprep.subr.mxu0 0.0
  %236 = vmatpush1.msra.mxu0 0.0
  %237 = vmatprep.subr.mxu0 0.0
  %238 = vmatpush1.msra.mxu0 0.0
  %239 = vmatprep.subr.mxu0 0.0
  %240 = vmatpush1.msra.mxu0 0.0
  %241 = vmatprep.subr.mxu0 0.0
  %242 = vmatpush1.msra.mxu0 0.0
  %243 = vmatprep.subr.mxu0 0.0
  %244 = vmatpush1.msra.mxu0 0.0
  %245 = vmatprep.subr.mxu0 0.0
  %246 = vmatpush1.msra.mxu0 0.0
  %247 = vmatprep.subr.mxu0 0.0
  %248 = vmatpush1.msra.mxu0 0.0
  %249 = vmatprep.subr.mxu0 0.0
  %250 = vmatpush1.msra.mxu0 0.0
  %251 = vmatprep.subr.mxu0 0.0
  %252 = vmatpush1.msra.mxu0 0.0
  %253 = vmatprep.subr.mxu0 0.0
  %254 = vmatpush1.msra.mxu0 0.0
  %255 = vmatprep.subr.mxu0 0.0
  %256 = vmatpush1.msra.mxu0 0.0
  %257 = vmatprep.subr.mxu0 0.0
  %258 = vmatpush1.msra.mxu0 0.0
  %259 = vmatprep.subr.mxu0 0.0
  %260 = vmatpush1.msra.mxu0 0.0
  %261 = vmatprep.subr.mxu0 0.0
  %262 = vmatpush1.msra.mxu0 0.0
  %263 = vmatprep.subr.mxu0 0.0
  %264 = vmatpush1.msra.mxu0 0.0
  %265 = vmatprep.mubr.f32.mxu0 0.0
  %266 = vmatmul.mubr.f32.gmra.mrb[0].mxu0 %v187
  %v267 = vpop.f32.mrb[0].mxu0
  %v268 = vadd.f32 0.0, %v267
  %v269 = vpop.f32.mrb[0].mxu0
  %270 = vmatprep.mubr.f32.mxu0 0.0
  %271 = vmatmul.mubr.f32.gmra.mrb[0].mxu0 %v190
  %v272 = vpop.f32.mrb[0].mxu0
  %v273 = vadd.f32 0.0, %v272
  %v274 = vpop.f32.mrb[0].mxu0
  %275 = vmatprep.mubr.f32.mxu0 0.0
  %276 = vmatmul.mubr.f32.gmra.mrb[0].mxu0 %v193
  %v277 = vpop.f32.mrb[0].mxu0
  %v278 = vadd.f32 0.0, %v277
  %v279 = vpop.f32.mrb[0].mxu0
  %280 = vmatprep.mubr.f32.mxu0 0.0
  %281 = vmatmul.mubr.f32.gmra.mrb[0].mxu0 %v196
  %v282 = vpop.f32.mrb[0].mxu0
  %v283 = vadd.f32 0.0, %v282
  %v284 = vpop.f32.mrb[0].mxu0
  %285 = vmatprep.mubr.f32.mxu0 0.0
  %286 = vmatmul.mubr.f32.gmra.mrb[0].mxu0 %v199
  %v287 = vpop.f32.mrb[0].mxu0
  %v288 = vadd.f32 0.0, %v287
  %v289 = vpop.f32.mrb[0].mxu0
  %290 = vdwg.mxu0
  %v292 = vsel %vm131, %v159, 0
  %v295 = vsel %vm131, %v160, 0
  %v298 = vsel %vm131, %v161, 0
  %v301 = vsel %vm131, %v162, 0
  %v304 = vsel %vm131, %v163, 0
  %306 = vmatprep.subr.mxu0 0.0
  %307 = vmatpush1.msra.mxu0 %v164
  %308 = vmatprep.subr.mxu0 0.0
  %309 = vmatpush1.msra.mxu0 %v165
  %310 = vmatprep.subr.mxu0 0.0
  %311 = vmatpush1.msra.mxu0 %v166
  %312 = vmatprep.subr.mxu0 0.0
  %313 = vmatpush1.msra.mxu0 %v167
  %314 = vmatprep.subr.mxu0 0.0
  %315 = vmatpush1.msra.mxu0 %v168
  %316 = vmatprep.subr.mxu0 0.0
  %317 = vmatpush1.msra.mxu0 %v169
  %318 = vmatprep.subr.mxu0 0.0
  %319 = vmatpush1.msra.mxu0 %v170
  %320 = vmatprep.subr.mxu0 0.0
  %321 = vmatpush1.msra.mxu0 %v171
  %322 = vmatprep.subr.mxu0 0.0
  %323 = vmatpush1.msra.mxu0 0.0
  %324 = vmatprep.subr.mxu0 0.0
  %325 = vmatpush1.msra.mxu0 0.0
  %326 = vmatprep.subr.mxu0 0.0
  %327 = vmatpush1.msra.mxu0 0.0
  %328 = vmatprep.subr.mxu0 0.0
  %329 = vmatpush1.msra.mxu0 0.0
  %330 = vmatprep.subr.mxu0 0.0
  %331 = vmatpush1.msra.mxu0 0.0
  %332 = vmatprep.subr.mxu0 0.0
  %333 = vmatpush1.msra.mxu0 0.0
  %334 = vmatprep.subr.mxu0 0.0
  %335 = vmatpush1.msra.mxu0 0.0
  %336 = vmatprep.subr.mxu0 0.0
  %337 = vmatpush1.msra.mxu0 0.0
  %338 = vmatprep.subr.mxu0 0.0
  %339 = vmatpush1.msra.mxu0 0.0
  %340 = vmatprep.subr.mxu0 0.0
  %341 = vmatpush1.msra.mxu0 0.0
  %342 = vmatprep.subr.mxu0 0.0
  %343 = vmatpush1.msra.mxu0 0.0
  %344 = vmatprep.subr.mxu0 0.0
  %345 = vmatpush1.msra.mxu0 0.0
  %346 = vmatprep.subr.mxu0 0.0
  %347 = vmatpush1.msra.mxu0 0.0
  %348 = vmatprep.subr.mxu0 0.0
  %349 = vmatpush1.msra.mxu0 0.0
  %350 = vmatprep.subr.mxu0 0.0
  %351 = vmatpush1.msra.mxu0 0.0
  %352 = vmatprep.subr.mxu0 0.0
  %353 = vmatpush1.msra.mxu0 0.0
  %354 = vmatprep.subr.mxu0 0.0
  %355 = vmatpush1.msra.mxu0 0.0
  %356 = vmatprep.subr.mxu0 0.0
  %357 = vmatpush1.msra.mxu0 0.0
  %358 = vmatprep.subr.mxu0 0.0
  %359 = vmatpush1.msra.mxu0 0.0
  %360 = vmatprep.subr.mxu0 0.0
  %361 = vmatpush1.msra.mxu0 0.0
  %362 = vmatprep.subr.mxu0 0.0
  %363 = vmatpush1.msra.mxu0 0.0
  %364 = vmatprep.subr.mxu0 0.0
  %365 = vmatpush1.msra.mxu0 0.0
  %366 = vmatprep.subr.mxu0 0.0
  %367 = vmatpush1.msra.mxu0 0.0
  %368 = vmatprep.subr.mxu0 0.0
  %369 = vmatpush1.msra.mxu0 0.0
  %370 = vmatprep.mubr.f32.mxu0 0.0
  %371 = vmatmul.mubr.f32.gmra.mrb[0].mxu0 %v292
  %v372 = vpop.f32.mrb[0].mxu0
  %v373 = vadd.f32 %v268, %v372
  %v374 = vpop.f32.mrb[0].mxu0
  %375 = vmatprep.mubr.f32.mxu0 0.0
  %376 = vmatmul.mubr.f32.gmra.mrb[0].mxu0 %v295
  %v377 = vpop.f32.mrb[0].mxu0
  %v378 = vadd.f32 %v273, %v377
  %v379 = vpop.f32.mrb[0].mxu0
  %380 = vmatprep.mubr.f32.mxu0 0.0
  %381 = vmatmul.mubr.f32.gmra.mrb[0].mxu0 %v298
  %v382 = vpop.f32.mrb[0].mxu0
  %v383 = vadd.f32 %v278, %v382
  %v384 = vpop.f32.mrb[0].mxu0
  %385 = vmatprep.mubr.f32.mxu0 0.0
  %386 = vmatmul.mubr.f32.gmra.mrb[0].mxu0 %v301
  %v387 = vpop.f32.mrb[0].mxu0
  %v388 = vadd.f32 %v283, %v387
  %v389 = vpop.f32.mrb[0].mxu0
  %390 = vmatprep.mubr.f32.mxu0 0.0
  %391 = vmatmul.mubr.f32.gmra.mrb[0].mxu0 %v304
  %v392 = vpop.f32.mrb[0].mxu0
  %v393 = vadd.f32 %v288, %v392
  %v394 = vpop.f32.mrb[0].mxu0
  %395 = vdwg.mxu0
  %v396 = vld [vmem:[%s1 + $0x2] sm:$0xff]
  %v397 = vld [vmem:[%s1 + $0xa] sm:$0xff]
  %v398 = vld [vmem:[%s1 + $0x12] sm:$0xff]
  %v399 = vld [vmem:[%s1 + $0x1a] sm:$0xff]
  %v400 = vld [vmem:[%s1 + $0x22] sm:$0x3]
  %s401 = scalar_lea.vmem %s25, 128
  %v402 = vld [vmem:[%s401] sm:$0xff]
  %v403 = vld [vmem:[%s401 + $0x8] sm:$0xff]
  %v404 = vld [vmem:[%s401 + $0x10] sm:$0xff]
  %v405 = vld [vmem:[%s401 + $0x18] sm:$0xff]
  %v406 = vld [vmem:[%s401 + $0x20] sm:$0xff]
  %v407 = vld [vmem:[%s401 + $0x28] sm:$0xff]
  %v408 = vld [vmem:[%s401 + $0x30] sm:$0xff]
  %v409 = vld [vmem:[%s401 + $0x38] sm:$0xff]
  %v411 = vsel %vm131, %v396, 0
  %v414 = vsel %vm131, %v397, 0
  %v417 = vsel %vm131, %v398, 0
  %v420 = vsel %vm131, %v399, 0
  %v423 = vsel %vm131, %v400, 0
  %425 = vmatprep.subr.mxu0 0.0
  %426 = vmatpush1.msra.mxu0 %v402
  %427 = vmatprep.subr.mxu0 0.0
  %428 = vmatpush1.msra.mxu0 %v403
  %429 = vmatprep.subr.mxu0 0.0
  %430 = vmatpush1.msra.mxu0 %v404
  %431 = vmatprep.subr.mxu0 0.0
  %432 = vmatpush1.msra.mxu0 %v405
  %433 = vmatprep.subr.mxu0 0.0
  %434 = vmatpush1.msra.mxu0 %v406
  %435 = vmatprep.subr.mxu0 0.0
  %436 = vmatpush1.msra.mxu0 %v407
  %437 = vmatprep.subr.mxu0 0.0
  %438 = vmatpush1.msra.mxu0 %v408
  %439 = vmatprep.subr.mxu0 0.0
  %440 = vmatpush1.msra.mxu0 %v409
  %441 = vmatprep.subr.mxu0 0.0
  %442 = vmatpush1.msra.mxu0 0.0
  %443 = vmatprep.subr.mxu0 0.0
  %444 = vmatpush1.msra.mxu0 0.0
  %445 = vmatprep.subr.mxu0 0.0
  %446 = vmatpush1.msra.mxu0 0.0
  %447 = vmatprep.subr.mxu0 0.0
  %448 = vmatpush1.msra.mxu0 0.0
  %449 = vmatprep.subr.mxu0 0.0
  %450 = vmatpush1.msra.mxu0 0.0
  %451 = vmatprep.subr.mxu0 0.0
  %452 = vmatpush1.msra.mxu0 0.0
  %453 = vmatprep.subr.mxu0 0.0
  %454 = vmatpush1.msra.mxu0 0.0
  %455 = vmatprep.subr.mxu0 0.0
  %456 = vmatpush1.msra.mxu0 0.0
  %457 = vmatprep.subr.mxu0 0.0
  %458 = vmatpush1.msra.mxu0 0.0
  %459 = vmatprep.subr.mxu0 0.0
  %460 = vmatpush1.msra.mxu0 0.0
  %461 = vmatprep.subr.mxu0 0.0
  %462 = vmatpush1.msra.mxu0 0.0
  %463 = vmatprep.subr.mxu0 0.0
  %464 = vmatpush1.msra.mxu0 0.0
  %465 = vmatprep.subr.mxu0 0.0
  %466 = vmatpush1.msra.mxu0 0.0
  %467 = vmatprep.subr.mxu0 0.0
  %468 = vmatpush1.msra.mxu0 0.0
  %469 = vmatprep.subr.mxu0 0.0
  %470 = vmatpush1.msra.mxu0 0.0
  %471 = vmatprep.subr.mxu0 0.0
  %472 = vmatpush1.msra.mxu0 0.0
  %473 = vmatprep.subr.mxu0 0.0
  %474 = vmatpush1.msra.mxu0 0.0
  %475 = vmatprep.subr.mxu0 0.0
  %476 = vmatpush1.msra.mxu0 0.0
  %477 = vmatprep.subr.mxu0 0.0
  %478 = vmatpush1.msra.mxu0 0.0
  %479 = vmatprep.subr.mxu0 0.0
  %480 = vmatpush1.msra.mxu0 0.0
  %481 = vmatprep.subr.mxu0 0.0
  %482 = vmatpush1.msra.mxu0 0.0
  %483 = vmatprep.subr.mxu0 0.0
  %484 = vmatpush1.msra.mxu0 0.0
  %485 = vmatprep.subr.mxu0 0.0
  %486 = vmatpush1.msra.mxu0 0.0
  %487 = vmatprep.subr.mxu0 0.0
  %488 = vmatpush1.msra.mxu0 0.0
  %489 = vmatprep.mubr.f32.mxu0 0.0
  %490 = vmatmul.mubr.f32.gmra.mrb[0].mxu0 %v411
  %v491 = vpop.f32.mrb[0].mxu0
  %v492 = vadd.f32 0.0, %v491
  %v493 = vpop.f32.mrb[0].mxu0
  %494 = vmatprep.mubr.f32.mxu0 0.0
  %495 = vmatmul.mubr.f32.gmra.mrb[0].mxu0 %v414
  %v496 = vpop.f32.mrb[0].mxu0
  %v497 = vadd.f32 0.0, %v496
  %v498 = vpop.f32.mrb[0].mxu0
  %499 = vmatprep.mubr.f32.mxu0 0.0
  %500 = vmatmul.mubr.f32.gmra.mrb[0].mxu0 %v417
  %v501 = vpop.f32.mrb[0].mxu0
  %v502 = vadd.f32 0.0, %v501
  %v503 = vpop.f32.mrb[0].mxu0
  %504 = vmatprep.mubr.f32.mxu0 0.0
  %505 = vmatmul.mubr.f32.gmra.mrb[0].mxu0 %v420
  %v506 = vpop.f32.mrb[0].mxu0
  %v507 = vadd.f32 0.0, %v506
  %v508 = vpop.f32.mrb[0].mxu0
  %509 = vmatprep.mubr.f32.mxu0 0.0
  %510 = vmatmul.mubr.f32.gmra.mrb[0].mxu0 %v423
  %v511 = vpop.f32.mrb[0].mxu0
  %v512 = vadd.f32 0.0, %v511
  %v513 = vpop.f32.mrb[0].mxu0
  %514 = vdwg.mxu0
  %v515 = vadd.f32 %v373, %v492
  %v516 = vadd.f32 %v378, %v497
  %v517 = vadd.f32 %v383, %v502
  %v518 = vadd.f32 %v388, %v507
  %v519 = vadd.f32 %v393, %v512
  %v520 = vld [vmem:[%s27] sm:$0x1]
  %v522 = vlaneseq
  %v523 = vshrl.u32 %v522, 7
  %v524 = vsub.s32 0, %v523
  %v525 = vrot.slane %v520, %v524
  %v527 = vadd.f32 %v515, %v525
  %v528 = vadd.f32 %v516, %v525
  %v529 = vadd.f32 %v517, %v525
  %v530 = vadd.f32 %v518, %v525
  %v531 = vadd.f32 %v519, %v525
  %vm532 = vcmp.ge.f32.partialorder %v527, 0.0
  %vm533 = vcmp.ge.f32.partialorder %v528, 0.0
  %vm534 = vcmp.ge.f32.partialorder %v529, 0.0
  %vm535 = vcmp.ge.f32.partialorder %v530, 0.0
  %vm536 = vcmp.ge.f32.partialorder %v531, 0.0
  %v537 = vmul.f32 %v527, 0.2
  %v538 = vmul.f32 %v528, 0.2
  %v539 = vmul.f32 %v529, 0.2
  %v540 = vmul.f32 %v530, 0.2
  %v541 = vmul.f32 %v531, 0.2
  %v542 = vsel %vm532, %v527, %v537
  %v543 = vsel %vm533, %v528, %v538
  %v544 = vsel %vm534, %v529, %v539
  %v545 = vsel %vm535, %v530, %v540
  %v546 = vsel %vm536, %v531, %v541
  %v547 = vld [vmem:[%s3] sm:$0xff]
  %v548 = vld [vmem:[%s3 + $0x8] sm:$0xff]
  %v549 = vld [vmem:[%s3 + $0x10] sm:$0xff]
  %v550 = vld [vmem:[%s3 + $0x18] sm:$0xff]
  %v551 = vld [vmem:[%s3 + $0x20] sm:$0x3]
  %553 = vset.pattern.permute.xlu0 0
  %554 = vperm.xlu0 %553, %v547
  %v555 = vpop.permute.xlu0 %554
  %558 = vset.pattern.permute.xlu0 0
  %559 = vperm.xlu0 %558, %v548
  %v560 = vpop.permute.xlu0 %559
  %563 = vset.pattern.permute.xlu0 0
  %564 = vperm.xlu0 %563, %v549
  %v565 = vpop.permute.xlu0 %564
  %568 = vset.pattern.permute.xlu0 0
  %569 = vperm.xlu0 %568, %v550
  %v570 = vpop.permute.xlu0 %569
  %573 = vset.pattern.permute.xlu0 0
  %574 = vperm.xlu0 %573, %v551
  %v575 = vpop.permute.xlu0 %574
  %v577 = vmul.f32 %v542, %v555
  %v578 = vmul.f32 %v543, %v560
  %v579 = vmul.f32 %v544, %v565
  %v580 = vmul.f32 %v545, %v570
  %v581 = vmul.f32 %v546, %v575
  %582 = vst [vmem:[#allocation2 + $0x1] sm:$0xff] %v577
  %583 = vst [vmem:[#allocation2 + $0x9] sm:$0xff] %v578
  %584 = vst [vmem:[#allocation2 + $0x11] sm:$0xff] %v579
  %585 = vst [vmem:[#allocation2 + $0x19] sm:$0xff] %v580
  %586 = vst [vmem:[#allocation2 + $0x21] sm:$0x3] %v581
  %v587 = vld [vmem:[#allocation2 + $0x2] sm:$0xff]
  %v588 = vld [vmem:[#allocation2 + $0xa] sm:$0xff]
  %v589 = vld [vmem:[#allocation2 + $0x12] sm:$0xff]
  %v590 = vld [vmem:[#allocation2 + $0x1a] sm:$0xff]
  %v591 = vld [vmem:[#allocation2 + $0x22] sm:$0x3]
  %v592 = vmax.f32 %v577, %v587
  %v593 = vmax.f32 %v578, %v588
  %v594 = vmax.f32 %v579, %v589
  %v595 = vmax.f32 %v580, %v590
  %v596 = vmax.f32 %v581, %v591
  %v597 = vld [vmem:[%s9] sm:$0xff]
  %v598 = vld [vmem:[%s9 + $0x8] sm:$0xff]
  %v599 = vld [vmem:[%s9 + $0x10] sm:$0x3]
  %vm600 = vcmask 277504
  %v602 = vsel %vm600, %v597, 0
  %v605 = vsel %vm600, %v598, 0
  %v608 = vsel %vm600, %v599, 0
  %vm610 = vcmask 1041408
  %v612 = vsel %vm610, %v596, 0
  %614 = vmatprep.subr.mxu0 0.0
  %615 = vmatpush1.msra.mxu0 %v592
  %616 = vmatprep.subr.mxu0 0.0
  %617 = vmatpush1.msra.mxu0 %v593
  %618 = vmatprep.subr.mxu0 0.0
  %619 = vmatpush1.msra.mxu0 %v594
  %620 = vmatprep.subr.mxu0 0.0
  %621 = vmatpush1.msra.mxu0 %v595
  %622 = vmatprep.subr.mxu0 0.0
  %623 = vmatpush1.msra.mxu0 %v612
  %624 = vmatprep.subr.mxu0 0.0
  %625 = vmatpush1.msra.mxu0 0.0
  %626 = vmatprep.subr.mxu0 0.0
  %627 = vmatpush1.msra.mxu0 0.0
  %628 = vmatprep.subr.mxu0 0.0
  %629 = vmatpush1.msra.mxu0 0.0
  %630 = vmatprep.subr.mxu0 0.0
  %631 = vmatpush1.msra.mxu0 0.0
  %632 = vmatprep.subr.mxu0 0.0
  %633 = vmatpush1.msra.mxu0 0.0
  %634 = vmatprep.subr.mxu0 0.0
  %635 = vmatpush1.msra.mxu0 0.0
  %636 = vmatprep.subr.mxu0 0.0
  %637 = vmatpush1.msra.mxu0 0.0
  %638 = vmatprep.subr.mxu0 0.0
  %639 = vmatpush1.msra.mxu0 0.0
  %640 = vmatprep.subr.mxu0 0.0
  %641 = vmatpush1.msra.mxu0 0.0
  %642 = vmatprep.subr.mxu0 0.0
  %643 = vmatpush1.msra.mxu0 0.0
  %644 = vmatprep.subr.mxu0 0.0
  %645 = vmatpush1.msra.mxu0 0.0
  %646 = vmatprep.subr.mxu0 0.0
  %647 = vmatpush1.msra.mxu0 0.0
  %648 = vmatprep.subr.mxu0 0.0
  %649 = vmatpush1.msra.mxu0 0.0
  %650 = vmatprep.subr.mxu0 0.0
  %651 = vmatpush1.msra.mxu0 0.0
  %652 = vmatprep.subr.mxu0 0.0
  %653 = vmatpush1.msra.mxu0 0.0
  %654 = vmatprep.subr.mxu0 0.0
  %655 = vmatpush1.msra.mxu0 0.0
  %656 = vmatprep.subr.mxu0 0.0
  %657 = vmatpush1.msra.mxu0 0.0
  %658 = vmatprep.subr.mxu0 0.0
  %659 = vmatpush1.msra.mxu0 0.0
  %660 = vmatprep.subr.mxu0 0.0
  %661 = vmatpush1.msra.mxu0 0.0
  %662 = vmatprep.subr.mxu0 0.0
  %663 = vmatpush1.msra.mxu0 0.0
  %664 = vmatprep.subr.mxu0 0.0
  %665 = vmatpush1.msra.mxu0 0.0
  %666 = vmatprep.subr.mxu0 0.0
  %667 = vmatpush1.msra.mxu0 0.0
  %668 = vmatprep.subr.mxu0 0.0
  %669 = vmatpush1.msra.mxu0 0.0
  %670 = vmatprep.subr.mxu0 0.0
  %671 = vmatpush1.msra.mxu0 0.0
  %672 = vmatprep.subr.mxu0 0.0
  %673 = vmatpush1.msra.mxu0 0.0
  %674 = vmatprep.subr.mxu0 0.0
  %675 = vmatpush1.msra.mxu0 0.0
  %676 = vmatprep.subr.mxu0 0.0
  %677 = vmatpush1.msra.mxu0 0.0
  %678 = vmatprep.mubr.f32.mxu0 0.0
  %679 = vmatmul.mubr.f32.gmra.mrb[0].mxu0 %v602
  %v680 = vpop.f32.mrb[0].mxu0
  %v681 = vadd.f32 0.0, %v680
  %v682 = vpop.f32.mrb[0].mxu0
  %683 = vmatprep.mubr.f32.mxu0 0.0
  %684 = vmatmul.mubr.f32.gmra.mrb[0].mxu0 %v605
  %v685 = vpop.f32.mrb[0].mxu0
  %v686 = vadd.f32 0.0, %v685
  %v687 = vpop.f32.mrb[0].mxu0
  %688 = vmatprep.mubr.f32.mxu0 0.0
  %689 = vmatmul.mubr.f32.gmra.mrb[0].mxu0 %v608
  %v690 = vpop.f32.mrb[0].mxu0
  %v691 = vadd.f32 0.0, %v690
  %v692 = vpop.f32.mrb[0].mxu0
  %693 = vdwg.mxu0
  %v694 = vld [vmem:[%s11] sm:$0xff]
  %v695 = vld [vmem:[%s11 + $0x8] sm:$0xff]
  %v696 = vld [vmem:[%s11 + $0x10] sm:$0xff]
  %v697 = vld [vmem:[%s11 + $0x18] sm:$0xff]
  %v698 = vld [vmem:[%s11 + $0x20] sm:$0xff]
  %v699 = vld [vmem:[%s11 + $0x28] sm:$0xff]
  %v700 = vld [vmem:[%s11 + $0x30] sm:$0xff]
  %v701 = vld [vmem:[%s11 + $0x38] sm:$0xff]
  %v702 = vld [vmem:[%s11 + $0x40] sm:$0xff]
  %v703 = vld [vmem:[%s11 + $0x48] sm:$0xff]
  %v704 = vld [vmem:[%s11 + $0x50] sm:$0xff]
  %v705 = vld [vmem:[%s11 + $0x58] sm:$0xff]
  %v706 = vld [vmem:[%s11 + $0x60] sm:$0xff]
  %v707 = vld [vmem:[%s11 + $0x68] sm:$0xff]
  %v708 = vld [vmem:[%s11 + $0x70] sm:$0xff]
  %v709 = vld [vmem:[%s11 + $0x78] sm:$0xff]
  %710 = vmatprep.subr.mxu0 0.0
  %711 = vmatpush1.msra.mxu0 %v694
  %712 = vmatprep.subr.mxu0 0.0
  %713 = vmatpush1.msra.mxu0 %v695
  %714 = vmatprep.subr.mxu0 0.0
  %715 = vmatpush1.msra.mxu0 %v696
  %716 = vmatprep.subr.mxu0 0.0
  %717 = vmatpush1.msra.mxu0 %v697
  %718 = vmatprep.subr.mxu0 0.0
  %719 = vmatpush1.msra.mxu0 %v698
  %720 = vmatprep.subr.mxu0 0.0
  %721 = vmatpush1.msra.mxu0 %v699
  %722 = vmatprep.subr.mxu0 0.0
  %723 = vmatpush1.msra.mxu0 %v700
  %724 = vmatprep.subr.mxu0 0.0
  %725 = vmatpush1.msra.mxu0 %v701
  %726 = vmatprep.subr.mxu0 0.0
  %727 = vmatpush1.msra.mxu0 %v702
  %728 = vmatprep.subr.mxu0 0.0
  %729 = vmatpush1.msra.mxu0 %v703
  %730 = vmatprep.subr.mxu0 0.0
  %731 = vmatpush1.msra.mxu0 %v704
  %732 = vmatprep.subr.mxu0 0.0
  %733 = vmatpush1.msra.mxu0 %v705
  %734 = vmatprep.subr.mxu0 0.0
  %735 = vmatpush1.msra.mxu0 %v706
  %736 = vmatprep.subr.mxu0 0.0
  %737 = vmatpush1.msra.mxu0 %v707
  %738 = vmatprep.subr.mxu0 0.0
  %739 = vmatpush1.msra.mxu0 %v708
  %740 = vmatprep.subr.mxu0 0.0
  %741 = vmatpush1.msra.mxu0 %v709
  %742 = vmatprep.subr.mxu0 0.0
  %743 = vmatpush1.msra.mxu0 0.0
  %744 = vmatprep.subr.mxu0 0.0
  %745 = vmatpush1.msra.mxu0 0.0
  %746 = vmatprep.subr.mxu0 0.0
  %747 = vmatpush1.msra.mxu0 0.0
  %748 = vmatprep.subr.mxu0 0.0
  %749 = vmatpush1.msra.mxu0 0.0
  %750 = vmatprep.subr.mxu0 0.0
  %751 = vmatpush1.msra.mxu0 0.0
  %752 = vmatprep.subr.mxu0 0.0
  %753 = vmatpush1.msra.mxu0 0.0
  %754 = vmatprep.subr.mxu0 0.0
  %755 = vmatpush1.msra.mxu0 0.0
  %756 = vmatprep.subr.mxu0 0.0
  %757 = vmatpush1.msra.mxu0 0.0
  %758 = vmatprep.subr.mxu0 0.0
  %759 = vmatpush1.msra.mxu0 0.0
  %760 = vmatprep.subr.mxu0 0.0
  %761 = vmatpush1.msra.mxu0 0.0
  %762 = vmatprep.subr.mxu0 0.0
  %763 = vmatpush1.msra.mxu0 0.0
  %764 = vmatprep.subr.mxu0 0.0
  %765 = vmatpush1.msra.mxu0 0.0
  %766 = vmatprep.subr.mxu0 0.0
  %767 = vmatpush1.msra.mxu0 0.0
  %768 = vmatprep.subr.mxu0 0.0
  %769 = vmatpush1.msra.mxu0 0.0
  %770 = vmatprep.subr.mxu0 0.0
  %771 = vmatpush1.msra.mxu0 0.0
  %772 = vmatprep.subr.mxu0 0.0
  %773 = vmatpush1.msra.mxu0 0.0
  %774 = vmatprep.mubr.f32.mxu0 0.0
  %775 = vmatmul.mubr.f32.gmra.mrb[0].mxu0 %v681
  %v776 = vpop.f32.mrb[0].mxu0
  %v777 = vadd.f32 0.0, %v776
  %v778 = vpop.f32.mrb[0].mxu0
  %779 = vmatprep.mubr.f32.mxu0 0.0
  %780 = vmatmul.mubr.f32.gmra.mrb[0].mxu0 %v686
  %v781 = vpop.f32.mrb[0].mxu0
  %v782 = vadd.f32 0.0, %v781
  %v783 = vpop.f32.mrb[0].mxu0
  %784 = vmatprep.mubr.f32.mxu0 0.0
  %785 = vmatmul.mubr.f32.gmra.mrb[0].mxu0 %v691
  %v786 = vpop.f32.mrb[0].mxu0
  %v787 = vadd.f32 0.0, %v786
  %v788 = vpop.f32.mrb[0].mxu0
  %789 = vdwg.mxu0
  %v790 = vld [vmem:[%s13] sm:$0xff]
  %v791 = vld [vmem:[%s13 + $0x8] sm:$0xff]
  %v792 = vld [vmem:[%s13 + $0x10] sm:$0xff]
  %v793 = vld [vmem:[%s13 + $0x18] sm:$0xff]
  %v794 = vld [vmem:[%s13 + $0x20] sm:$0xff]
  %v795 = vld [vmem:[%s13 + $0x28] sm:$0xff]
  %v796 = vld [vmem:[%s13 + $0x30] sm:$0xff]
  %v797 = vld [vmem:[%s13 + $0x38] sm:$0xff]
  %v798 = vld [vmem:[%s13 + $0x40] sm:$0xff]
  %v799 = vld [vmem:[%s13 + $0x48] sm:$0xff]
  %v800 = vld [vmem:[%s13 + $0x50] sm:$0xff]
  %v801 = vld [vmem:[%s13 + $0x58] sm:$0xff]
  %v802 = vld [vmem:[%s13 + $0x60] sm:$0xff]
  %v803 = vld [vmem:[%s13 + $0x68] sm:$0xff]
  %v804 = vld [vmem:[%s13 + $0x70] sm:$0xff]
  %v805 = vld [vmem:[%s13 + $0x78] sm:$0xff]
  %806 = vmatprep.subr.mxu0 0.0
  %807 = vmatpush1.msra.mxu0 %v790
  %808 = vmatprep.subr.mxu0 0.0
  %809 = vmatpush1.msra.mxu0 %v791
  %810 = vmatprep.subr.mxu0 0.0
  %811 = vmatpush1.msra.mxu0 %v792
  %812 = vmatprep.subr.mxu0 0.0
  %813 = vmatpush1.msra.mxu0 %v793
  %814 = vmatprep.subr.mxu0 0.0
  %815 = vmatpush1.msra.mxu0 %v794
  %816 = vmatprep.subr.mxu0 0.0
  %817 = vmatpush1.msra.mxu0 %v795
  %818 = vmatprep.subr.mxu0 0.0
  %819 = vmatpush1.msra.mxu0 %v796
  %820 = vmatprep.subr.mxu0 0.0
  %821 = vmatpush1.msra.mxu0 %v797
  %822 = vmatprep.subr.mxu0 0.0
  %823 = vmatpush1.msra.mxu0 %v798
  %824 = vmatprep.subr.mxu0 0.0
  %825 = vmatpush1.msra.mxu0 %v799
  %826 = vmatprep.subr.mxu0 0.0
  %827 = vmatpush1.msra.mxu0 %v800
  %828 = vmatprep.subr.mxu0 0.0
  %829 = vmatpush1.msra.mxu0 %v801
  %830 = vmatprep.subr.mxu0 0.0
  %831 = vmatpush1.msra.mxu0 %v802
  %832 = vmatprep.subr.mxu0 0.0
  %833 = vmatpush1.msra.mxu0 %v803
  %834 = vmatprep.subr.mxu0 0.0
  %835 = vmatpush1.msra.mxu0 %v804
  %836 = vmatprep.subr.mxu0 0.0
  %837 = vmatpush1.msra.mxu0 %v805
  %838 = vmatprep.subr.mxu0 0.0
  %839 = vmatpush1.msra.mxu0 0.0
  %840 = vmatprep.subr.mxu0 0.0
  %841 = vmatpush1.msra.mxu0 0.0
  %842 = vmatprep.subr.mxu0 0.0
  %843 = vmatpush1.msra.mxu0 0.0
  %844 = vmatprep.subr.mxu0 0.0
  %845 = vmatpush1.msra.mxu0 0.0
  %846 = vmatprep.subr.mxu0 0.0
  %847 = vmatpush1.msra.mxu0 0.0
  %848 = vmatprep.subr.mxu0 0.0
  %849 = vmatpush1.msra.mxu0 0.0
  %850 = vmatprep.subr.mxu0 0.0
  %851 = vmatpush1.msra.mxu0 0.0
  %852 = vmatprep.subr.mxu0 0.0
  %853 = vmatpush1.msra.mxu0 0.0
  %854 = vmatprep.subr.mxu0 0.0
  %855 = vmatpush1.msra.mxu0 0.0
  %856 = vmatprep.subr.mxu0 0.0
  %857 = vmatpush1.msra.mxu0 0.0
  %858 = vmatprep.subr.mxu0 0.0
  %859 = vmatpush1.msra.mxu0 0.0
  %860 = vmatprep.subr.mxu0 0.0
  %861 = vmatpush1.msra.mxu0 0.0
  %862 = vmatprep.subr.mxu0 0.0
  %863 = vmatpush1.msra.mxu0 0.0
  %864 = vmatprep.subr.mxu0 0.0
  %865 = vmatpush1.msra.mxu0 0.0
  %866 = vmatprep.subr.mxu0 0.0
  %867 = vmatpush1.msra.mxu0 0.0
  %868 = vmatprep.subr.mxu0 0.0
  %869 = vmatpush1.msra.mxu0 0.0
  %870 = vmatprep.mubr.f32.mxu0 0.0
  %871 = vmatmul.mubr.f32.gmra.mrb[0].mxu0 %v681
  %v872 = vpop.f32.mrb[0].mxu0
  %v873 = vadd.f32 0.0, %v872
  %v874 = vpop.f32.mrb[0].mxu0
  %875 = vmatprep.mubr.f32.mxu0 0.0
  %876 = vmatmul.mubr.f32.gmra.mrb[0].mxu0 %v686
  %v877 = vpop.f32.mrb[0].mxu0
  %v878 = vadd.f32 0.0, %v877
  %v879 = vpop.f32.mrb[0].mxu0
  %880 = vmatprep.mubr.f32.mxu0 0.0
  %881 = vmatmul.mubr.f32.gmra.mrb[0].mxu0 %v691
  %v882 = vpop.f32.mrb[0].mxu0
  %v883 = vadd.f32 0.0, %v882
  %v884 = vpop.f32.mrb[0].mxu0
  %885 = vdwg.mxu0
  %v886 = vmax.f32 %v777, %v873
  %v887 = vmax.f32 %v782, %v878
  %v888 = vmax.f32 %v787, %v883
  %889 = vst.msk [vmem:[#allocation6 + $0x1] sm:$0xff] %vm131, %v886
  %890 = vst.msk [vmem:[#allocation6 + $0x9] sm:$0xff] %vm131, %v887
  %vm891 = vcmask 517120
  %892 = vst.msk [vmem:[#allocation6 + $0x11] sm:$0x3] %vm891, %v888
  %v893 = vld [vmem:[#allocation6] sm:$0xff]
  %v894 = vld [vmem:[#allocation6 + $0x8] sm:$0xff]
  %v895 = vld [vmem:[#allocation6 + $0x10] sm:$0x3]
  %v896 = vld [vmem:[%s29] sm:$0xff]
  %v897 = vld [vmem:[%s29 + $0x8] sm:$0xff]
  %v898 = vld [vmem:[%s29 + $0x10] sm:$0xff]
  %v899 = vld [vmem:[%s29 + $0x18] sm:$0xff]
  %v900 = vld [vmem:[%s29 + $0x20] sm:$0xff]
  %v901 = vld [vmem:[%s29 + $0x28] sm:$0xff]
  %v902 = vld [vmem:[%s29 + $0x30] sm:$0xff]
  %v903 = vld [vmem:[%s29 + $0x38] sm:$0xff]
  %v904 = vld [vmem:[#allocation6 + $0x1] sm:$0xff]
  %v905 = vld [vmem:[#allocation6 + $0x9] sm:$0xff]
  %v906 = vld [vmem:[#allocation6 + $0x11] sm:$0x3]
  %s907 = scalar_lea.vmem %s29, 64
  %v908 = vld [vmem:[%s907] sm:$0xff]
  %v909 = vld [vmem:[%s907 + $0x8] sm:$0xff]
  %v910 = vld [vmem:[%s907 + $0x10] sm:$0xff]
  %v911 = vld [vmem:[%s907 + $0x18] sm:$0xff]
  %v912 = vld [vmem:[%s907 + $0x20] sm:$0xff]
  %v913 = vld [vmem:[%s907 + $0x28] sm:$0xff]
  %v914 = vld [vmem:[%s907 + $0x30] sm:$0xff]
  %v915 = vld [vmem:[%s907 + $0x38] sm:$0xff]
  %v917 = vsel %vm131, %v904, 0
  %v920 = vsel %vm131, %v905, 0
  %v923 = vsel %vm131, %v906, 0
  %925 = vmatprep.subr.mxu0 0.0
  %926 = vmatpush1.msra.mxu0 %v908
  %927 = vmatprep.subr.mxu0 0.0
  %928 = vmatpush1.msra.mxu0 %v909
  %929 = vmatprep.subr.mxu0 0.0
  %930 = vmatpush1.msra.mxu0 %v910
  %931 = vmatprep.subr.mxu0 0.0
  %932 = vmatpush1.msra.mxu0 %v911
  %933 = vmatprep.subr.mxu0 0.0
  %934 = vmatpush1.msra.mxu0 %v912
  %935 = vmatprep.subr.mxu0 0.0
  %936 = vmatpush1.msra.mxu0 %v913
  %937 = vmatprep.subr.mxu0 0.0
  %938 = vmatpush1.msra.mxu0 %v914
  %939 = vmatprep.subr.mxu0 0.0
  %940 = vmatpush1.msra.mxu0 %v915
  %941 = vmatprep.subr.mxu0 0.0
  %942 = vmatpush1.msra.mxu0 0.0
  %943 = vmatprep.subr.mxu0 0.0
  %944 = vmatpush1.msra.mxu0 0.0
  %945 = vmatprep.subr.mxu0 0.0
  %946 = vmatpush1.msra.mxu0 0.0
  %947 = vmatprep.subr.mxu0 0.0
  %948 = vmatpush1.msra.mxu0 0.0
  %949 = vmatprep.subr.mxu0 0.0
  %950 = vmatpush1.msra.mxu0 0.0
  %951 = vmatprep.subr.mxu0 0.0
  %952 = vmatpush1.msra.mxu0 0.0
  %953 = vmatprep.subr.mxu0 0.0
  %954 = vmatpush1.msra.mxu0 0.0
  %955 = vmatprep.subr.mxu0 0.0
  %956 = vmatpush1.msra.mxu0 0.0
  %957 = vmatprep.subr.mxu0 0.0
  %958 = vmatpush1.msra.mxu0 0.0
  %959 = vmatprep.subr.mxu0 0.0
  %960 = vmatpush1.msra.mxu0 0.0
  %961 = vmatprep.subr.mxu0 0.0
  %962 = vmatpush1.msra.mxu0 0.0
  %963 = vmatprep.subr.mxu0 0.0
  %964 = vmatpush1.msra.mxu0 0.0
  %965 = vmatprep.subr.mxu0 0.0
  %966 = vmatpush1.msra.mxu0 0.0
  %967 = vmatprep.subr.mxu0 0.0
  %968 = vmatpush1.msra.mxu0 0.0
  %969 = vmatprep.subr.mxu0 0.0
  %970 = vmatpush1.msra.mxu0 0.0
  %971 = vmatprep.subr.mxu0 0.0
  %972 = vmatpush1.msra.mxu0 0.0
  %973 = vmatprep.subr.mxu0 0.0
  %974 = vmatpush1.msra.mxu0 0.0
  %975 = vmatprep.subr.mxu0 0.0
  %976 = vmatpush1.msra.mxu0 0.0
  %977 = vmatprep.subr.mxu0 0.0
  %978 = vmatpush1.msra.mxu0 0.0
  %979 = vmatprep.subr.mxu0 0.0
  %980 = vmatpush1.msra.mxu0 0.0
  %981 = vmatprep.subr.mxu0 0.0
  %982 = vmatpush1.msra.mxu0 0.0
  %983 = vmatprep.subr.mxu0 0.0
  %984 = vmatpush1.msra.mxu0 0.0
  %985 = vmatprep.subr.mxu0 0.0
  %986 = vmatpush1.msra.mxu0 0.0
  %987 = vmatprep.subr.mxu0 0.0
  %988 = vmatpush1.msra.mxu0 0.0
  %989 = vmatprep.mubr.f32.mxu0 0.0
  %990 = vmatmul.mubr.f32.gmra.mrb[0].mxu0 %v917
  %v991 = vpop.f32.mrb[0].mxu0
  %v992 = vadd.f32 0.0, %v991
  %v993 = vpop.f32.mrb[0].mxu0
  %994 = vmatprep.mubr.f32.mxu0 0.0
  %995 = vmatmul.mubr.f32.gmra.mrb[0].mxu0 %v920
  %v996 = vpop.f32.mrb[0].mxu0
  %v997 = vadd.f32 0.0, %v996
  %v998 = vpop.f32.mrb[0].mxu0
  %999 = vmatprep.mubr.f32.mxu0 0.0
  %1000 = vmatmul.mubr.f32.gmra.mrb[0].mxu0 %v923
  %v1001 = vpop.f32.mrb[0].mxu0
  %v1002 = vadd.f32 0.0, %v1001
  %v1003 = vpop.f32.mrb[0].mxu0
  %1004 = vdwg.mxu0
  %v1006 = vsel %vm131, %v893, 0
  %v1009 = vsel %vm131, %v894, 0
  %v1012 = vsel %vm131, %v895, 0
  %1014 = vmatprep.subr.mxu0 0.0
  %1015 = vmatpush1.msra.mxu0 %v896
  %1016 = vmatprep.subr.mxu0 0.0
  %1017 = vmatpush1.msra.mxu0 %v897
  %1018 = vmatprep.subr.mxu0 0.0
  %1019 = vmatpush1.msra.mxu0 %v898
  %1020 = vmatprep.subr.mxu0 0.0
  %1021 = vmatpush1.msra.mxu0 %v899
  %1022 = vmatprep.subr.mxu0 0.0
  %1023 = vmatpush1.msra.mxu0 %v900
  %1024 = vmatprep.subr.mxu0 0.0
  %1025 = vmatpush1.msra.mxu0 %v901
  %1026 = vmatprep.subr.mxu0 0.0
  %1027 = vmatpush1.msra.mxu0 %v902
  %1028 = vmatprep.subr.mxu0 0.0
  %1029 = vmatpush1.msra.mxu0 %v903
  %1030 = vmatprep.subr.mxu0 0.0
  %1031 = vmatpush1.msra.mxu0 0.0
  %1032 = vmatprep.subr.mxu0 0.0
  %1033 = vmatpush1.msra.mxu0 0.0
  %1034 = vmatprep.subr.mxu0 0.0
  %1035 = vmatpush1.msra.mxu0 0.0
  %1036 = vmatprep.subr.mxu0 0.0
  %1037 = vmatpush1.msra.mxu0 0.0
  %1038 = vmatprep.subr.mxu0 0.0
  %1039 = vmatpush1.msra.mxu0 0.0
  %1040 = vmatprep.subr.mxu0 0.0
  %1041 = vmatpush1.msra.mxu0 0.0
  %1042 = vmatprep.subr.mxu0 0.0
  %1043 = vmatpush1.msra.mxu0 0.0
  %1044 = vmatprep.subr.mxu0 0.0
  %1045 = vmatpush1.msra.mxu0 0.0
  %1046 = vmatprep.subr.mxu0 0.0
  %1047 = vmatpush1.msra.mxu0 0.0
  %1048 = vmatprep.subr.mxu0 0.0
  %1049 = vmatpush1.msra.mxu0 0.0
  %1050 = vmatprep.subr.mxu0 0.0
  %1051 = vmatpush1.msra.mxu0 0.0
  %1052 = vmatprep.subr.mxu0 0.0
  %1053 = vmatpush1.msra.mxu0 0.0
  %1054 = vmatprep.subr.mxu0 0.0
  %1055 = vmatpush1.msra.mxu0 0.0
  %1056 = vmatprep.subr.mxu0 0.0
  %1057 = vmatpush1.msra.mxu0 0.0
  %1058 = vmatprep.subr.mxu0 0.0
  %1059 = vmatpush1.msra.mxu0 0.0
  %1060 = vmatprep.subr.mxu0 0.0
  %1061 = vmatpush1.msra.mxu0 0.0
  %1062 = vmatprep.subr.mxu0 0.0
  %1063 = vmatpush1.msra.mxu0 0.0
  %1064 = vmatprep.subr.mxu0 0.0
  %1065 = vmatpush1.msra.mxu0 0.0
  %1066 = vmatprep.subr.mxu0 0.0
  %1067 = vmatpush1.msra.mxu0 0.0
  %1068 = vmatprep.subr.mxu0 0.0
  %1069 = vmatpush1.msra.mxu0 0.0
  %1070 = vmatprep.subr.mxu0 0.0
  %1071 = vmatpush1.msra.mxu0 0.0
  %1072 = vmatprep.subr.mxu0 0.0
  %1073 = vmatpush1.msra.mxu0 0.0
  %1074 = vmatprep.subr.mxu0 0.0
  %1075 = vmatpush1.msra.mxu0 0.0
  %1076 = vmatprep.subr.mxu0 0.0
  %1077 = vmatpush1.msra.mxu0 0.0
  %1078 = vmatprep.mubr.f32.mxu0 0.0
  %1079 = vmatmul.mubr.f32.gmra.mrb[0].mxu0 %v1006
  %v1080 = vpop.f32.mrb[0].mxu0
  %v1081 = vadd.f32 %v992, %v1080
  %v1082 = vpop.f32.mrb[0].mxu0
  %1083 = vmatprep.mubr.f32.mxu0 0.0
  %1084 = vmatmul.mubr.f32.gmra.mrb[0].mxu0 %v1009
  %v1085 = vpop.f32.mrb[0].mxu0
  %v1086 = vadd.f32 %v997, %v1085
  %v1087 = vpop.f32.mrb[0].mxu0
  %1088 = vmatprep.mubr.f32.mxu0 0.0
  %1089 = vmatmul.mubr.f32.gmra.mrb[0].mxu0 %v1012
  %v1090 = vpop.f32.mrb[0].mxu0
  %v1091 = vadd.f32 %v1002, %v1090
  %v1092 = vpop.f32.mrb[0].mxu0
  %1093 = vdwg.mxu0
  %v1094 = vld [vmem:[#allocation6 + $0x2] sm:$0xff]
  %v1095 = vld [vmem:[#allocation6 + $0xa] sm:$0xff]
  %v1096 = vld [vmem:[#allocation6 + $0x12] sm:$0x3]
  %s1097 = scalar_lea.vmem %s29, 128
  %v1098 = vld [vmem:[%s1097] sm:$0xff]
  %v1099 = vld [vmem:[%s1097 + $0x8] sm:$0xff]
  %v1100 = vld [vmem:[%s1097 + $0x10] sm:$0xff]
  %v1101 = vld [vmem:[%s1097 + $0x18] sm:$0xff]
  %v1102 = vld [vmem:[%s1097 + $0x20] sm:$0xff]
  %v1103 = vld [vmem:[%s1097 + $0x28] sm:$0xff]
  %v1104 = vld [vmem:[%s1097 + $0x30] sm:$0xff]
  %v1105 = vld [vmem:[%s1097 + $0x38] sm:$0xff]
  %v1107 = vsel %vm131, %v1094, 0
  %v1110 = vsel %vm131, %v1095, 0
  %v1113 = vsel %vm131, %v1096, 0
  %1115 = vmatprep.subr.mxu0 0.0
  %1116 = vmatpush1.msra.mxu0 %v1098
  %1117 = vmatprep.subr.mxu0 0.0
  %1118 = vmatpush1.msra.mxu0 %v1099
  %1119 = vmatprep.subr.mxu0 0.0
  %1120 = vmatpush1.msra.mxu0 %v1100
  %1121 = vmatprep.subr.mxu0 0.0
  %1122 = vmatpush1.msra.mxu0 %v1101
  %1123 = vmatprep.subr.mxu0 0.0
  %1124 = vmatpush1.msra.mxu0 %v1102
  %1125 = vmatprep.subr.mxu0 0.0
  %1126 = vmatpush1.msra.mxu0 %v1103
  %1127 = vmatprep.subr.mxu0 0.0
  %1128 = vmatpush1.msra.mxu0 %v1104
  %1129 = vmatprep.subr.mxu0 0.0
  %1130 = vmatpush1.msra.mxu0 %v1105
  %1131 = vmatprep.subr.mxu0 0.0
  %1132 = vmatpush1.msra.mxu0 0.0
  %1133 = vmatprep.subr.mxu0 0.0
  %1134 = vmatpush1.msra.mxu0 0.0
  %1135 = vmatprep.subr.mxu0 0.0
  %1136 = vmatpush1.msra.mxu0 0.0
  %1137 = vmatprep.subr.mxu0 0.0
  %1138 = vmatpush1.msra.mxu0 0.0
  %1139 = vmatprep.subr.mxu0 0.0
  %1140 = vmatpush1.msra.mxu0 0.0
  %1141 = vmatprep.subr.mxu0 0.0
  %1142 = vmatpush1.msra.mxu0 0.0
  %1143 = vmatprep.subr.mxu0 0.0
  %1144 = vmatpush1.msra.mxu0 0.0
  %1145 = vmatprep.subr.mxu0 0.0
  %1146 = vmatpush1.msra.mxu0 0.0
  %1147 = vmatprep.subr.mxu0 0.0
  %1148 = vmatpush1.msra.mxu0 0.0
  %1149 = vmatprep.subr.mxu0 0.0
  %1150 = vmatpush1.msra.mxu0 0.0
  %1151 = vmatprep.subr.mxu0 0.0
  %1152 = vmatpush1.msra.mxu0 0.0
  %1153 = vmatprep.subr.mxu0 0.0
  %1154 = vmatpush1.msra.mxu0 0.0
  %1155 = vmatprep.subr.mxu0 0.0
  %1156 = vmatpush1.msra.mxu0 0.0
  %1157 = vmatprep.subr.mxu0 0.0
  %1158 = vmatpush1.msra.mxu0 0.0
  %1159 = vmatprep.subr.mxu0 0.0
  %1160 = vmatpush1.msra.mxu0 0.0
  %1161 = vmatprep.subr.mxu0 0.0
  %1162 = vmatpush1.msra.mxu0 0.0
  %1163 = vmatprep.subr.mxu0 0.0
  %1164 = vmatpush1.msra.mxu0 0.0
  %1165 = vmatprep.subr.mxu0 0.0
  %1166 = vmatpush1.msra.mxu0 0.0
  %1167 = vmatprep.subr.mxu0 0.0
  %1168 = vmatpush1.msra.mxu0 0.0
  %1169 = vmatprep.subr.mxu0 0.0
  %1170 = vmatpush1.msra.mxu0 0.0
  %1171 = vmatprep.subr.mxu0 0.0
  %1172 = vmatpush1.msra.mxu0 0.0
  %1173 = vmatprep.subr.mxu0 0.0
  %1174 = vmatpush1.msra.mxu0 0.0
  %1175 = vmatprep.subr.mxu0 0.0
  %1176 = vmatpush1.msra.mxu0 0.0
  %1177 = vmatprep.subr.mxu0 0.0
  %1178 = vmatpush1.msra.mxu0 0.0
  %1179 = vmatprep.mubr.f32.mxu0 0.0
  %1180 = vmatmul.mubr.f32.gmra.mrb[0].mxu0 %v1107
  %v1181 = vpop.f32.mrb[0].mxu0
  %v1182 = vadd.f32 0.0, %v1181
  %v1183 = vpop.f32.mrb[0].mxu0
  %1184 = vmatprep.mubr.f32.mxu0 0.0
  %1185 = vmatmul.mubr.f32.gmra.mrb[0].mxu0 %v1110
  %v1186 = vpop.f32.mrb[0].mxu0
  %v1187 = vadd.f32 0.0, %v1186
  %v1188 = vpop.f32.mrb[0].mxu0
  %1189 = vmatprep.mubr.f32.mxu0 0.0
  %1190 = vmatmul.mubr.f32.gmra.mrb[0].mxu0 %v1113
  %v1191 = vpop.f32.mrb[0].mxu0
  %v1192 = vadd.f32 0.0, %v1191
  %v1193 = vpop.f32.mrb[0].mxu0
  %1194 = vdwg.mxu0
  %v1195 = vadd.f32 %v1081, %v1182
  %v1196 = vadd.f32 %v1086, %v1187
  %v1197 = vadd.f32 %v1091, %v1192
  %v1198 = vld [vmem:[%s31] sm:$0x1]
  %v1200 = vlaneseq
  %v1201 = vshrl.u32 %v1200, 7
  %v1202 = vsub.s32 0, %v1201
  %v1203 = vrot.slane %v1198, %v1202
  %v1205 = vadd.f32 %v1195, %v1203
  %v1206 = vadd.f32 %v1196, %v1203
  %v1207 = vadd.f32 %v1197, %v1203
  %vm1208 = vcmp.ge.f32.partialorder %v1205, 0.0
  %vm1209 = vcmp.ge.f32.partialorder %v1206, 0.0
  %vm1210 = vcmp.ge.f32.partialorder %v1207, 0.0
  %v1211 = vmul.f32 %v1205, 0.2
  %v1212 = vmul.f32 %v1206, 0.2
  %v1213 = vmul.f32 %v1207, 0.2
  %v1214 = vsel %vm1208, %v1205, %v1211
  %v1215 = vsel %vm1209, %v1206, %v1212
  %v1216 = vsel %vm1210, %v1207, %v1213
  %v1217 = vld [vmem:[%s5] sm:$0xff]
  %v1218 = vld [vmem:[%s5 + $0x8] sm:$0xff]
  %v1219 = vld [vmem:[%s5 + $0x10] sm:$0x3]
  %1221 = vset.pattern.permute.xlu0 0
  %1222 = vperm.xlu0 %1221, %v1217
  %v1223 = vpop.permute.xlu0 %1222
  %1226 = vset.pattern.permute.xlu0 0
  %1227 = vperm.xlu0 %1226, %v1218
  %v1228 = vpop.permute.xlu0 %1227
  %1231 = vset.pattern.permute.xlu0 0
  %1232 = vperm.xlu0 %1231, %v1219
  %v1233 = vpop.permute.xlu0 %1232
  %v1235 = vmul.f32 %v1214, %v1223
  %v1236 = vmul.f32 %v1215, %v1228
  %v1237 = vmul.f32 %v1216, %v1233
  %1238 = vst [vmem:[#allocation7 + $0x1] sm:$0xff] %v1235
  %1239 = vst [vmem:[#allocation7 + $0x9] sm:$0xff] %v1236
  %1240 = vst [vmem:[#allocation7 + $0x11] sm:$0x3] %v1237
  %v1241 = vld [vmem:[#allocation7 + $0x2] sm:$0xff]
  %v1242 = vld [vmem:[#allocation7 + $0xa] sm:$0xff]
  %v1243 = vld [vmem:[#allocation7 + $0x12] sm:$0x3]
  %v1244 = vmax.f32 %v1235, %v1241
  %v1245 = vmax.f32 %v1236, %v1242
  %v1246 = vmax.f32 %v1237, %v1243
  %v1247 = vld [vmem:[%s15] sm:$0xff]
  %v1248 = vld [vmem:[%s15 + $0x8] sm:$0x3]
  %vm1249 = vcmask 146432
  %v1251 = vsel %vm1249, %v1247, 0
  %v1254 = vsel %vm1249, %v1248, 0
  %v1257 = vsel %vm610, %v1246, 0
  %1259 = vmatprep.subr.mxu0 0.0
  %1260 = vmatpush1.msra.mxu0 %v1244
  %1261 = vmatprep.subr.mxu0 0.0
  %1262 = vmatpush1.msra.mxu0 %v1245
  %1263 = vmatprep.subr.mxu0 0.0
  %1264 = vmatpush1.msra.mxu0 %v1257
  %1265 = vmatprep.subr.mxu0 0.0
  %1266 = vmatpush1.msra.mxu0 0.0
  %1267 = vmatprep.subr.mxu0 0.0
  %1268 = vmatpush1.msra.mxu0 0.0
  %1269 = vmatprep.subr.mxu0 0.0
  %1270 = vmatpush1.msra.mxu0 0.0
  %1271 = vmatprep.subr.mxu0 0.0
  %1272 = vmatpush1.msra.mxu0 0.0
  %1273 = vmatprep.subr.mxu0 0.0
  %1274 = vmatpush1.msra.mxu0 0.0
  %1275 = vmatprep.subr.mxu0 0.0
  %1276 = vmatpush1.msra.mxu0 0.0
  %1277 = vmatprep.subr.mxu0 0.0
  %1278 = vmatpush1.msra.mxu0 0.0
  %1279 = vmatprep.subr.mxu0 0.0
  %1280 = vmatpush1.msra.mxu0 0.0
  %1281 = vmatprep.subr.mxu0 0.0
  %1282 = vmatpush1.msra.mxu0 0.0
  %1283 = vmatprep.subr.mxu0 0.0
  %1284 = vmatpush1.msra.mxu0 0.0
  %1285 = vmatprep.subr.mxu0 0.0
  %1286 = vmatpush1.msra.mxu0 0.0
  %1287 = vmatprep.subr.mxu0 0.0
  %1288 = vmatpush1.msra.mxu0 0.0
  %1289 = vmatprep.subr.mxu0 0.0
  %1290 = vmatpush1.msra.mxu0 0.0
  %1291 = vmatprep.subr.mxu0 0.0
  %1292 = vmatpush1.msra.mxu0 0.0
  %1293 = vmatprep.subr.mxu0 0.0
  %1294 = vmatpush1.msra.mxu0 0.0
  %1295 = vmatprep.subr.mxu0 0.0
  %1296 = vmatpush1.msra.mxu0 0.0
  %1297 = vmatprep.subr.mxu0 0.0
  %1298 = vmatpush1.msra.mxu0 0.0
  %1299 = vmatprep.subr.mxu0 0.0
  %1300 = vmatpush1.msra.mxu0 0.0
  %1301 = vmatprep.subr.mxu0 0.0
  %1302 = vmatpush1.msra.mxu0 0.0
  %1303 = vmatprep.subr.mxu0 0.0
  %1304 = vmatpush1.msra.mxu0 0.0
  %1305 = vmatprep.subr.mxu0 0.0
  %1306 = vmatpush1.msra.mxu0 0.0
  %1307 = vmatprep.subr.mxu0 0.0
  %1308 = vmatpush1.msra.mxu0 0.0
  %1309 = vmatprep.subr.mxu0 0.0
  %1310 = vmatpush1.msra.mxu0 0.0
  %1311 = vmatprep.subr.mxu0 0.0
  %1312 = vmatpush1.msra.mxu0 0.0
  %1313 = vmatprep.subr.mxu0 0.0
  %1314 = vmatpush1.msra.mxu0 0.0
  %1315 = vmatprep.subr.mxu0 0.0
  %1316 = vmatpush1.msra.mxu0 0.0
  %1317 = vmatprep.subr.mxu0 0.0
  %1318 = vmatpush1.msra.mxu0 0.0
  %1319 = vmatprep.subr.mxu0 0.0
  %1320 = vmatpush1.msra.mxu0 0.0
  %1321 = vmatprep.subr.mxu0 0.0
  %1322 = vmatpush1.msra.mxu0 0.0
  %1323 = vmatprep.mubr.f32.mxu0 0.0
  %1324 = vmatmul.mubr.f32.gmra.mrb[0].mxu0 %v1251
  %v1325 = vpop.f32.mrb[0].mxu0
  %v1326 = vadd.f32 0.0, %v1325
  %v1327 = vpop.f32.mrb[0].mxu0
  %1328 = vmatprep.mubr.f32.mxu0 0.0
  %1329 = vmatmul.mubr.f32.gmra.mrb[0].mxu0 %v1254
  %v1330 = vpop.f32.mrb[0].mxu0
  %v1331 = vadd.f32 0.0, %v1330
  %v1332 = vpop.f32.mrb[0].mxu0
  %1333 = vdwg.mxu0
  %v1334 = vld [vmem:[%s17] sm:$0xff]
  %v1335 = vld [vmem:[%s17 + $0x8] sm:$0xff]
  %v1336 = vld [vmem:[%s17 + $0x10] sm:$0xff]
  %v1337 = vld [vmem:[%s17 + $0x18] sm:$0xff]
  %v1338 = vld [vmem:[%s17 + $0x20] sm:$0xff]
  %v1339 = vld [vmem:[%s17 + $0x28] sm:$0xff]
  %v1340 = vld [vmem:[%s17 + $0x30] sm:$0xff]
  %v1341 = vld [vmem:[%s17 + $0x38] sm:$0xff]
  %v1342 = vld [vmem:[%s17 + $0x40] sm:$0xff]
  %v1343 = vld [vmem:[%s17 + $0x48] sm:$0xff]
  %v1344 = vld [vmem:[%s17 + $0x50] sm:$0xff]
  %v1345 = vld [vmem:[%s17 + $0x58] sm:$0xff]
  %v1346 = vld [vmem:[%s17 + $0x60] sm:$0xff]
  %v1347 = vld [vmem:[%s17 + $0x68] sm:$0xff]
  %v1348 = vld [vmem:[%s17 + $0x70] sm:$0xff]
  %v1349 = vld [vmem:[%s17 + $0x78] sm:$0xff]
  %1350 = vmatprep.subr.mxu0 0.0
  %1351 = vmatpush1.msra.mxu0 %v1334
  %1352 = vmatprep.subr.mxu0 0.0
  %1353 = vmatpush1.msra.mxu0 %v1335
  %1354 = vmatprep.subr.mxu0 0.0
  %1355 = vmatpush1.msra.mxu0 %v1336
  %1356 = vmatprep.subr.mxu0 0.0
  %1357 = vmatpush1.msra.mxu0 %v1337
  %1358 = vmatprep.subr.mxu0 0.0
  %1359 = vmatpush1.msra.mxu0 %v1338
  %1360 = vmatprep.subr.mxu0 0.0
  %1361 = vmatpush1.msra.mxu0 %v1339
  %1362 = vmatprep.subr.mxu0 0.0
  %1363 = vmatpush1.msra.mxu0 %v1340
  %1364 = vmatprep.subr.mxu0 0.0
  %1365 = vmatpush1.msra.mxu0 %v1341
  %1366 = vmatprep.subr.mxu0 0.0
  %1367 = vmatpush1.msra.mxu0 %v1342
  %1368 = vmatprep.subr.mxu0 0.0
  %1369 = vmatpush1.msra.mxu0 %v1343
  %1370 = vmatprep.subr.mxu0 0.0
  %1371 = vmatpush1.msra.mxu0 %v1344
  %1372 = vmatprep.subr.mxu0 0.0
  %1373 = vmatpush1.msra.mxu0 %v1345
  %1374 = vmatprep.subr.mxu0 0.0
  %1375 = vmatpush1.msra.mxu0 %v1346
  %1376 = vmatprep.subr.mxu0 0.0
  %1377 = vmatpush1.msra.mxu0 %v1347
  %1378 = vmatprep.subr.mxu0 0.0
  %1379 = vmatpush1.msra.mxu0 %v1348
  %1380 = vmatprep.subr.mxu0 0.0
  %1381 = vmatpush1.msra.mxu0 %v1349
  %1382 = vmatprep.subr.mxu0 0.0
  %1383 = vmatpush1.msra.mxu0 0.0
  %1384 = vmatprep.subr.mxu0 0.0
  %1385 = vmatpush1.msra.mxu0 0.0
  %1386 = vmatprep.subr.mxu0 0.0
  %1387 = vmatpush1.msra.mxu0 0.0
  %1388 = vmatprep.subr.mxu0 0.0
  %1389 = vmatpush1.msra.mxu0 0.0
  %1390 = vmatprep.subr.mxu0 0.0
  %1391 = vmatpush1.msra.mxu0 0.0
  %1392 = vmatprep.subr.mxu0 0.0
  %1393 = vmatpush1.msra.mxu0 0.0
  %1394 = vmatprep.subr.mxu0 0.0
  %1395 = vmatpush1.msra.mxu0 0.0
  %1396 = vmatprep.subr.mxu0 0.0
  %1397 = vmatpush1.msra.mxu0 0.0
  %1398 = vmatprep.subr.mxu0 0.0
  %1399 = vmatpush1.msra.mxu0 0.0
  %1400 = vmatprep.subr.mxu0 0.0
  %1401 = vmatpush1.msra.mxu0 0.0
  %1402 = vmatprep.subr.mxu0 0.0
  %1403 = vmatpush1.msra.mxu0 0.0
  %1404 = vmatprep.subr.mxu0 0.0
  %1405 = vmatpush1.msra.mxu0 0.0
  %1406 = vmatprep.subr.mxu0 0.0
  %1407 = vmatpush1.msra.mxu0 0.0
  %1408 = vmatprep.subr.mxu0 0.0
  %1409 = vmatpush1.msra.mxu0 0.0
  %1410 = vmatprep.subr.mxu0 0.0
  %1411 = vmatpush1.msra.mxu0 0.0
  %1412 = vmatprep.subr.mxu0 0.0
  %1413 = vmatpush1.msra.mxu0 0.0
  %1414 = vmatprep.mubr.f32.mxu0 0.0
  %1415 = vmatmul.mubr.f32.gmra.mrb[0].mxu0 %v1326
  %v1416 = vpop.f32.mrb[0].mxu0
  %v1417 = vadd.f32 0.0, %v1416
  %v1418 = vpop.f32.mrb[0].mxu0
  %1419 = vmatprep.mubr.f32.mxu0 0.0
  %1420 = vmatmul.mubr.f32.gmra.mrb[0].mxu0 %v1331
  %v1421 = vpop.f32.mrb[0].mxu0
  %v1422 = vadd.f32 0.0, %v1421
  %v1423 = vpop.f32.mrb[0].mxu0
  %1424 = vdwg.mxu0
  %v1425 = vld [vmem:[%s19] sm:$0xff]
  %v1426 = vld [vmem:[%s19 + $0x8] sm:$0xff]
  %v1427 = vld [vmem:[%s19 + $0x10] sm:$0xff]
  %v1428 = vld [vmem:[%s19 + $0x18] sm:$0xff]
  %v1429 = vld [vmem:[%s19 + $0x20] sm:$0xff]
  %v1430 = vld [vmem:[%s19 + $0x28] sm:$0xff]
  %v1431 = vld [vmem:[%s19 + $0x30] sm:$0xff]
  %v1432 = vld [vmem:[%s19 + $0x38] sm:$0xff]
  %v1433 = vld [vmem:[%s19 + $0x40] sm:$0xff]
  %v1434 = vld [vmem:[%s19 + $0x48] sm:$0xff]
  %v1435 = vld [vmem:[%s19 + $0x50] sm:$0xff]
  %v1436 = vld [vmem:[%s19 + $0x58] sm:$0xff]
  %v1437 = vld [vmem:[%s19 + $0x60] sm:$0xff]
  %v1438 = vld [vmem:[%s19 + $0x68] sm:$0xff]
  %v1439 = vld [vmem:[%s19 + $0x70] sm:$0xff]
  %v1440 = vld [vmem:[%s19 + $0x78] sm:$0xff]
  %1441 = vmatprep.subr.mxu0 0.0
  %1442 = vmatpush1.msra.mxu0 %v1425
  %1443 = vmatprep.subr.mxu0 0.0
  %1444 = vmatpush1.msra.mxu0 %v1426
  %1445 = vmatprep.subr.mxu0 0.0
  %1446 = vmatpush1.msra.mxu0 %v1427
  %1447 = vmatprep.subr.mxu0 0.0
  %1448 = vmatpush1.msra.mxu0 %v1428
  %1449 = vmatprep.subr.mxu0 0.0
  %1450 = vmatpush1.msra.mxu0 %v1429
  %1451 = vmatprep.subr.mxu0 0.0
  %1452 = vmatpush1.msra.mxu0 %v1430
  %1453 = vmatprep.subr.mxu0 0.0
  %1454 = vmatpush1.msra.mxu0 %v1431
  %1455 = vmatprep.subr.mxu0 0.0
  %1456 = vmatpush1.msra.mxu0 %v1432
  %1457 = vmatprep.subr.mxu0 0.0
  %1458 = vmatpush1.msra.mxu0 %v1433
  %1459 = vmatprep.subr.mxu0 0.0
  %1460 = vmatpush1.msra.mxu0 %v1434
  %1461 = vmatprep.subr.mxu0 0.0
  %1462 = vmatpush1.msra.mxu0 %v1435
  %1463 = vmatprep.subr.mxu0 0.0
  %1464 = vmatpush1.msra.mxu0 %v1436
  %1465 = vmatprep.subr.mxu0 0.0
  %1466 = vmatpush1.msra.mxu0 %v1437
  %1467 = vmatprep.subr.mxu0 0.0
  %1468 = vmatpush1.msra.mxu0 %v1438
  %1469 = vmatprep.subr.mxu0 0.0
  %1470 = vmatpush1.msra.mxu0 %v1439
  %1471 = vmatprep.subr.mxu0 0.0
  %1472 = vmatpush1.msra.mxu0 %v1440
  %1473 = vmatprep.subr.mxu0 0.0
  %1474 = vmatpush1.msra.mxu0 0.0
  %1475 = vmatprep.subr.mxu0 0.0
  %1476 = vmatpush1.msra.mxu0 0.0
  %1477 = vmatprep.subr.mxu0 0.0
  %1478 = vmatpush1.msra.mxu0 0.0
  %1479 = vmatprep.subr.mxu0 0.0
  %1480 = vmatpush1.msra.mxu0 0.0
  %1481 = vmatprep.subr.mxu0 0.0
  %1482 = vmatpush1.msra.mxu0 0.0
  %1483 = vmatprep.subr.mxu0 0.0
  %1484 = vmatpush1.msra.mxu0 0.0
  %1485 = vmatprep.subr.mxu0 0.0
  %1486 = vmatpush1.msra.mxu0 0.0
  %1487 = vmatprep.subr.mxu0 0.0
  %1488 = vmatpush1.msra.mxu0 0.0
  %1489 = vmatprep.subr.mxu0 0.0
  %1490 = vmatpush1.msra.mxu0 0.0
  %1491 = vmatprep.subr.mxu0 0.0
  %1492 = vmatpush1.msra.mxu0 0.0
  %1493 = vmatprep.subr.mxu0 0.0
  %1494 = vmatpush1.msra.mxu0 0.0
  %1495 = vmatprep.subr.mxu0 0.0
  %1496 = vmatpush1.msra.mxu0 0.0
  %1497 = vmatprep.subr.mxu0 0.0
  %1498 = vmatpush1.msra.mxu0 0.0
  %1499 = vmatprep.subr.mxu0 0.0
  %1500 = vmatpush1.msra.mxu0 0.0
  %1501 = vmatprep.subr.mxu0 0.0
  %1502 = vmatpush1.msra.mxu0 0.0
  %1503 = vmatprep.subr.mxu0 0.0
  %1504 = vmatpush1.msra.mxu0 0.0
  %1505 = vmatprep.mubr.f32.mxu0 0.0
  %1506 = vmatmul.mubr.f32.gmra.mrb[0].mxu0 %v1326
  %v1507 = vpop.f32.mrb[0].mxu0
  %v1508 = vadd.f32 0.0, %v1507
  %v1509 = vpop.f32.mrb[0].mxu0
  %1510 = vmatprep.mubr.f32.mxu0 0.0
  %1511 = vmatmul.mubr.f32.gmra.mrb[0].mxu0 %v1331
  %v1512 = vpop.f32.mrb[0].mxu0
  %v1513 = vadd.f32 0.0, %v1512
  %v1514 = vpop.f32.mrb[0].mxu0
  %1515 = vdwg.mxu0
  %v1516 = vmax.f32 %v1417, %v1508
  %v1517 = vmax.f32 %v1422, %v1513
  %1518 = vst.msk [vmem:[#allocation9 + $0x1] sm:$0xff] %vm131, %v1516
  %1519 = vst.msk [vmem:[#allocation9 + $0x9] sm:$0x3] %vm891, %v1517
  %v1520 = vld [vmem:[#allocation9] sm:$0xff]
  %v1521 = vld [vmem:[#allocation9 + $0x8] sm:$0x3]
  %v1522 = vld [vmem:[%s33] sm:$0xff]
  %v1523 = vld [vmem:[%s33 + $0x8] sm:$0xff]
  %v1524 = vld [vmem:[%s33 + $0x10] sm:$0xff]
  %v1525 = vld [vmem:[%s33 + $0x18] sm:$0xff]
  %v1526 = vld [vmem:[%s33 + $0x20] sm:$0xff]
  %v1527 = vld [vmem:[%s33 + $0x28] sm:$0xff]
  %v1528 = vld [vmem:[%s33 + $0x30] sm:$0xff]
  %v1529 = vld [vmem:[%s33 + $0x38] sm:$0xff]
  %v1530 = vld [vmem:[#allocation9 + $0x1] sm:$0xff]
  %v1531 = vld [vmem:[#allocation9 + $0x9] sm:$0x3]
  %s1532 = scalar_lea.vmem %s33, 64
  %v1533 = vld [vmem:[%s1532] sm:$0xff]
  %v1534 = vld [vmem:[%s1532 + $0x8] sm:$0xff]
  %v1535 = vld [vmem:[%s1532 + $0x10] sm:$0xff]
  %v1536 = vld [vmem:[%s1532 + $0x18] sm:$0xff]
  %v1537 = vld [vmem:[%s1532 + $0x20] sm:$0xff]
  %v1538 = vld [vmem:[%s1532 + $0x28] sm:$0xff]
  %v1539 = vld [vmem:[%s1532 + $0x30] sm:$0xff]
  %v1540 = vld [vmem:[%s1532 + $0x38] sm:$0xff]
  %v1542 = vsel %vm131, %v1530, 0
  %v1545 = vsel %vm131, %v1531, 0
  %1547 = vmatprep.subr.mxu0 0.0
  %1548 = vmatpush1.msra.mxu0 %v1533
  %1549 = vmatprep.subr.mxu0 0.0
  %1550 = vmatpush1.msra.mxu0 %v1534
  %1551 = vmatprep.subr.mxu0 0.0
  %1552 = vmatpush1.msra.mxu0 %v1535
  %1553 = vmatprep.subr.mxu0 0.0
  %1554 = vmatpush1.msra.mxu0 %v1536
  %1555 = vmatprep.subr.mxu0 0.0
  %1556 = vmatpush1.msra.mxu0 %v1537
  %1557 = vmatprep.subr.mxu0 0.0
  %1558 = vmatpush1.msra.mxu0 %v1538
  %1559 = vmatprep.subr.mxu0 0.0
  %1560 = vmatpush1.msra.mxu0 %v1539
  %1561 = vmatprep.subr.mxu0 0.0
  %1562 = vmatpush1.msra.mxu0 %v1540
  %1563 = vmatprep.subr.mxu0 0.0
  %1564 = vmatpush1.msra.mxu0 0.0
  %1565 = vmatprep.subr.mxu0 0.0
  %1566 = vmatpush1.msra.mxu0 0.0
  %1567 = vmatprep.subr.mxu0 0.0
  %1568 = vmatpush1.msra.mxu0 0.0
  %1569 = vmatprep.subr.mxu0 0.0
  %1570 = vmatpush1.msra.mxu0 0.0
  %1571 = vmatprep.subr.mxu0 0.0
  %1572 = vmatpush1.msra.mxu0 0.0
  %1573 = vmatprep.subr.mxu0 0.0
  %1574 = vmatpush1.msra.mxu0 0.0
  %1575 = vmatprep.subr.mxu0 0.0
  %1576 = vmatpush1.msra.mxu0 0.0
  %1577 = vmatprep.subr.mxu0 0.0
  %1578 = vmatpush1.msra.mxu0 0.0
  %1579 = vmatprep.subr.mxu0 0.0
  %1580 = vmatpush1.msra.mxu0 0.0
  %1581 = vmatprep.subr.mxu0 0.0
  %1582 = vmatpush1.msra.mxu0 0.0
  %1583 = vmatprep.subr.mxu0 0.0
  %1584 = vmatpush1.msra.mxu0 0.0
  %1585 = vmatprep.subr.mxu0 0.0
  %1586 = vmatpush1.msra.mxu0 0.0
  %1587 = vmatprep.subr.mxu0 0.0
  %1588 = vmatpush1.msra.mxu0 0.0
  %1589 = vmatprep.subr.mxu0 0.0
  %1590 = vmatpush1.msra.mxu0 0.0
  %1591 = vmatprep.subr.mxu0 0.0
  %1592 = vmatpush1.msra.mxu0 0.0
  %1593 = vmatprep.subr.mxu0 0.0
  %1594 = vmatpush1.msra.mxu0 0.0
  %1595 = vmatprep.subr.mxu0 0.0
  %1596 = vmatpush1.msra.mxu0 0.0
  %1597 = vmatprep.subr.mxu0 0.0
  %1598 = vmatpush1.msra.mxu0 0.0
  %1599 = vmatprep.subr.mxu0 0.0
  %1600 = vmatpush1.msra.mxu0 0.0
  %1601 = vmatprep.subr.mxu0 0.0
  %1602 = vmatpush1.msra.mxu0 0.0
  %1603 = vmatprep.subr.mxu0 0.0
  %1604 = vmatpush1.msra.mxu0 0.0
  %1605 = vmatprep.subr.mxu0 0.0
  %1606 = vmatpush1.msra.mxu0 0.0
  %1607 = vmatprep.subr.mxu0 0.0
  %1608 = vmatpush1.msra.mxu0 0.0
  %1609 = vmatprep.subr.mxu0 0.0
  %1610 = vmatpush1.msra.mxu0 0.0
  %1611 = vmatprep.mubr.f32.mxu0 0.0
  %1612 = vmatmul.mubr.f32.gmra.mrb[0].mxu0 %v1542
  %v1613 = vpop.f32.mrb[0].mxu0
  %v1614 = vadd.f32 0.0, %v1613
  %v1615 = vpop.f32.mrb[0].mxu0
  %1616 = vmatprep.mubr.f32.mxu0 0.0
  %1617 = vmatmul.mubr.f32.gmra.mrb[0].mxu0 %v1545
  %v1618 = vpop.f32.mrb[0].mxu0
  %v1619 = vadd.f32 0.0, %v1618
  %v1620 = vpop.f32.mrb[0].mxu0
  %1621 = vdwg.mxu0
  %v1623 = vsel %vm131, %v1520, 0
  %v1626 = vsel %vm131, %v1521, 0
  %1628 = vmatprep.subr.mxu0 0.0
  %1629 = vmatpush1.msra.mxu0 %v1522
  %1630 = vmatprep.subr.mxu0 0.0
  %1631 = vmatpush1.msra.mxu0 %v1523
  %1632 = vmatprep.subr.mxu0 0.0
  %1633 = vmatpush1.msra.mxu0 %v1524
  %1634 = vmatprep.subr.mxu0 0.0
  %1635 = vmatpush1.msra.mxu0 %v1525
  %1636 = vmatprep.subr.mxu0 0.0
  %1637 = vmatpush1.msra.mxu0 %v1526
  %1638 = vmatprep.subr.mxu0 0.0
  %1639 = vmatpush1.msra.mxu0 %v1527
  %1640 = vmatprep.subr.mxu0 0.0
  %1641 = vmatpush1.msra.mxu0 %v1528
  %1642 = vmatprep.subr.mxu0 0.0
  %1643 = vmatpush1.msra.mxu0 %v1529
  %1644 = vmatprep.subr.mxu0 0.0
  %1645 = vmatpush1.msra.mxu0 0.0
  %1646 = vmatprep.subr.mxu0 0.0
  %1647 = vmatpush1.msra.mxu0 0.0
  %1648 = vmatprep.subr.mxu0 0.0
  %1649 = vmatpush1.msra.mxu0 0.0
  %1650 = vmatprep.subr.mxu0 0.0
  %1651 = vmatpush1.msra.mxu0 0.0
  %1652 = vmatprep.subr.mxu0 0.0
  %1653 = vmatpush1.msra.mxu0 0.0
  %1654 = vmatprep.subr.mxu0 0.0
  %1655 = vmatpush1.msra.mxu0 0.0
  %1656 = vmatprep.subr.mxu0 0.0
  %1657 = vmatpush1.msra.mxu0 0.0
  %1658 = vmatprep.subr.mxu0 0.0
  %1659 = vmatpush1.msra.mxu0 0.0
  %1660 = vmatprep.subr.mxu0 0.0
  %1661 = vmatpush1.msra.mxu0 0.0
  %1662 = vmatprep.subr.mxu0 0.0
  %1663 = vmatpush1.msra.mxu0 0.0
  %1664 = vmatprep.subr.mxu0 0.0
  %1665 = vmatpush1.msra.mxu0 0.0
  %1666 = vmatprep.subr.mxu0 0.0
  %1667 = vmatpush1.msra.mxu0 0.0
  %1668 = vmatprep.subr.mxu0 0.0
  %1669 = vmatpush1.msra.mxu0 0.0
  %1670 = vmatprep.subr.mxu0 0.0
  %1671 = vmatpush1.msra.mxu0 0.0
  %1672 = vmatprep.subr.mxu0 0.0
  %1673 = vmatpush1.msra.mxu0 0.0
  %1674 = vmatprep.subr.mxu0 0.0
  %1675 = vmatpush1.msra.mxu0 0.0
  %1676 = vmatprep.subr.mxu0 0.0
  %1677 = vmatpush1.msra.mxu0 0.0
  %1678 = vmatprep.subr.mxu0 0.0
  %1679 = vmatpush1.msra.mxu0 0.0
  %1680 = vmatprep.subr.mxu0 0.0
  %1681 = vmatpush1.msra.mxu0 0.0
  %1682 = vmatprep.subr.mxu0 0.0
  %1683 = vmatpush1.msra.mxu0 0.0
  %1684 = vmatprep.subr.mxu0 0.0
  %1685 = vmatpush1.msra.mxu0 0.0
  %1686 = vmatprep.subr.mxu0 0.0
  %1687 = vmatpush1.msra.mxu0 0.0
  %1688 = vmatprep.subr.mxu0 0.0
  %1689 = vmatpush1.msra.mxu0 0.0
  %1690 = vmatprep.subr.mxu0 0.0
  %1691 = vmatpush1.msra.mxu0 0.0
  %1692 = vmatprep.mubr.f32.mxu0 0.0
  %1693 = vmatmul.mubr.f32.gmra.mrb[0].mxu0 %v1623
  %v1694 = vpop.f32.mrb[0].mxu0
  %v1695 = vadd.f32 %v1614, %v1694
  %v1696 = vpop.f32.mrb[0].mxu0
  %1697 = vmatprep.mubr.f32.mxu0 0.0
  %1698 = vmatmul.mubr.f32.gmra.mrb[0].mxu0 %v1626
  %v1699 = vpop.f32.mrb[0].mxu0
  %v1700 = vadd.f32 %v1619, %v1699
  %v1701 = vpop.f32.mrb[0].mxu0
  %1702 = vdwg.mxu0
  %v1703 = vld [vmem:[#allocation9 + $0x2] sm:$0xff]
  %v1704 = vld [vmem:[#allocation9 + $0xa] sm:$0x3]
  %s1705 = scalar_lea.vmem %s33, 128
  %v1706 = vld [vmem:[%s1705] sm:$0xff]
  %v1707 = vld [vmem:[%s1705 + $0x8] sm:$0xff]
  %v1708 = vld [vmem:[%s1705 + $0x10] sm:$0xff]
  %v1709 = vld [vmem:[%s1705 + $0x18] sm:$0xff]
  %v1710 = vld [vmem:[%s1705 + $0x20] sm:$0xff]
  %v1711 = vld [vmem:[%s1705 + $0x28] sm:$0xff]
  %v1712 = vld [vmem:[%s1705 + $0x30] sm:$0xff]
  %v1713 = vld [vmem:[%s1705 + $0x38] sm:$0xff]
  %v1715 = vsel %vm131, %v1703, 0
  %v1718 = vsel %vm131, %v1704, 0
  %1720 = vmatprep.subr.mxu0 0.0
  %1721 = vmatpush1.msra.mxu0 %v1706
  %1722 = vmatprep.subr.mxu0 0.0
  %1723 = vmatpush1.msra.mxu0 %v1707
  %1724 = vmatprep.subr.mxu0 0.0
  %1725 = vmatpush1.msra.mxu0 %v1708
  %1726 = vmatprep.subr.mxu0 0.0
  %1727 = vmatpush1.msra.mxu0 %v1709
  %1728 = vmatprep.subr.mxu0 0.0
  %1729 = vmatpush1.msra.mxu0 %v1710
  %1730 = vmatprep.subr.mxu0 0.0
  %1731 = vmatpush1.msra.mxu0 %v1711
  %1732 = vmatprep.subr.mxu0 0.0
  %1733 = vmatpush1.msra.mxu0 %v1712
  %1734 = vmatprep.subr.mxu0 0.0
  %1735 = vmatpush1.msra.mxu0 %v1713
  %1736 = vmatprep.subr.mxu0 0.0
  %1737 = vmatpush1.msra.mxu0 0.0
  %1738 = vmatprep.subr.mxu0 0.0
  %1739 = vmatpush1.msra.mxu0 0.0
  %1740 = vmatprep.subr.mxu0 0.0
  %1741 = vmatpush1.msra.mxu0 0.0
  %1742 = vmatprep.subr.mxu0 0.0
  %1743 = vmatpush1.msra.mxu0 0.0
  %1744 = vmatprep.subr.mxu0 0.0
  %1745 = vmatpush1.msra.mxu0 0.0
  %1746 = vmatprep.subr.mxu0 0.0
  %1747 = vmatpush1.msra.mxu0 0.0
  %1748 = vmatprep.subr.mxu0 0.0
  %1749 = vmatpush1.msra.mxu0 0.0
  %1750 = vmatprep.subr.mxu0 0.0
  %1751 = vmatpush1.msra.mxu0 0.0
  %1752 = vmatprep.subr.mxu0 0.0
  %1753 = vmatpush1.msra.mxu0 0.0
  %1754 = vmatprep.subr.mxu0 0.0
  %1755 = vmatpush1.msra.mxu0 0.0
  %1756 = vmatprep.subr.mxu0 0.0
  %1757 = vmatpush1.msra.mxu0 0.0
  %1758 = vmatprep.subr.mxu0 0.0
  %1759 = vmatpush1.msra.mxu0 0.0
  %1760 = vmatprep.subr.mxu0 0.0
  %1761 = vmatpush1.msra.mxu0 0.0
  %1762 = vmatprep.subr.mxu0 0.0
  %1763 = vmatpush1.msra.mxu0 0.0
  %1764 = vmatprep.subr.mxu0 0.0
  %1765 = vmatpush1.msra.mxu0 0.0
  %1766 = vmatprep.subr.mxu0 0.0
  %1767 = vmatpush1.msra.mxu0 0.0
  %1768 = vmatprep.subr.mxu0 0.0
  %1769 = vmatpush1.msra.mxu0 0.0
  %1770 = vmatprep.subr.mxu0 0.0
  %1771 = vmatpush1.msra.mxu0 0.0
  %1772 = vmatprep.subr.mxu0 0.0
  %1773 = vmatpush1.msra.mxu0 0.0
  %1774 = vmatprep.subr.mxu0 0.0
  %1775 = vmatpush1.msra.mxu0 0.0
  %1776 = vmatprep.subr.mxu0 0.0
  %1777 = vmatpush1.msra.mxu0 0.0
  %1778 = vmatprep.subr.mxu0 0.0
  %1779 = vmatpush1.msra.mxu0 0.0
  %1780 = vmatprep.subr.mxu0 0.0
  %1781 = vmatpush1.msra.mxu0 0.0
  %1782 = vmatprep.subr.mxu0 0.0
  %1783 = vmatpush1.msra.mxu0 0.0
  %1784 = vmatprep.mubr.f32.mxu0 0.0
  %1785 = vmatmul.mubr.f32.gmra.mrb[0].mxu0 %v1715
  %v1786 = vpop.f32.mrb[0].mxu0
  %v1787 = vadd.f32 0.0, %v1786
  %v1788 = vpop.f32.mrb[0].mxu0
  %1789 = vmatprep.mubr.f32.mxu0 0.0
  %1790 = vmatmul.mubr.f32.gmra.mrb[0].mxu0 %v1718
  %v1791 = vpop.f32.mrb[0].mxu0
  %v1792 = vadd.f32 0.0, %v1791
  %v1793 = vpop.f32.mrb[0].mxu0
  %1794 = vdwg.mxu0
  %v1795 = vadd.f32 %v1695, %v1787
  %v1796 = vadd.f32 %v1700, %v1792
  %v1797 = vld [vmem:[%s35] sm:$0x1]
  %v1799 = vlaneseq
  %v1800 = vshrl.u32 %v1799, 7
  %v1801 = vsub.s32 0, %v1800
  %v1802 = vrot.slane %v1797, %v1801
  %v1804 = vadd.f32 %v1795, %v1802
  %v1805 = vadd.f32 %v1796, %v1802
  %vm1806 = vcmp.ge.f32.partialorder %v1804, 0.0
  %vm1807 = vcmp.ge.f32.partialorder %v1805, 0.0
  %v1808 = vmul.f32 %v1804, 0.2
  %v1809 = vmul.f32 %v1805, 0.2
  %v1810 = vsel %vm1806, %v1804, %v1808
  %v1811 = vsel %vm1807, %v1805, %v1809
  %v1812 = vld [vmem:[%s7] sm:$0xff]
  %v1813 = vld [vmem:[%s7 + $0x8] sm:$0x3]
  %1815 = vset.pattern.permute.xlu0 0
  %1816 = vperm.xlu0 %1815, %v1812
  %v1817 = vpop.permute.xlu0 %1816
  %1820 = vset.pattern.permute.xlu0 0
  %1821 = vperm.xlu0 %1820, %v1813
  %v1822 = vpop.permute.xlu0 %1821
  %v1824 = vmul.f32 %v1810, %v1817
  %v1825 = vmul.f32 %v1811, %v1822
  %v1826 = vld [vmem:[%s21] sm:$0xff]
  %v1827 = vld [vmem:[%s21 + $0x8] sm:$0xff]
  %v1828 = vld [vmem:[%s21 + $0x10] sm:$0x3]
  %vm1829 = vcmask 80896
  %v1831 = vsel %vm1829, %v1826, 0
  %v1834 = vsel %vm1829, %v1827, 0
  %v1837 = vsel %vm1829, %v1828, 0
  %v1840 = vsel %vm610, %v1825, 0
  %1842 = vmatprep.subr.mxu0 0.0
  %1843 = vmatpush1.msra.mxu0 %v1824
  %1844 = vmatprep.subr.mxu0 0.0
  %1845 = vmatpush1.msra.mxu0 %v1840
  %1846 = vmatprep.subr.mxu0 0.0
  %1847 = vmatpush1.msra.mxu0 0.0
  %1848 = vmatprep.subr.mxu0 0.0
  %1849 = vmatpush1.msra.mxu0 0.0
  %1850 = vmatprep.subr.mxu0 0.0
  %1851 = vmatpush1.msra.mxu0 0.0
  %1852 = vmatprep.subr.mxu0 0.0
  %1853 = vmatpush1.msra.mxu0 0.0
  %1854 = vmatprep.subr.mxu0 0.0
  %1855 = vmatpush1.msra.mxu0 0.0
  %1856 = vmatprep.subr.mxu0 0.0
  %1857 = vmatpush1.msra.mxu0 0.0
  %1858 = vmatprep.subr.mxu0 0.0
  %1859 = vmatpush1.msra.mxu0 0.0
  %1860 = vmatprep.subr.mxu0 0.0
  %1861 = vmatpush1.msra.mxu0 0.0
  %1862 = vmatprep.subr.mxu0 0.0
  %1863 = vmatpush1.msra.mxu0 0.0
  %1864 = vmatprep.subr.mxu0 0.0
  %1865 = vmatpush1.msra.mxu0 0.0
  %1866 = vmatprep.subr.mxu0 0.0
  %1867 = vmatpush1.msra.mxu0 0.0
  %1868 = vmatprep.subr.mxu0 0.0
  %1869 = vmatpush1.msra.mxu0 0.0
  %1870 = vmatprep.subr.mxu0 0.0
  %1871 = vmatpush1.msra.mxu0 0.0
  %1872 = vmatprep.subr.mxu0 0.0
  %1873 = vmatpush1.msra.mxu0 0.0
  %1874 = vmatprep.subr.mxu0 0.0
  %1875 = vmatpush1.msra.mxu0 0.0
  %1876 = vmatprep.subr.mxu0 0.0
  %1877 = vmatpush1.msra.mxu0 0.0
  %1878 = vmatprep.subr.mxu0 0.0
  %1879 = vmatpush1.msra.mxu0 0.0
  %1880 = vmatprep.subr.mxu0 0.0
  %1881 = vmatpush1.msra.mxu0 0.0
  %1882 = vmatprep.subr.mxu0 0.0
  %1883 = vmatpush1.msra.mxu0 0.0
  %1884 = vmatprep.subr.mxu0 0.0
  %1885 = vmatpush1.msra.mxu0 0.0
  %1886 = vmatprep.subr.mxu0 0.0
  %1887 = vmatpush1.msra.mxu0 0.0
  %1888 = vmatprep.subr.mxu0 0.0
  %1889 = vmatpush1.msra.mxu0 0.0
  %1890 = vmatprep.subr.mxu0 0.0
  %1891 = vmatpush1.msra.mxu0 0.0
  %1892 = vmatprep.subr.mxu0 0.0
  %1893 = vmatpush1.msra.mxu0 0.0
  %1894 = vmatprep.subr.mxu0 0.0
  %1895 = vmatpush1.msra.mxu0 0.0
  %1896 = vmatprep.subr.mxu0 0.0
  %1897 = vmatpush1.msra.mxu0 0.0
  %1898 = vmatprep.subr.mxu0 0.0
  %1899 = vmatpush1.msra.mxu0 0.0
  %1900 = vmatprep.subr.mxu0 0.0
  %1901 = vmatpush1.msra.mxu0 0.0
  %1902 = vmatprep.subr.mxu0 0.0
  %1903 = vmatpush1.msra.mxu0 0.0
  %1904 = vmatprep.subr.mxu0 0.0
  %1905 = vmatpush1.msra.mxu0 0.0
  %1906 = vmatprep.mubr.f32.mxu0 0.0
  %1907 = vmatmul.mubr.f32.gmra.mrb[0].mxu0 %v1831
  %v1908 = vpop.f32.mrb[0].mxu0
  %v1909 = vadd.f32 0.0, %v1908
  %v1910 = vpop.f32.mrb[0].mxu0
  %1911 = vmatprep.mubr.f32.mxu0 0.0
  %1912 = vmatmul.mubr.f32.gmra.mrb[0].mxu0 %v1834
  %v1913 = vpop.f32.mrb[0].mxu0
  %v1914 = vadd.f32 0.0, %v1913
  %v1915 = vpop.f32.mrb[0].mxu0
  %1916 = vmatprep.mubr.f32.mxu0 0.0
  %1917 = vmatmul.mubr.f32.gmra.mrb[0].mxu0 %v1837
  %v1918 = vpop.f32.mrb[0].mxu0
  %v1919 = vadd.f32 0.0, %v1918
  %v1920 = vpop.f32.mrb[0].mxu0
  %1921 = vdwg.mxu0
  %1922 = vst.msk [vmem:[#allocation8 + $0x1] sm:$0xff] %vm131, %v1909
  %1923 = vst.msk [vmem:[#allocation8 + $0x9] sm:$0xff] %vm131, %v1914
  %1924 = vst.msk [vmem:[#allocation8 + $0x11] sm:$0x3] %vm891, %v1919
  %v1925 = vld [vmem:[#allocation7] sm:$0xff]
  %v1926 = vld [vmem:[#allocation7 + $0x8] sm:$0xff]
  %v1927 = vld [vmem:[#allocation7 + $0x10] sm:$0x3]
  %v1928 = vld [vmem:[%s37] sm:$0xff]
  %v1929 = vld [vmem:[%s37 + $0x8] sm:$0xff]
  %v1930 = vld [vmem:[%s37 + $0x10] sm:$0xff]
  %v1931 = vld [vmem:[%s37 + $0x18] sm:$0xff]
  %v1932 = vld [vmem:[%s37 + $0x20] sm:$0xff]
  %v1933 = vld [vmem:[%s37 + $0x28] sm:$0xff]
  %v1934 = vld [vmem:[%s37 + $0x30] sm:$0xff]
  %v1935 = vld [vmem:[%s37 + $0x38] sm:$0xff]
  %v1936 = vld [vmem:[%s37 + $0x40] sm:$0xff]
  %v1937 = vld [vmem:[%s37 + $0x48] sm:$0xff]
  %v1938 = vld [vmem:[%s37 + $0x50] sm:$0xff]
  %v1939 = vld [vmem:[%s37 + $0x58] sm:$0xff]
  %v1940 = vld [vmem:[%s37 + $0x60] sm:$0xff]
  %v1941 = vld [vmem:[%s37 + $0x68] sm:$0xff]
  %v1942 = vld [vmem:[%s37 + $0x70] sm:$0xff]
  %v1943 = vld [vmem:[%s37 + $0x78] sm:$0xff]
  %v1944 = vld [vmem:[#allocation7 + $0x1] sm:$0xff]
  %v1945 = vld [vmem:[#allocation7 + $0x9] sm:$0xff]
  %v1946 = vld [vmem:[#allocation7 + $0x11] sm:$0x3]
  %s1947 = scalar_lea.vmem %s37, 128
  %v1948 = vld [vmem:[%s1947] sm:$0xff]
  %v1949 = vld [vmem:[%s1947 + $0x8] sm:$0xff]
  %v1950 = vld [vmem:[%s1947 + $0x10] sm:$0xff]
  %v1951 = vld [vmem:[%s1947 + $0x18] sm:$0xff]
  %v1952 = vld [vmem:[%s1947 + $0x20] sm:$0xff]
  %v1953 = vld [vmem:[%s1947 + $0x28] sm:$0xff]
  %v1954 = vld [vmem:[%s1947 + $0x30] sm:$0xff]
  %v1955 = vld [vmem:[%s1947 + $0x38] sm:$0xff]
  %v1956 = vld [vmem:[%s1947 + $0x40] sm:$0xff]
  %v1957 = vld [vmem:[%s1947 + $0x48] sm:$0xff]
  %v1958 = vld [vmem:[%s1947 + $0x50] sm:$0xff]
  %v1959 = vld [vmem:[%s1947 + $0x58] sm:$0xff]
  %v1960 = vld [vmem:[%s1947 + $0x60] sm:$0xff]
  %v1961 = vld [vmem:[%s1947 + $0x68] sm:$0xff]
  %v1962 = vld [vmem:[%s1947 + $0x70] sm:$0xff]
  %v1963 = vld [vmem:[%s1947 + $0x78] sm:$0xff]
  %1964 = vmatprep.subr.mxu0 0.0
  %1965 = vmatpush1.msra.mxu0 %v1948
  %1966 = vmatprep.subr.mxu0 0.0
  %1967 = vmatpush1.msra.mxu0 %v1949
  %1968 = vmatprep.subr.mxu0 0.0
  %1969 = vmatpush1.msra.mxu0 %v1950
  %1970 = vmatprep.subr.mxu0 0.0
  %1971 = vmatpush1.msra.mxu0 %v1951
  %1972 = vmatprep.subr.mxu0 0.0
  %1973 = vmatpush1.msra.mxu0 %v1952
  %1974 = vmatprep.subr.mxu0 0.0
  %1975 = vmatpush1.msra.mxu0 %v1953
  %1976 = vmatprep.subr.mxu0 0.0
  %1977 = vmatpush1.msra.mxu0 %v1954
  %1978 = vmatprep.subr.mxu0 0.0
  %1979 = vmatpush1.msra.mxu0 %v1955
  %1980 = vmatprep.subr.mxu0 0.0
  %1981 = vmatpush1.msra.mxu0 %v1956
  %1982 = vmatprep.subr.mxu0 0.0
  %1983 = vmatpush1.msra.mxu0 %v1957
  %1984 = vmatprep.subr.mxu0 0.0
  %1985 = vmatpush1.msra.mxu0 %v1958
  %1986 = vmatprep.subr.mxu0 0.0
  %1987 = vmatpush1.msra.mxu0 %v1959
  %1988 = vmatprep.subr.mxu0 0.0
  %1989 = vmatpush1.msra.mxu0 %v1960
  %1990 = vmatprep.subr.mxu0 0.0
  %1991 = vmatpush1.msra.mxu0 %v1961
  %1992 = vmatprep.subr.mxu0 0.0
  %1993 = vmatpush1.msra.mxu0 %v1962
  %1994 = vmatprep.subr.mxu0 0.0
  %1995 = vmatpush1.msra.mxu0 %v1963
  %1996 = vmatprep.subr.mxu0 0.0
  %1997 = vmatpush1.msra.mxu0 0.0
  %1998 = vmatprep.subr.mxu0 0.0
  %1999 = vmatpush1.msra.mxu0 0.0
  %2000 = vmatprep.subr.mxu0 0.0
  %2001 = vmatpush1.msra.mxu0 0.0
  %2002 = vmatprep.subr.mxu0 0.0
  %2003 = vmatpush1.msra.mxu0 0.0
  %2004 = vmatprep.subr.mxu0 0.0
  %2005 = vmatpush1.msra.mxu0 0.0
  %2006 = vmatprep.subr.mxu0 0.0
  %2007 = vmatpush1.msra.mxu0 0.0
  %2008 = vmatprep.subr.mxu0 0.0
  %2009 = vmatpush1.msra.mxu0 0.0
  %2010 = vmatprep.subr.mxu0 0.0
  %2011 = vmatpush1.msra.mxu0 0.0
  %2012 = vmatprep.subr.mxu0 0.0
  %2013 = vmatpush1.msra.mxu0 0.0
  %2014 = vmatprep.subr.mxu0 0.0
  %2015 = vmatpush1.msra.mxu0 0.0
  %2016 = vmatprep.subr.mxu0 0.0
  %2017 = vmatpush1.msra.mxu0 0.0
  %2018 = vmatprep.subr.mxu0 0.0
  %2019 = vmatpush1.msra.mxu0 0.0
  %2020 = vmatprep.subr.mxu0 0.0
  %2021 = vmatpush1.msra.mxu0 0.0
  %2022 = vmatprep.subr.mxu0 0.0
  %2023 = vmatpush1.msra.mxu0 0.0
  %2024 = vmatprep.subr.mxu0 0.0
  %2025 = vmatpush1.msra.mxu0 0.0
  %2026 = vmatprep.subr.mxu0 0.0
  %2027 = vmatpush1.msra.mxu0 0.0
  %2028 = vmatprep.mubr.f32.mxu0 0.0
  %2029 = vmatmul.mubr.f32.gmra.mrb[0].mxu0 %v1944
  %v2030 = vpop.f32.mrb[0].mxu0
  %v2031 = vadd.f32 0.0, %v2030
  %v2032 = vpop.f32.mrb[0].mxu0
  %2033 = vmatprep.mubr.f32.mxu0 0.0
  %2034 = vmatmul.mubr.f32.gmra.mrb[0].mxu0 %v1945
  %v2035 = vpop.f32.mrb[0].mxu0
  %v2036 = vadd.f32 0.0, %v2035
  %v2037 = vpop.f32.mrb[0].mxu0
  %2038 = vmatprep.mubr.f32.mxu0 0.0
  %2039 = vmatmul.mubr.f32.gmra.mrb[0].mxu0 %v1946
  %v2040 = vpop.f32.mrb[0].mxu0
  %v2041 = vadd.f32 0.0, %v2040
  %v2042 = vpop.f32.mrb[0].mxu0
  %2043 = vdwg.mxu0
  %2044 = vmatprep.subr.mxu0 0.0
  %2045 = vmatpush1.msra.mxu0 %v1928
  %2046 = vmatprep.subr.mxu0 0.0
  %2047 = vmatpush1.msra.mxu0 %v1929
  %2048 = vmatprep.subr.mxu0 0.0
  %2049 = vmatpush1.msra.mxu0 %v1930
  %2050 = vmatprep.subr.mxu0 0.0
  %2051 = vmatpush1.msra.mxu0 %v1931
  %2052 = vmatprep.subr.mxu0 0.0
  %2053 = vmatpush1.msra.mxu0 %v1932
  %2054 = vmatprep.subr.mxu0 0.0
  %2055 = vmatpush1.msra.mxu0 %v1933
  %2056 = vmatprep.subr.mxu0 0.0
  %2057 = vmatpush1.msra.mxu0 %v1934
  %2058 = vmatprep.subr.mxu0 0.0
  %2059 = vmatpush1.msra.mxu0 %v1935
  %2060 = vmatprep.subr.mxu0 0.0
  %2061 = vmatpush1.msra.mxu0 %v1936
  %2062 = vmatprep.subr.mxu0 0.0
  %2063 = vmatpush1.msra.mxu0 %v1937
  %2064 = vmatprep.subr.mxu0 0.0
  %2065 = vmatpush1.msra.mxu0 %v1938
  %2066 = vmatprep.subr.mxu0 0.0
  %2067 = vmatpush1.msra.mxu0 %v1939
  %2068 = vmatprep.subr.mxu0 0.0
  %2069 = vmatpush1.msra.mxu0 %v1940
  %2070 = vmatprep.subr.mxu0 0.0
  %2071 = vmatpush1.msra.mxu0 %v1941
  %2072 = vmatprep.subr.mxu0 0.0
  %2073 = vmatpush1.msra.mxu0 %v1942
  %2074 = vmatprep.subr.mxu0 0.0
  %2075 = vmatpush1.msra.mxu0 %v1943
  %2076 = vmatprep.subr.mxu0 0.0
  %2077 = vmatpush1.msra.mxu0 0.0
  %2078 = vmatprep.subr.mxu0 0.0
  %2079 = vmatpush1.msra.mxu0 0.0
  %2080 = vmatprep.subr.mxu0 0.0
  %2081 = vmatpush1.msra.mxu0 0.0
  %2082 = vmatprep.subr.mxu0 0.0
  %2083 = vmatpush1.msra.mxu0 0.0
  %2084 = vmatprep.subr.mxu0 0.0
  %2085 = vmatpush1.msra.mxu0 0.0
  %2086 = vmatprep.subr.mxu0 0.0
  %2087 = vmatpush1.msra.mxu0 0.0
  %2088 = vmatprep.subr.mxu0 0.0
  %2089 = vmatpush1.msra.mxu0 0.0
  %2090 = vmatprep.subr.mxu0 0.0
  %2091 = vmatpush1.msra.mxu0 0.0
  %2092 = vmatprep.subr.mxu0 0.0
  %2093 = vmatpush1.msra.mxu0 0.0
  %2094 = vmatprep.subr.mxu0 0.0
  %2095 = vmatpush1.msra.mxu0 0.0
  %2096 = vmatprep.subr.mxu0 0.0
  %2097 = vmatpush1.msra.mxu0 0.0
  %2098 = vmatprep.subr.mxu0 0.0
  %2099 = vmatpush1.msra.mxu0 0.0
  %2100 = vmatprep.subr.mxu0 0.0
  %2101 = vmatpush1.msra.mxu0 0.0
  %2102 = vmatprep.subr.mxu0 0.0
  %2103 = vmatpush1.msra.mxu0 0.0
  %2104 = vmatprep.subr.mxu0 0.0
  %2105 = vmatpush1.msra.mxu0 0.0
  %2106 = vmatprep.subr.mxu0 0.0
  %2107 = vmatpush1.msra.mxu0 0.0
  %2108 = vmatprep.mubr.f32.mxu0 0.0
  %2109 = vmatmul.mubr.f32.gmra.mrb[0].mxu0 %v1925
  %v2110 = vpop.f32.mrb[0].mxu0
  %v2111 = vadd.f32 %v2031, %v2110
  %v2112 = vpop.f32.mrb[0].mxu0
  %2113 = vmatprep.mubr.f32.mxu0 0.0
  %2114 = vmatmul.mubr.f32.gmra.mrb[0].mxu0 %v1926
  %v2115 = vpop.f32.mrb[0].mxu0
  %v2116 = vadd.f32 %v2036, %v2115
  %v2117 = vpop.f32.mrb[0].mxu0
  %2118 = vmatprep.mubr.f32.mxu0 0.0
  %2119 = vmatmul.mubr.f32.gmra.mrb[0].mxu0 %v1927
  %v2120 = vpop.f32.mrb[0].mxu0
  %v2121 = vadd.f32 %v2041, %v2120
  %v2122 = vpop.f32.mrb[0].mxu0
  %2123 = vdwg.mxu0
  %v2124 = vld [vmem:[#allocation7 + $0x2] sm:$0xff]
  %v2125 = vld [vmem:[#allocation7 + $0xa] sm:$0xff]
  %v2126 = vld [vmem:[#allocation7 + $0x12] sm:$0x3]
  %s2127 = scalar_lea.vmem %s37, 256
  %v2128 = vld [vmem:[%s2127] sm:$0xff]
  %v2129 = vld [vmem:[%s2127 + $0x8] sm:$0xff]
  %v2130 = vld [vmem:[%s2127 + $0x10] sm:$0xff]
  %v2131 = vld [vmem:[%s2127 + $0x18] sm:$0xff]
  %v2132 = vld [vmem:[%s2127 + $0x20] sm:$0xff]
  %v2133 = vld [vmem:[%s2127 + $0x28] sm:$0xff]
  %v2134 = vld [vmem:[%s2127 + $0x30] sm:$0xff]
  %v2135 = vld [vmem:[%s2127 + $0x38] sm:$0xff]
  %v2136 = vld [vmem:[%s2127 + $0x40] sm:$0xff]
  %v2137 = vld [vmem:[%s2127 + $0x48] sm:$0xff]
  %v2138 = vld [vmem:[%s2127 + $0x50] sm:$0xff]
  %v2139 = vld [vmem:[%s2127 + $0x58] sm:$0xff]
  %v2140 = vld [vmem:[%s2127 + $0x60] sm:$0xff]
  %v2141 = vld [vmem:[%s2127 + $0x68] sm:$0xff]
  %v2142 = vld [vmem:[%s2127 + $0x70] sm:$0xff]
  %v2143 = vld [vmem:[%s2127 + $0x78] sm:$0xff]
  %2144 = vmatprep.subr.mxu0 0.0
  %2145 = vmatpush1.msra.mxu0 %v2128
  %2146 = vmatprep.subr.mxu0 0.0
  %2147 = vmatpush1.msra.mxu0 %v2129
  %2148 = vmatprep.subr.mxu0 0.0
  %2149 = vmatpush1.msra.mxu0 %v2130
  %2150 = vmatprep.subr.mxu0 0.0
  %2151 = vmatpush1.msra.mxu0 %v2131
  %2152 = vmatprep.subr.mxu0 0.0
  %2153 = vmatpush1.msra.mxu0 %v2132
  %2154 = vmatprep.subr.mxu0 0.0
  %2155 = vmatpush1.msra.mxu0 %v2133
  %2156 = vmatprep.subr.mxu0 0.0
  %2157 = vmatpush1.msra.mxu0 %v2134
  %2158 = vmatprep.subr.mxu0 0.0
  %2159 = vmatpush1.msra.mxu0 %v2135
  %2160 = vmatprep.subr.mxu0 0.0
  %2161 = vmatpush1.msra.mxu0 %v2136
  %2162 = vmatprep.subr.mxu0 0.0
  %2163 = vmatpush1.msra.mxu0 %v2137
  %2164 = vmatprep.subr.mxu0 0.0
  %2165 = vmatpush1.msra.mxu0 %v2138
  %2166 = vmatprep.subr.mxu0 0.0
  %2167 = vmatpush1.msra.mxu0 %v2139
  %2168 = vmatprep.subr.mxu0 0.0
  %2169 = vmatpush1.msra.mxu0 %v2140
  %2170 = vmatprep.subr.mxu0 0.0
  %2171 = vmatpush1.msra.mxu0 %v2141
  %2172 = vmatprep.subr.mxu0 0.0
  %2173 = vmatpush1.msra.mxu0 %v2142
  %2174 = vmatprep.subr.mxu0 0.0
  %2175 = vmatpush1.msra.mxu0 %v2143
  %2176 = vmatprep.subr.mxu0 0.0
  %2177 = vmatpush1.msra.mxu0 0.0
  %2178 = vmatprep.subr.mxu0 0.0
  %2179 = vmatpush1.msra.mxu0 0.0
  %2180 = vmatprep.subr.mxu0 0.0
  %2181 = vmatpush1.msra.mxu0 0.0
  %2182 = vmatprep.subr.mxu0 0.0
  %2183 = vmatpush1.msra.mxu0 0.0
  %2184 = vmatprep.subr.mxu0 0.0
  %2185 = vmatpush1.msra.mxu0 0.0
  %2186 = vmatprep.subr.mxu0 0.0
  %2187 = vmatpush1.msra.mxu0 0.0
  %2188 = vmatprep.subr.mxu0 0.0
  %2189 = vmatpush1.msra.mxu0 0.0
  %2190 = vmatprep.subr.mxu0 0.0
  %2191 = vmatpush1.msra.mxu0 0.0
  %2192 = vmatprep.subr.mxu0 0.0
  %2193 = vmatpush1.msra.mxu0 0.0
  %2194 = vmatprep.subr.mxu0 0.0
  %2195 = vmatpush1.msra.mxu0 0.0
  %2196 = vmatprep.subr.mxu0 0.0
  %2197 = vmatpush1.msra.mxu0 0.0
  %2198 = vmatprep.subr.mxu0 0.0
  %2199 = vmatpush1.msra.mxu0 0.0
  %2200 = vmatprep.subr.mxu0 0.0
  %2201 = vmatpush1.msra.mxu0 0.0
  %2202 = vmatprep.subr.mxu0 0.0
  %2203 = vmatpush1.msra.mxu0 0.0
  %2204 = vmatprep.subr.mxu0 0.0
  %2205 = vmatpush1.msra.mxu0 0.0
  %2206 = vmatprep.subr.mxu0 0.0
  %2207 = vmatpush1.msra.mxu0 0.0
  %2208 = vmatprep.mubr.f32.mxu0 0.0
  %2209 = vmatmul.mubr.f32.gmra.mrb[0].mxu0 %v2124
  %v2210 = vpop.f32.mrb[0].mxu0
  %v2211 = vadd.f32 0.0, %v2210
  %v2212 = vpop.f32.mrb[0].mxu0
  %2213 = vmatprep.mubr.f32.mxu0 0.0
  %2214 = vmatmul.mubr.f32.gmra.mrb[0].mxu0 %v2125
  %v2215 = vpop.f32.mrb[0].mxu0
  %v2216 = vadd.f32 0.0, %v2215
  %v2217 = vpop.f32.mrb[0].mxu0
  %2218 = vmatprep.mubr.f32.mxu0 0.0
  %2219 = vmatmul.mubr.f32.gmra.mrb[0].mxu0 %v2126
  %v2220 = vpop.f32.mrb[0].mxu0
  %v2221 = vadd.f32 0.0, %v2220
  %v2222 = vpop.f32.mrb[0].mxu0
  %2223 = vdwg.mxu0
  %v2224 = vadd.f32 %v2111, %v2211
  %v2225 = vadd.f32 %v2116, %v2216
  %v2226 = vadd.f32 %v2121, %v2221
  %v2227 = vld [vmem:[#allocation8] sm:$0xff]
  %v2228 = vld [vmem:[#allocation8 + $0x8] sm:$0xff]
  %v2229 = vld [vmem:[#allocation8 + $0x10] sm:$0x3]
  %v2230 = vld [vmem:[%s39] sm:$0xff]
  %v2231 = vld [vmem:[%s39 + $0x8] sm:$0xff]
  %v2232 = vld [vmem:[%s39 + $0x10] sm:$0xff]
  %v2233 = vld [vmem:[%s39 + $0x18] sm:$0xff]
  %v2234 = vld [vmem:[%s39 + $0x20] sm:$0xff]
  %v2235 = vld [vmem:[%s39 + $0x28] sm:$0xff]
  %v2236 = vld [vmem:[%s39 + $0x30] sm:$0xff]
  %v2237 = vld [vmem:[%s39 + $0x38] sm:$0xff]
  %v2239 = vsel %vm131, %v2227, 0
  %v2242 = vsel %vm131, %v2228, 0
  %v2245 = vsel %vm131, %v2229, 0
  %2247 = vmatprep.subr.mxu0 0.0
  %2248 = vmatpush1.msra.mxu0 %v2230
  %2249 = vmatprep.subr.mxu0 0.0
  %2250 = vmatpush1.msra.mxu0 %v2231
  %2251 = vmatprep.subr.mxu0 0.0
  %2252 = vmatpush1.msra.mxu0 %v2232
  %2253 = vmatprep.subr.mxu0 0.0
  %2254 = vmatpush1.msra.mxu0 %v2233
  %2255 = vmatprep.subr.mxu0 0.0
  %2256 = vmatpush1.msra.mxu0 %v2234
  %2257 = vmatprep.subr.mxu0 0.0
  %2258 = vmatpush1.msra.mxu0 %v2235
  %2259 = vmatprep.subr.mxu0 0.0
  %2260 = vmatpush1.msra.mxu0 %v2236
  %2261 = vmatprep.subr.mxu0 0.0
  %2262 = vmatpush1.msra.mxu0 %v2237
  %2263 = vmatprep.subr.mxu0 0.0
  %2264 = vmatpush1.msra.mxu0 0.0
  %2265 = vmatprep.subr.mxu0 0.0
  %2266 = vmatpush1.msra.mxu0 0.0
  %2267 = vmatprep.subr.mxu0 0.0
  %2268 = vmatpush1.msra.mxu0 0.0
  %2269 = vmatprep.subr.mxu0 0.0
  %2270 = vmatpush1.msra.mxu0 0.0
  %2271 = vmatprep.subr.mxu0 0.0
  %2272 = vmatpush1.msra.mxu0 0.0
  %2273 = vmatprep.subr.mxu0 0.0
  %2274 = vmatpush1.msra.mxu0 0.0
  %2275 = vmatprep.subr.mxu0 0.0
  %2276 = vmatpush1.msra.mxu0 0.0
  %2277 = vmatprep.subr.mxu0 0.0
  %2278 = vmatpush1.msra.mxu0 0.0
  %2279 = vmatprep.subr.mxu0 0.0
  %2280 = vmatpush1.msra.mxu0 0.0
  %2281 = vmatprep.subr.mxu0 0.0
  %2282 = vmatpush1.msra.mxu0 0.0
  %2283 = vmatprep.subr.mxu0 0.0
  %2284 = vmatpush1.msra.mxu0 0.0
  %2285 = vmatprep.subr.mxu0 0.0
  %2286 = vmatpush1.msra.mxu0 0.0
  %2287 = vmatprep.subr.mxu0 0.0
  %2288 = vmatpush1.msra.mxu0 0.0
  %2289 = vmatprep.subr.mxu0 0.0
  %2290 = vmatpush1.msra.mxu0 0.0
  %2291 = vmatprep.subr.mxu0 0.0
  %2292 = vmatpush1.msra.mxu0 0.0
  %2293 = vmatprep.subr.mxu0 0.0
  %2294 = vmatpush1.msra.mxu0 0.0
  %2295 = vmatprep.subr.mxu0 0.0
  %2296 = vmatpush1.msra.mxu0 0.0
  %2297 = vmatprep.subr.mxu0 0.0
  %2298 = vmatpush1.msra.mxu0 0.0
  %2299 = vmatprep.subr.mxu0 0.0
  %2300 = vmatpush1.msra.mxu0 0.0
  %2301 = vmatprep.subr.mxu0 0.0
  %2302 = vmatpush1.msra.mxu0 0.0
  %2303 = vmatprep.subr.mxu0 0.0
  %2304 = vmatpush1.msra.mxu0 0.0
  %2305 = vmatprep.subr.mxu0 0.0
  %2306 = vmatpush1.msra.mxu0 0.0
  %2307 = vmatprep.subr.mxu0 0.0
  %2308 = vmatpush1.msra.mxu0 0.0
  %2309 = vmatprep.subr.mxu0 0.0
  %2310 = vmatpush1.msra.mxu0 0.0
  %2311 = vmatprep.mubr.f32.mxu0 0.0
  %2312 = vmatmul.mubr.f32.gmra.mrb[0].mxu0 %v2239
  %v2313 = vpop.f32.mrb[0].mxu0
  %v2314 = vadd.f32 0.0, %v2313
  %v2315 = vpop.f32.mrb[0].mxu0
  %2316 = vmatprep.mubr.f32.mxu0 0.0
  %2317 = vmatmul.mubr.f32.gmra.mrb[0].mxu0 %v2242
  %v2318 = vpop.f32.mrb[0].mxu0
  %v2319 = vadd.f32 0.0, %v2318
  %v2320 = vpop.f32.mrb[0].mxu0
  %2321 = vmatprep.mubr.f32.mxu0 0.0
  %2322 = vmatmul.mubr.f32.gmra.mrb[0].mxu0 %v2245
  %v2323 = vpop.f32.mrb[0].mxu0
  %v2324 = vadd.f32 0.0, %v2323
  %v2325 = vpop.f32.mrb[0].mxu0
  %2326 = vdwg.mxu0
  %v2327 = vadd.f32 %v2224, %v2314
  %v2328 = vadd.f32 %v2225, %v2319
  %v2329 = vadd.f32 %v2226, %v2324
  %v2330 = vld [vmem:[#allocation8 + $0x1] sm:$0xff]
  %v2331 = vld [vmem:[#allocation8 + $0x9] sm:$0xff]
  %v2332 = vld [vmem:[#allocation8 + $0x11] sm:$0x3]
  %s2333 = scalar_lea.vmem %s39, 64
  %v2334 = vld [vmem:[%s2333] sm:$0xff]
  %v2335 = vld [vmem:[%s2333 + $0x8] sm:$0xff]
  %v2336 = vld [vmem:[%s2333 + $0x10] sm:$0xff]
  %v2337 = vld [vmem:[%s2333 + $0x18] sm:$0xff]
  %v2338 = vld [vmem:[%s2333 + $0x20] sm:$0xff]
  %v2339 = vld [vmem:[%s2333 + $0x28] sm:$0xff]
  %v2340 = vld [vmem:[%s2333 + $0x30] sm:$0xff]
  %v2341 = vld [vmem:[%s2333 + $0x38] sm:$0xff]
  %v2343 = vsel %vm131, %v2330, 0
  %v2346 = vsel %vm131, %v2331, 0
  %v2349 = vsel %vm131, %v2332, 0
  %2351 = vmatprep.subr.mxu0 0.0
  %2352 = vmatpush1.msra.mxu0 %v2334
  %2353 = vmatprep.subr.mxu0 0.0
  %2354 = vmatpush1.msra.mxu0 %v2335
  %2355 = vmatprep.subr.mxu0 0.0
  %2356 = vmatpush1.msra.mxu0 %v2336
  %2357 = vmatprep.subr.mxu0 0.0
  %2358 = vmatpush1.msra.mxu0 %v2337
  %2359 = vmatprep.subr.mxu0 0.0
  %2360 = vmatpush1.msra.mxu0 %v2338
  %2361 = vmatprep.subr.mxu0 0.0
  %2362 = vmatpush1.msra.mxu0 %v2339
  %2363 = vmatprep.subr.mxu0 0.0
  %2364 = vmatpush1.msra.mxu0 %v2340
  %2365 = vmatprep.subr.mxu0 0.0
  %2366 = vmatpush1.msra.mxu0 %v2341
  %2367 = vmatprep.subr.mxu0 0.0
  %2368 = vmatpush1.msra.mxu0 0.0
  %2369 = vmatprep.subr.mxu0 0.0
  %2370 = vmatpush1.msra.mxu0 0.0
  %2371 = vmatprep.subr.mxu0 0.0
  %2372 = vmatpush1.msra.mxu0 0.0
  %2373 = vmatprep.subr.mxu0 0.0
  %2374 = vmatpush1.msra.mxu0 0.0
  %2375 = vmatprep.subr.mxu0 0.0
  %2376 = vmatpush1.msra.mxu0 0.0
  %2377 = vmatprep.subr.mxu0 0.0
  %2378 = vmatpush1.msra.mxu0 0.0
  %2379 = vmatprep.subr.mxu0 0.0
  %2380 = vmatpush1.msra.mxu0 0.0
  %2381 = vmatprep.subr.mxu0 0.0
  %2382 = vmatpush1.msra.mxu0 0.0
  %2383 = vmatprep.subr.mxu0 0.0
  %2384 = vmatpush1.msra.mxu0 0.0
  %2385 = vmatprep.subr.mxu0 0.0
  %2386 = vmatpush1.msra.mxu0 0.0
  %2387 = vmatprep.subr.mxu0 0.0
  %2388 = vmatpush1.msra.mxu0 0.0
  %2389 = vmatprep.subr.mxu0 0.0
  %2390 = vmatpush1.msra.mxu0 0.0
  %2391 = vmatprep.subr.mxu0 0.0
  %2392 = vmatpush1.msra.mxu0 0.0
  %2393 = vmatprep.subr.mxu0 0.0
  %2394 = vmatpush1.msra.mxu0 0.0
  %2395 = vmatprep.subr.mxu0 0.0
  %2396 = vmatpush1.msra.mxu0 0.0
  %2397 = vmatprep.subr.mxu0 0.0
  %2398 = vmatpush1.msra.mxu0 0.0
  %2399 = vmatprep.subr.mxu0 0.0
  %2400 = vmatpush1.msra.mxu0 0.0
  %2401 = vmatprep.subr.mxu0 0.0
  %2402 = vmatpush1.msra.mxu0 0.0
  %2403 = vmatprep.subr.mxu0 0.0
  %2404 = vmatpush1.msra.mxu0 0.0
  %2405 = vmatprep.subr.mxu0 0.0
  %2406 = vmatpush1.msra.mxu0 0.0
  %2407 = vmatprep.subr.mxu0 0.0
  %2408 = vmatpush1.msra.mxu0 0.0
  %2409 = vmatprep.subr.mxu0 0.0
  %2410 = vmatpush1.msra.mxu0 0.0
  %2411 = vmatprep.subr.mxu0 0.0
  %2412 = vmatpush1.msra.mxu0 0.0
  %2413 = vmatprep.subr.mxu0 0.0
  %2414 = vmatpush1.msra.mxu0 0.0
  %2415 = vmatprep.mubr.f32.mxu0 0.0
  %2416 = vmatmul.mubr.f32.gmra.mrb[0].mxu0 %v2343
  %v2417 = vpop.f32.mrb[0].mxu0
  %v2418 = vadd.f32 0.0, %v2417
  %v2419 = vpop.f32.mrb[0].mxu0
  %2420 = vmatprep.mubr.f32.mxu0 0.0
  %2421 = vmatmul.mubr.f32.gmra.mrb[0].mxu0 %v2346
  %v2422 = vpop.f32.mrb[0].mxu0
  %v2423 = vadd.f32 0.0, %v2422
  %v2424 = vpop.f32.mrb[0].mxu0
  %2425 = vmatprep.mubr.f32.mxu0 0.0
  %2426 = vmatmul.mubr.f32.gmra.mrb[0].mxu0 %v2349
  %v2427 = vpop.f32.mrb[0].mxu0
  %v2428 = vadd.f32 0.0, %v2427
  %v2429 = vpop.f32.mrb[0].mxu0
  %2430 = vdwg.mxu0
  %v2431 = vadd.f32 %v2327, %v2418
  %v2432 = vadd.f32 %v2328, %v2423
  %v2433 = vadd.f32 %v2329, %v2428
  %v2434 = vld [vmem:[#allocation8 + $0x2] sm:$0xff]
  %v2435 = vld [vmem:[#allocation8 + $0xa] sm:$0xff]
  %v2436 = vld [vmem:[#allocation8 + $0x12] sm:$0x3]
  %s2437 = scalar_lea.vmem %s39, 128
  %v2438 = vld [vmem:[%s2437] sm:$0xff]
  %v2439 = vld [vmem:[%s2437 + $0x8] sm:$0xff]
  %v2440 = vld [vmem:[%s2437 + $0x10] sm:$0xff]
  %v2441 = vld [vmem:[%s2437 + $0x18] sm:$0xff]
  %v2442 = vld [vmem:[%s2437 + $0x20] sm:$0xff]
  %v2443 = vld [vmem:[%s2437 + $0x28] sm:$0xff]
  %v2444 = vld [vmem:[%s2437 + $0x30] sm:$0xff]
  %v2445 = vld [vmem:[%s2437 + $0x38] sm:$0xff]
  %v2447 = vsel %vm131, %v2434, 0
  %v2450 = vsel %vm131, %v2435, 0
  %v2453 = vsel %vm131, %v2436, 0
  %2455 = vmatprep.subr.mxu0 0.0
  %2456 = vmatpush1.msra.mxu0 %v2438
  %2457 = vmatprep.subr.mxu0 0.0
  %2458 = vmatpush1.msra.mxu0 %v2439
  %2459 = vmatprep.subr.mxu0 0.0
  %2460 = vmatpush1.msra.mxu0 %v2440
  %2461 = vmatprep.subr.mxu0 0.0
  %2462 = vmatpush1.msra.mxu0 %v2441
  %2463 = vmatprep.subr.mxu0 0.0
  %2464 = vmatpush1.msra.mxu0 %v2442
  %2465 = vmatprep.subr.mxu0 0.0
  %2466 = vmatpush1.msra.mxu0 %v2443
  %2467 = vmatprep.subr.mxu0 0.0
  %2468 = vmatpush1.msra.mxu0 %v2444
  %2469 = vmatprep.subr.mxu0 0.0
  %2470 = vmatpush1.msra.mxu0 %v2445
  %2471 = vmatprep.subr.mxu0 0.0
  %2472 = vmatpush1.msra.mxu0 0.0
  %2473 = vmatprep.subr.mxu0 0.0
  %2474 = vmatpush1.msra.mxu0 0.0
  %2475 = vmatprep.subr.mxu0 0.0
  %2476 = vmatpush1.msra.mxu0 0.0
  %2477 = vmatprep.subr.mxu0 0.0
  %2478 = vmatpush1.msra.mxu0 0.0
  %2479 = vmatprep.subr.mxu0 0.0
  %2480 = vmatpush1.msra.mxu0 0.0
  %2481 = vmatprep.subr.mxu0 0.0
  %2482 = vmatpush1.msra.mxu0 0.0
  %2483 = vmatprep.subr.mxu0 0.0
  %2484 = vmatpush1.msra.mxu0 0.0
  %2485 = vmatprep.subr.mxu0 0.0
  %2486 = vmatpush1.msra.mxu0 0.0
  %2487 = vmatprep.subr.mxu0 0.0
  %2488 = vmatpush1.msra.mxu0 0.0
  %2489 = vmatprep.subr.mxu0 0.0
  %2490 = vmatpush1.msra.mxu0 0.0
  %2491 = vmatprep.subr.mxu0 0.0
  %2492 = vmatpush1.msra.mxu0 0.0
  %2493 = vmatprep.subr.mxu0 0.0
  %2494 = vmatpush1.msra.mxu0 0.0
  %2495 = vmatprep.subr.mxu0 0.0
  %2496 = vmatpush1.msra.mxu0 0.0
  %2497 = vmatprep.subr.mxu0 0.0
  %2498 = vmatpush1.msra.mxu0 0.0
  %2499 = vmatprep.subr.mxu0 0.0
  %2500 = vmatpush1.msra.mxu0 0.0
  %2501 = vmatprep.subr.mxu0 0.0
  %2502 = vmatpush1.msra.mxu0 0.0
  %2503 = vmatprep.subr.mxu0 0.0
  %2504 = vmatpush1.msra.mxu0 0.0
  %2505 = vmatprep.subr.mxu0 0.0
  %2506 = vmatpush1.msra.mxu0 0.0
  %2507 = vmatprep.subr.mxu0 0.0
  %2508 = vmatpush1.msra.mxu0 0.0
  %2509 = vmatprep.subr.mxu0 0.0
  %2510 = vmatpush1.msra.mxu0 0.0
  %2511 = vmatprep.subr.mxu0 0.0
  %2512 = vmatpush1.msra.mxu0 0.0
  %2513 = vmatprep.subr.mxu0 0.0
  %2514 = vmatpush1.msra.mxu0 0.0
  %2515 = vmatprep.subr.mxu0 0.0
  %2516 = vmatpush1.msra.mxu0 0.0
  %2517 = vmatprep.subr.mxu0 0.0
  %2518 = vmatpush1.msra.mxu0 0.0
  %2519 = vmatprep.mubr.f32.mxu0 0.0
  %2520 = vmatmul.mubr.f32.gmra.mrb[0].mxu0 %v2447
  %v2521 = vpop.f32.mrb[0].mxu0
  %v2522 = vadd.f32 0.0, %v2521
  %v2523 = vpop.f32.mrb[0].mxu0
  %2524 = vmatprep.mubr.f32.mxu0 0.0
  %2525 = vmatmul.mubr.f32.gmra.mrb[0].mxu0 %v2450
  %v2526 = vpop.f32.mrb[0].mxu0
  %v2527 = vadd.f32 0.0, %v2526
  %v2528 = vpop.f32.mrb[0].mxu0
  %2529 = vmatprep.mubr.f32.mxu0 0.0
  %2530 = vmatmul.mubr.f32.gmra.mrb[0].mxu0 %v2453
  %v2531 = vpop.f32.mrb[0].mxu0
  %v2532 = vadd.f32 0.0, %v2531
  %v2533 = vpop.f32.mrb[0].mxu0
  %2534 = vdwg.mxu0
  %v2535 = vadd.f32 %v2431, %v2522
  %v2536 = vadd.f32 %v2432, %v2527
  %v2537 = vadd.f32 %v2433, %v2532
  %v2538 = vld [vmem:[%s41] sm:$0x1]
  %v2540 = vlaneseq
  %v2541 = vshrl.u32 %v2540, 7
  %v2542 = vsub.s32 0, %v2541
  %v2543 = vrot.slane %v2538, %v2542
  %v2545 = vadd.f32 %v2535, %v2543
  %v2546 = vadd.f32 %v2536, %v2543
  %v2547 = vadd.f32 %v2537, %v2543
  %vm2548 = vcmp.ge.f32.partialorder %v2545, 0.0
  %vm2549 = vcmp.ge.f32.partialorder %v2546, 0.0
  %vm2550 = vcmp.ge.f32.partialorder %v2547, 0.0
  %v2551 = vmul.f32 %v2545, 0.2
  %v2552 = vmul.f32 %v2546, 0.2
  %v2553 = vmul.f32 %v2547, 0.2
  %v2554 = vsel %vm2548, %v2545, %v2551
  %v2555 = vsel %vm2549, %v2546, %v2552
  %v2556 = vsel %vm2550, %v2547, %v2553
  %v2557 = vld [vmem:[%s5] sm:$0xff]
  %v2558 = vld [vmem:[%s5 + $0x8] sm:$0xff]
  %v2559 = vld [vmem:[%s5 + $0x10] sm:$0x3]
  %2561 = vset.pattern.permute.xlu0 0
  %2562 = vperm.xlu0 %2561, %v2557
  %v2563 = vpop.permute.xlu0 %2562
  %2566 = vset.pattern.permute.xlu0 0
  %2567 = vperm.xlu0 %2566, %v2558
  %v2568 = vpop.permute.xlu0 %2567
  %2571 = vset.pattern.permute.xlu0 0
  %2572 = vperm.xlu0 %2571, %v2559
  %v2573 = vpop.permute.xlu0 %2572
  %v2575 = vmul.f32 %v2554, %v2563
  %v2576 = vmul.f32 %v2555, %v2568
  %v2577 = vmul.f32 %v2556, %v2573
  %v2578 = vld [vmem:[%s23] sm:$0xff]
  %v2579 = vld [vmem:[%s23 + $0x8] sm:$0xff]
  %v2580 = vld [vmem:[%s23 + $0x10] sm:$0xff]
  %v2581 = vld [vmem:[%s23 + $0x18] sm:$0xff]
  %v2582 = vld [vmem:[%s23 + $0x20] sm:$0x3]
  %v2584 = vsel %vm1249, %v2578, 0
  %v2587 = vsel %vm1249, %v2579, 0
  %v2590 = vsel %vm1249, %v2580, 0
  %v2593 = vsel %vm1249, %v2581, 0
  %v2596 = vsel %vm1249, %v2582, 0
  %v2599 = vsel %vm610, %v2577, 0
  %2601 = vmatprep.subr.mxu0 0.0
  %2602 = vmatpush1.msra.mxu0 %v2575
  %2603 = vmatprep.subr.mxu0 0.0
  %2604 = vmatpush1.msra.mxu0 %v2576
  %2605 = vmatprep.subr.mxu0 0.0
  %2606 = vmatpush1.msra.mxu0 %v2599
  %2607 = vmatprep.subr.mxu0 0.0
  %2608 = vmatpush1.msra.mxu0 0.0
  %2609 = vmatprep.subr.mxu0 0.0
  %2610 = vmatpush1.msra.mxu0 0.0
  %2611 = vmatprep.subr.mxu0 0.0
  %2612 = vmatpush1.msra.mxu0 0.0
  %2613 = vmatprep.subr.mxu0 0.0
  %2614 = vmatpush1.msra.mxu0 0.0
  %2615 = vmatprep.subr.mxu0 0.0
  %2616 = vmatpush1.msra.mxu0 0.0
  %2617 = vmatprep.subr.mxu0 0.0
  %2618 = vmatpush1.msra.mxu0 0.0
  %2619 = vmatprep.subr.mxu0 0.0
  %2620 = vmatpush1.msra.mxu0 0.0
  %2621 = vmatprep.subr.mxu0 0.0
  %2622 = vmatpush1.msra.mxu0 0.0
  %2623 = vmatprep.subr.mxu0 0.0
  %2624 = vmatpush1.msra.mxu0 0.0
  %2625 = vmatprep.subr.mxu0 0.0
  %2626 = vmatpush1.msra.mxu0 0.0
  %2627 = vmatprep.subr.mxu0 0.0
  %2628 = vmatpush1.msra.mxu0 0.0
  %2629 = vmatprep.subr.mxu0 0.0
  %2630 = vmatpush1.msra.mxu0 0.0
  %2631 = vmatprep.subr.mxu0 0.0
  %2632 = vmatpush1.msra.mxu0 0.0
  %2633 = vmatprep.subr.mxu0 0.0
  %2634 = vmatpush1.msra.mxu0 0.0
  %2635 = vmatprep.subr.mxu0 0.0
  %2636 = vmatpush1.msra.mxu0 0.0
  %2637 = vmatprep.subr.mxu0 0.0
  %2638 = vmatpush1.msra.mxu0 0.0
  %2639 = vmatprep.subr.mxu0 0.0
  %2640 = vmatpush1.msra.mxu0 0.0
  %2641 = vmatprep.subr.mxu0 0.0
  %2642 = vmatpush1.msra.mxu0 0.0
  %2643 = vmatprep.subr.mxu0 0.0
  %2644 = vmatpush1.msra.mxu0 0.0
  %2645 = vmatprep.subr.mxu0 0.0
  %2646 = vmatpush1.msra.mxu0 0.0
  %2647 = vmatprep.subr.mxu0 0.0
  %2648 = vmatpush1.msra.mxu0 0.0
  %2649 = vmatprep.subr.mxu0 0.0
  %2650 = vmatpush1.msra.mxu0 0.0
  %2651 = vmatprep.subr.mxu0 0.0
  %2652 = vmatpush1.msra.mxu0 0.0
  %2653 = vmatprep.subr.mxu0 0.0
  %2654 = vmatpush1.msra.mxu0 0.0
  %2655 = vmatprep.subr.mxu0 0.0
  %2656 = vmatpush1.msra.mxu0 0.0
  %2657 = vmatprep.subr.mxu0 0.0
  %2658 = vmatpush1.msra.mxu0 0.0
  %2659 = vmatprep.subr.mxu0 0.0
  %2660 = vmatpush1.msra.mxu0 0.0
  %2661 = vmatprep.subr.mxu0 0.0
  %2662 = vmatpush1.msra.mxu0 0.0
  %2663 = vmatprep.subr.mxu0 0.0
  %2664 = vmatpush1.msra.mxu0 0.0
  %2665 = vmatprep.mubr.f32.mxu0 0.0
  %2666 = vmatmul.mubr.f32.gmra.mrb[0].mxu0 %v2584
  %v2667 = vpop.f32.mrb[0].mxu0
  %v2668 = vadd.f32 0.0, %v2667
  %v2669 = vpop.f32.mrb[0].mxu0
  %2670 = vmatprep.mubr.f32.mxu0 0.0
  %2671 = vmatmul.mubr.f32.gmra.mrb[0].mxu0 %v2587
  %v2672 = vpop.f32.mrb[0].mxu0
  %v2673 = vadd.f32 0.0, %v2672
  %v2674 = vpop.f32.mrb[0].mxu0
  %2675 = vmatprep.mubr.f32.mxu0 0.0
  %2676 = vmatmul.mubr.f32.gmra.mrb[0].mxu0 %v2590
  %v2677 = vpop.f32.mrb[0].mxu0
  %v2678 = vadd.f32 0.0, %v2677
  %v2679 = vpop.f32.mrb[0].mxu0
  %2680 = vmatprep.mubr.f32.mxu0 0.0
  %2681 = vmatmul.mubr.f32.gmra.mrb[0].mxu0 %v2593
  %v2682 = vpop.f32.mrb[0].mxu0
  %v2683 = vadd.f32 0.0, %v2682
  %v2684 = vpop.f32.mrb[0].mxu0
  %2685 = vmatprep.mubr.f32.mxu0 0.0
  %2686 = vmatmul.mubr.f32.gmra.mrb[0].mxu0 %v2596
  %v2687 = vpop.f32.mrb[0].mxu0
  %v2688 = vadd.f32 0.0, %v2687
  %v2689 = vpop.f32.mrb[0].mxu0
  %2690 = vdwg.mxu0
  %2691 = vst.msk [vmem:[#allocation3 + $0x1] sm:$0xff] %vm131, %v2668
  %2692 = vst.msk [vmem:[#allocation3 + $0x9] sm:$0xff] %vm131, %v2673
  %2693 = vst.msk [vmem:[#allocation3 + $0x11] sm:$0xff] %vm131, %v2678
  %2694 = vst.msk [vmem:[#allocation3 + $0x19] sm:$0xff] %vm131, %v2683
  %2695 = vst.msk [vmem:[#allocation3 + $0x21] sm:$0x3] %vm891, %v2688
  %v2696 = vld [vmem:[#allocation2] sm:$0xff]
  %v2697 = vld [vmem:[#allocation2 + $0x8] sm:$0xff]
  %v2698 = vld [vmem:[#allocation2 + $0x10] sm:$0xff]
  %v2699 = vld [vmem:[#allocation2 + $0x18] sm:$0xff]
  %v2700 = vld [vmem:[#allocation2 + $0x20] sm:$0x3]
  %v2701 = vld [vmem:[%s43] sm:$0xff]
  %v2702 = vld [vmem:[%s43 + $0x8] sm:$0xff]
  %v2703 = vld [vmem:[%s43 + $0x10] sm:$0xff]
  %v2704 = vld [vmem:[%s43 + $0x18] sm:$0xff]
  %v2705 = vld [vmem:[%s43 + $0x20] sm:$0xff]
  %v2706 = vld [vmem:[%s43 + $0x28] sm:$0xff]
  %v2707 = vld [vmem:[%s43 + $0x30] sm:$0xff]
  %v2708 = vld [vmem:[%s43 + $0x38] sm:$0xff]
  %v2709 = vld [vmem:[%s43 + $0x40] sm:$0xff]
  %v2710 = vld [vmem:[%s43 + $0x48] sm:$0xff]
  %v2711 = vld [vmem:[%s43 + $0x50] sm:$0xff]
  %v2712 = vld [vmem:[%s43 + $0x58] sm:$0xff]
  %v2713 = vld [vmem:[%s43 + $0x60] sm:$0xff]
  %v2714 = vld [vmem:[%s43 + $0x68] sm:$0xff]
  %v2715 = vld [vmem:[%s43 + $0x70] sm:$0xff]
  %v2716 = vld [vmem:[%s43 + $0x78] sm:$0xff]
  %v2717 = vld [vmem:[#allocation2 + $0x1] sm:$0xff]
  %v2718 = vld [vmem:[#allocation2 + $0x9] sm:$0xff]
  %v2719 = vld [vmem:[#allocation2 + $0x11] sm:$0xff]
  %v2720 = vld [vmem:[#allocation2 + $0x19] sm:$0xff]
  %v2721 = vld [vmem:[#allocation2 + $0x21] sm:$0x3]
  %s2722 = scalar_lea.vmem %s43, 128
  %v2723 = vld [vmem:[%s2722] sm:$0xff]
  %v2724 = vld [vmem:[%s2722 + $0x8] sm:$0xff]
  %v2725 = vld [vmem:[%s2722 + $0x10] sm:$0xff]
  %v2726 = vld [vmem:[%s2722 + $0x18] sm:$0xff]
  %v2727 = vld [vmem:[%s2722 + $0x20] sm:$0xff]
  %v2728 = vld [vmem:[%s2722 + $0x28] sm:$0xff]
  %v2729 = vld [vmem:[%s2722 + $0x30] sm:$0xff]
  %v2730 = vld [vmem:[%s2722 + $0x38] sm:$0xff]
  %v2731 = vld [vmem:[%s2722 + $0x40] sm:$0xff]
  %v2732 = vld [vmem:[%s2722 + $0x48] sm:$0xff]
  %v2733 = vld [vmem:[%s2722 + $0x50] sm:$0xff]
  %v2734 = vld [vmem:[%s2722 + $0x58] sm:$0xff]
  %v2735 = vld [vmem:[%s2722 + $0x60] sm:$0xff]
  %v2736 = vld [vmem:[%s2722 + $0x68] sm:$0xff]
  %v2737 = vld [vmem:[%s2722 + $0x70] sm:$0xff]
  %v2738 = vld [vmem:[%s2722 + $0x78] sm:$0xff]
  %2739 = vmatprep.subr.mxu0 0.0
  %2740 = vmatpush1.msra.mxu0 %v2723
  %2741 = vmatprep.subr.mxu0 0.0
  %2742 = vmatpush1.msra.mxu0 %v2724
  %2743 = vmatprep.subr.mxu0 0.0
  %2744 = vmatpush1.msra.mxu0 %v2725
  %2745 = vmatprep.subr.mxu0 0.0
  %2746 = vmatpush1.msra.mxu0 %v2726
  %2747 = vmatprep.subr.mxu0 0.0
  %2748 = vmatpush1.msra.mxu0 %v2727
  %2749 = vmatprep.subr.mxu0 0.0
  %2750 = vmatpush1.msra.mxu0 %v2728
  %2751 = vmatprep.subr.mxu0 0.0
  %2752 = vmatpush1.msra.mxu0 %v2729
  %2753 = vmatprep.subr.mxu0 0.0
  %2754 = vmatpush1.msra.mxu0 %v2730
  %2755 = vmatprep.subr.mxu0 0.0
  %2756 = vmatpush1.msra.mxu0 %v2731
  %2757 = vmatprep.subr.mxu0 0.0
  %2758 = vmatpush1.msra.mxu0 %v2732
  %2759 = vmatprep.subr.mxu0 0.0
  %2760 = vmatpush1.msra.mxu0 %v2733
  %2761 = vmatprep.subr.mxu0 0.0
  %2762 = vmatpush1.msra.mxu0 %v2734
  %2763 = vmatprep.subr.mxu0 0.0
  %2764 = vmatpush1.msra.mxu0 %v2735
  %2765 = vmatprep.subr.mxu0 0.0
  %2766 = vmatpush1.msra.mxu0 %v2736
  %2767 = vmatprep.subr.mxu0 0.0
  %2768 = vmatpush1.msra.mxu0 %v2737
  %2769 = vmatprep.subr.mxu0 0.0
  %2770 = vmatpush1.msra.mxu0 %v2738
  %2771 = vmatprep.subr.mxu0 0.0
  %2772 = vmatpush1.msra.mxu0 0.0
  %2773 = vmatprep.subr.mxu0 0.0
  %2774 = vmatpush1.msra.mxu0 0.0
  %2775 = vmatprep.subr.mxu0 0.0
  %2776 = vmatpush1.msra.mxu0 0.0
  %2777 = vmatprep.subr.mxu0 0.0
  %2778 = vmatpush1.msra.mxu0 0.0
  %2779 = vmatprep.subr.mxu0 0.0
  %2780 = vmatpush1.msra.mxu0 0.0
  %2781 = vmatprep.subr.mxu0 0.0
  %2782 = vmatpush1.msra.mxu0 0.0
  %2783 = vmatprep.subr.mxu0 0.0
  %2784 = vmatpush1.msra.mxu0 0.0
  %2785 = vmatprep.subr.mxu0 0.0
  %2786 = vmatpush1.msra.mxu0 0.0
  %2787 = vmatprep.subr.mxu0 0.0
  %2788 = vmatpush1.msra.mxu0 0.0
  %2789 = vmatprep.subr.mxu0 0.0
  %2790 = vmatpush1.msra.mxu0 0.0
  %2791 = vmatprep.subr.mxu0 0.0
  %2792 = vmatpush1.msra.mxu0 0.0
  %2793 = vmatprep.subr.mxu0 0.0
  %2794 = vmatpush1.msra.mxu0 0.0
  %2795 = vmatprep.subr.mxu0 0.0
  %2796 = vmatpush1.msra.mxu0 0.0
  %2797 = vmatprep.subr.mxu0 0.0
  %2798 = vmatpush1.msra.mxu0 0.0
  %2799 = vmatprep.subr.mxu0 0.0
  %2800 = vmatpush1.msra.mxu0 0.0
  %2801 = vmatprep.subr.mxu0 0.0
  %2802 = vmatpush1.msra.mxu0 0.0
  %2803 = vmatprep.mubr.f32.mxu0 0.0
  %2804 = vmatmul.mubr.f32.gmra.mrb[0].mxu0 %v2717
  %v2805 = vpop.f32.mrb[0].mxu0
  %v2806 = vadd.f32 0.0, %v2805
  %v2807 = vpop.f32.mrb[0].mxu0
  %2808 = vmatprep.mubr.f32.mxu0 0.0
  %2809 = vmatmul.mubr.f32.gmra.mrb[0].mxu0 %v2718
  %v2810 = vpop.f32.mrb[0].mxu0
  %v2811 = vadd.f32 0.0, %v2810
  %v2812 = vpop.f32.mrb[0].mxu0
  %2813 = vmatprep.mubr.f32.mxu0 0.0
  %2814 = vmatmul.mubr.f32.gmra.mrb[0].mxu0 %v2719
  %v2815 = vpop.f32.mrb[0].mxu0
  %v2816 = vadd.f32 0.0, %v2815
  %v2817 = vpop.f32.mrb[0].mxu0
  %2818 = vmatprep.mubr.f32.mxu0 0.0
  %2819 = vmatmul.mubr.f32.gmra.mrb[0].mxu0 %v2720
  %v2820 = vpop.f32.mrb[0].mxu0
  %v2821 = vadd.f32 0.0, %v2820
  %v2822 = vpop.f32.mrb[0].mxu0
  %2823 = vmatprep.mubr.f32.mxu0 0.0
  %2824 = vmatmul.mubr.f32.gmra.mrb[0].mxu0 %v2721
  %v2825 = vpop.f32.mrb[0].mxu0
  %v2826 = vadd.f32 0.0, %v2825
  %v2827 = vpop.f32.mrb[0].mxu0
  %2828 = vdwg.mxu0
  %2829 = vmatprep.subr.mxu0 0.0
  %2830 = vmatpush1.msra.mxu0 %v2701
  %2831 = vmatprep.subr.mxu0 0.0
  %2832 = vmatpush1.msra.mxu0 %v2702
  %2833 = vmatprep.subr.mxu0 0.0
  %2834 = vmatpush1.msra.mxu0 %v2703
  %2835 = vmatprep.subr.mxu0 0.0
  %2836 = vmatpush1.msra.mxu0 %v2704
  %2837 = vmatprep.subr.mxu0 0.0
  %2838 = vmatpush1.msra.mxu0 %v2705
  %2839 = vmatprep.subr.mxu0 0.0
  %2840 = vmatpush1.msra.mxu0 %v2706
  %2841 = vmatprep.subr.mxu0 0.0
  %2842 = vmatpush1.msra.mxu0 %v2707
  %2843 = vmatprep.subr.mxu0 0.0
  %2844 = vmatpush1.msra.mxu0 %v2708
  %2845 = vmatprep.subr.mxu0 0.0
  %2846 = vmatpush1.msra.mxu0 %v2709
  %2847 = vmatprep.subr.mxu0 0.0
  %2848 = vmatpush1.msra.mxu0 %v2710
  %2849 = vmatprep.subr.mxu0 0.0
  %2850 = vmatpush1.msra.mxu0 %v2711
  %2851 = vmatprep.subr.mxu0 0.0
  %2852 = vmatpush1.msra.mxu0 %v2712
  %2853 = vmatprep.subr.mxu0 0.0
  %2854 = vmatpush1.msra.mxu0 %v2713
  %2855 = vmatprep.subr.mxu0 0.0
  %2856 = vmatpush1.msra.mxu0 %v2714
  %2857 = vmatprep.subr.mxu0 0.0
  %2858 = vmatpush1.msra.mxu0 %v2715
  %2859 = vmatprep.subr.mxu0 0.0
  %2860 = vmatpush1.msra.mxu0 %v2716
  %2861 = vmatprep.subr.mxu0 0.0
  %2862 = vmatpush1.msra.mxu0 0.0
  %2863 = vmatprep.subr.mxu0 0.0
  %2864 = vmatpush1.msra.mxu0 0.0
  %2865 = vmatprep.subr.mxu0 0.0
  %2866 = vmatpush1.msra.mxu0 0.0
  %2867 = vmatprep.subr.mxu0 0.0
  %2868 = vmatpush1.msra.mxu0 0.0
  %2869 = vmatprep.subr.mxu0 0.0
  %2870 = vmatpush1.msra.mxu0 0.0
  %2871 = vmatprep.subr.mxu0 0.0
  %2872 = vmatpush1.msra.mxu0 0.0
  %2873 = vmatprep.subr.mxu0 0.0
  %2874 = vmatpush1.msra.mxu0 0.0
  %2875 = vmatprep.subr.mxu0 0.0
  %2876 = vmatpush1.msra.mxu0 0.0
  %2877 = vmatprep.subr.mxu0 0.0
  %2878 = vmatpush1.msra.mxu0 0.0
  %2879 = vmatprep.subr.mxu0 0.0
  %2880 = vmatpush1.msra.mxu0 0.0
  %2881 = vmatprep.subr.mxu0 0.0
  %2882 = vmatpush1.msra.mxu0 0.0
  %2883 = vmatprep.subr.mxu0 0.0
  %2884 = vmatpush1.msra.mxu0 0.0
  %2885 = vmatprep.subr.mxu0 0.0
  %2886 = vmatpush1.msra.mxu0 0.0
  %2887 = vmatprep.subr.mxu0 0.0
  %2888 = vmatpush1.msra.mxu0 0.0
  %2889 = vmatprep.subr.mxu0 0.0
  %2890 = vmatpush1.msra.mxu0 0.0
  %2891 = vmatprep.subr.mxu0 0.0
  %2892 = vmatpush1.msra.mxu0 0.0
  %2893 = vmatprep.mubr.f32.mxu0 0.0
  %2894 = vmatmul.mubr.f32.gmra.mrb[0].mxu0 %v2696
  %v2895 = vpop.f32.mrb[0].mxu0
  %v2896 = vadd.f32 %v2806, %v2895
  %v2897 = vpop.f32.mrb[0].mxu0
  %2898 = vmatprep.mubr.f32.mxu0 0.0
  %2899 = vmatmul.mubr.f32.gmra.mrb[0].mxu0 %v2697
  %v2900 = vpop.f32.mrb[0].mxu0
  %v2901 = vadd.f32 %v2811, %v2900
  %v2902 = vpop.f32.mrb[0].mxu0
  %2903 = vmatprep.mubr.f32.mxu0 0.0
  %2904 = vmatmul.mubr.f32.gmra.mrb[0].mxu0 %v2698
  %v2905 = vpop.f32.mrb[0].mxu0
  %v2906 = vadd.f32 %v2816, %v2905
  %v2907 = vpop.f32.mrb[0].mxu0
  %2908 = vmatprep.mubr.f32.mxu0 0.0
  %2909 = vmatmul.mubr.f32.gmra.mrb[0].mxu0 %v2699
  %v2910 = vpop.f32.mrb[0].mxu0
  %v2911 = vadd.f32 %v2821, %v2910
  %v2912 = vpop.f32.mrb[0].mxu0
  %2913 = vmatprep.mubr.f32.mxu0 0.0
  %2914 = vmatmul.mubr.f32.gmra.mrb[0].mxu0 %v2700
  %v2915 = vpop.f32.mrb[0].mxu0
  %v2916 = vadd.f32 %v2826, %v2915
  %v2917 = vpop.f32.mrb[0].mxu0
  %2918 = vdwg.mxu0
  %v2919 = vld [vmem:[#allocation2 + $0x2] sm:$0xff]
  %v2920 = vld [vmem:[#allocation2 + $0xa] sm:$0xff]
  %v2921 = vld [vmem:[#allocation2 + $0x12] sm:$0xff]
  %v2922 = vld [vmem:[#allocation2 + $0x1a] sm:$0xff]
  %v2923 = vld [vmem:[#allocation2 + $0x22] sm:$0x3]
  %s2924 = scalar_lea.vmem %s43, 256
  %v2925 = vld [vmem:[%s2924] sm:$0xff]
  %v2926 = vld [vmem:[%s2924 + $0x8] sm:$0xff]
  %v2927 = vld [vmem:[%s2924 + $0x10] sm:$0xff]
  %v2928 = vld [vmem:[%s2924 + $0x18] sm:$0xff]
  %v2929 = vld [vmem:[%s2924 + $0x20] sm:$0xff]
  %v2930 = vld [vmem:[%s2924 + $0x28] sm:$0xff]
  %v2931 = vld [vmem:[%s2924 + $0x30] sm:$0xff]
  %v2932 = vld [vmem:[%s2924 + $0x38] sm:$0xff]
  %v2933 = vld [vmem:[%s2924 + $0x40] sm:$0xff]
  %v2934 = vld [vmem:[%s2924 + $0x48] sm:$0xff]
  %v2935 = vld [vmem:[%s2924 + $0x50] sm:$0xff]
  %v2936 = vld [vmem:[%s2924 + $0x58] sm:$0xff]
  %v2937 = vld [vmem:[%s2924 + $0x60] sm:$0xff]
  %v2938 = vld [vmem:[%s2924 + $0x68] sm:$0xff]
  %v2939 = vld [vmem:[%s2924 + $0x70] sm:$0xff]
  %v2940 = vld [vmem:[%s2924 + $0x78] sm:$0xff]
  %2941 = vmatprep.subr.mxu0 0.0
  %2942 = vmatpush1.msra.mxu0 %v2925
  %2943 = vmatprep.subr.mxu0 0.0
  %2944 = vmatpush1.msra.mxu0 %v2926
  %2945 = vmatprep.subr.mxu0 0.0
  %2946 = vmatpush1.msra.mxu0 %v2927
  %2947 = vmatprep.subr.mxu0 0.0
  %2948 = vmatpush1.msra.mxu0 %v2928
  %2949 = vmatprep.subr.mxu0 0.0
  %2950 = vmatpush1.msra.mxu0 %v2929
  %2951 = vmatprep.subr.mxu0 0.0
  %2952 = vmatpush1.msra.mxu0 %v2930
  %2953 = vmatprep.subr.mxu0 0.0
  %2954 = vmatpush1.msra.mxu0 %v2931
  %2955 = vmatprep.subr.mxu0 0.0
  %2956 = vmatpush1.msra.mxu0 %v2932
  %2957 = vmatprep.subr.mxu0 0.0
  %2958 = vmatpush1.msra.mxu0 %v2933
  %2959 = vmatprep.subr.mxu0 0.0
  %2960 = vmatpush1.msra.mxu0 %v2934
  %2961 = vmatprep.subr.mxu0 0.0
  %2962 = vmatpush1.msra.mxu0 %v2935
  %2963 = vmatprep.subr.mxu0 0.0
  %2964 = vmatpush1.msra.mxu0 %v2936
  %2965 = vmatprep.subr.mxu0 0.0
  %2966 = vmatpush1.msra.mxu0 %v2937
  %2967 = vmatprep.subr.mxu0 0.0
  %2968 = vmatpush1.msra.mxu0 %v2938
  %2969 = vmatprep.subr.mxu0 0.0
  %2970 = vmatpush1.msra.mxu0 %v2939
  %2971 = vmatprep.subr.mxu0 0.0
  %2972 = vmatpush1.msra.mxu0 %v2940
  %2973 = vmatprep.subr.mxu0 0.0
  %2974 = vmatpush1.msra.mxu0 0.0
  %2975 = vmatprep.subr.mxu0 0.0
  %2976 = vmatpush1.msra.mxu0 0.0
  %2977 = vmatprep.subr.mxu0 0.0
  %2978 = vmatpush1.msra.mxu0 0.0
  %2979 = vmatprep.subr.mxu0 0.0
  %2980 = vmatpush1.msra.mxu0 0.0
  %2981 = vmatprep.subr.mxu0 0.0
  %2982 = vmatpush1.msra.mxu0 0.0
  %2983 = vmatprep.subr.mxu0 0.0
  %2984 = vmatpush1.msra.mxu0 0.0
  %2985 = vmatprep.subr.mxu0 0.0
  %2986 = vmatpush1.msra.mxu0 0.0
  %2987 = vmatprep.subr.mxu0 0.0
  %2988 = vmatpush1.msra.mxu0 0.0
  %2989 = vmatprep.subr.mxu0 0.0
  %2990 = vmatpush1.msra.mxu0 0.0
  %2991 = vmatprep.subr.mxu0 0.0
  %2992 = vmatpush1.msra.mxu0 0.0
  %2993 = vmatprep.subr.mxu0 0.0
  %2994 = vmatpush1.msra.mxu0 0.0
  %2995 = vmatprep.subr.mxu0 0.0
  %2996 = vmatpush1.msra.mxu0 0.0
  %2997 = vmatprep.subr.mxu0 0.0
  %2998 = vmatpush1.msra.mxu0 0.0
  %2999 = vmatprep.subr.mxu0 0.0
  %3000 = vmatpush1.msra.mxu0 0.0
  %3001 = vmatprep.subr.mxu0 0.0
  %3002 = vmatpush1.msra.mxu0 0.0
  %3003 = vmatprep.subr.mxu0 0.0
  %3004 = vmatpush1.msra.mxu0 0.0
  %3005 = vmatprep.mubr.f32.mxu0 0.0
  %3006 = vmatmul.mubr.f32.gmra.mrb[0].mxu0 %v2919
  %v3007 = vpop.f32.mrb[0].mxu0
  %v3008 = vadd.f32 0.0, %v3007
  %v3009 = vpop.f32.mrb[0].mxu0
  %3010 = vmatprep.mubr.f32.mxu0 0.0
  %3011 = vmatmul.mubr.f32.gmra.mrb[0].mxu0 %v2920
  %v3012 = vpop.f32.mrb[0].mxu0
  %v3013 = vadd.f32 0.0, %v3012
  %v3014 = vpop.f32.mrb[0].mxu0
  %3015 = vmatprep.mubr.f32.mxu0 0.0
  %3016 = vmatmul.mubr.f32.gmra.mrb[0].mxu0 %v2921
  %v3017 = vpop.f32.mrb[0].mxu0
  %v3018 = vadd.f32 0.0, %v3017
  %v3019 = vpop.f32.mrb[0].mxu0
  %3020 = vmatprep.mubr.f32.mxu0 0.0
  %3021 = vmatmul.mubr.f32.gmra.mrb[0].mxu0 %v2922
  %v3022 = vpop.f32.mrb[0].mxu0
  %v3023 = vadd.f32 0.0, %v3022
  %v3024 = vpop.f32.mrb[0].mxu0
  %3025 = vmatprep.mubr.f32.mxu0 0.0
  %3026 = vmatmul.mubr.f32.gmra.mrb[0].mxu0 %v2923
  %v3027 = vpop.f32.mrb[0].mxu0
  %v3028 = vadd.f32 0.0, %v3027
  %v3029 = vpop.f32.mrb[0].mxu0
  %3030 = vdwg.mxu0
  %v3031 = vadd.f32 %v2896, %v3008
  %v3032 = vadd.f32 %v2901, %v3013
  %v3033 = vadd.f32 %v2906, %v3018
  %v3034 = vadd.f32 %v2911, %v3023
  %v3035 = vadd.f32 %v2916, %v3028
  %v3036 = vld [vmem:[#allocation3] sm:$0xff]
  %v3037 = vld [vmem:[#allocation3 + $0x8] sm:$0xff]
  %v3038 = vld [vmem:[#allocation3 + $0x10] sm:$0xff]
  %v3039 = vld [vmem:[#allocation3 + $0x18] sm:$0xff]
  %v3040 = vld [vmem:[#allocation3 + $0x20] sm:$0x3]
  %v3041 = vld [vmem:[%s45] sm:$0xff]
  %v3042 = vld [vmem:[%s45 + $0x8] sm:$0xff]
  %v3043 = vld [vmem:[%s45 + $0x10] sm:$0xff]
  %v3044 = vld [vmem:[%s45 + $0x18] sm:$0xff]
  %v3045 = vld [vmem:[%s45 + $0x20] sm:$0xff]
  %v3046 = vld [vmem:[%s45 + $0x28] sm:$0xff]
  %v3047 = vld [vmem:[%s45 + $0x30] sm:$0xff]
  %v3048 = vld [vmem:[%s45 + $0x38] sm:$0xff]
  %v3050 = vsel %vm131, %v3036, 0
  %v3053 = vsel %vm131, %v3037, 0
  %v3056 = vsel %vm131, %v3038, 0
  %v3059 = vsel %vm131, %v3039, 0
  %v3062 = vsel %vm131, %v3040, 0
  %3064 = vmatprep.subr.mxu0 0.0
  %3065 = vmatpush1.msra.mxu0 %v3041
  %3066 = vmatprep.subr.mxu0 0.0
  %3067 = vmatpush1.msra.mxu0 %v3042
  %3068 = vmatprep.subr.mxu0 0.0
  %3069 = vmatpush1.msra.mxu0 %v3043
  %3070 = vmatprep.subr.mxu0 0.0
  %3071 = vmatpush1.msra.mxu0 %v3044
  %3072 = vmatprep.subr.mxu0 0.0
  %3073 = vmatpush1.msra.mxu0 %v3045
  %3074 = vmatprep.subr.mxu0 0.0
  %3075 = vmatpush1.msra.mxu0 %v3046
  %3076 = vmatprep.subr.mxu0 0.0
  %3077 = vmatpush1.msra.mxu0 %v3047
  %3078 = vmatprep.subr.mxu0 0.0
  %3079 = vmatpush1.msra.mxu0 %v3048
  %3080 = vmatprep.subr.mxu0 0.0
  %3081 = vmatpush1.msra.mxu0 0.0
  %3082 = vmatprep.subr.mxu0 0.0
  %3083 = vmatpush1.msra.mxu0 0.0
  %3084 = vmatprep.subr.mxu0 0.0
  %3085 = vmatpush1.msra.mxu0 0.0
  %3086 = vmatprep.subr.mxu0 0.0
  %3087 = vmatpush1.msra.mxu0 0.0
  %3088 = vmatprep.subr.mxu0 0.0
  %3089 = vmatpush1.msra.mxu0 0.0
  %3090 = vmatprep.subr.mxu0 0.0
  %3091 = vmatpush1.msra.mxu0 0.0
  %3092 = vmatprep.subr.mxu0 0.0
  %3093 = vmatpush1.msra.mxu0 0.0
  %3094 = vmatprep.subr.mxu0 0.0
  %3095 = vmatpush1.msra.mxu0 0.0
  %3096 = vmatprep.subr.mxu0 0.0
  %3097 = vmatpush1.msra.mxu0 0.0
  %3098 = vmatprep.subr.mxu0 0.0
  %3099 = vmatpush1.msra.mxu0 0.0
  %3100 = vmatprep.subr.mxu0 0.0
  %3101 = vmatpush1.msra.mxu0 0.0
  %3102 = vmatprep.subr.mxu0 0.0
  %3103 = vmatpush1.msra.mxu0 0.0
  %3104 = vmatprep.subr.mxu0 0.0
  %3105 = vmatpush1.msra.mxu0 0.0
  %3106 = vmatprep.subr.mxu0 0.0
  %3107 = vmatpush1.msra.mxu0 0.0
  %3108 = vmatprep.subr.mxu0 0.0
  %3109 = vmatpush1.msra.mxu0 0.0
  %3110 = vmatprep.subr.mxu0 0.0
  %3111 = vmatpush1.msra.mxu0 0.0
  %3112 = vmatprep.subr.mxu0 0.0
  %3113 = vmatpush1.msra.mxu0 0.0
  %3114 = vmatprep.subr.mxu0 0.0
  %3115 = vmatpush1.msra.mxu0 0.0
  %3116 = vmatprep.subr.mxu0 0.0
  %3117 = vmatpush1.msra.mxu0 0.0
  %3118 = vmatprep.subr.mxu0 0.0
  %3119 = vmatpush1.msra.mxu0 0.0
  %3120 = vmatprep.subr.mxu0 0.0
  %3121 = vmatpush1.msra.mxu0 0.0
  %3122 = vmatprep.subr.mxu0 0.0
  %3123 = vmatpush1.msra.mxu0 0.0
  %3124 = vmatprep.subr.mxu0 0.0
  %3125 = vmatpush1.msra.mxu0 0.0
  %3126 = vmatprep.subr.mxu0 0.0
  %3127 = vmatpush1.msra.mxu0 0.0
  %3128 = vmatprep.mubr.f32.mxu0 0.0
  %3129 = vmatmul.mubr.f32.gmra.mrb[0].mxu0 %v3050
  %v3130 = vpop.f32.mrb[0].mxu0
  %v3131 = vadd.f32 0.0, %v3130
  %v3132 = vpop.f32.mrb[0].mxu0
  %3133 = vmatprep.mubr.f32.mxu0 0.0
  %3134 = vmatmul.mubr.f32.gmra.mrb[0].mxu0 %v3053
  %v3135 = vpop.f32.mrb[0].mxu0
  %v3136 = vadd.f32 0.0, %v3135
  %v3137 = vpop.f32.mrb[0].mxu0
  %3138 = vmatprep.mubr.f32.mxu0 0.0
  %3139 = vmatmul.mubr.f32.gmra.mrb[0].mxu0 %v3056
  %v3140 = vpop.f32.mrb[0].mxu0
  %v3141 = vadd.f32 0.0, %v3140
  %v3142 = vpop.f32.mrb[0].mxu0
  %3143 = vmatprep.mubr.f32.mxu0 0.0
  %3144 = vmatmul.mubr.f32.gmra.mrb[0].mxu0 %v3059
  %v3145 = vpop.f32.mrb[0].mxu0
  %v3146 = vadd.f32 0.0, %v3145
  %v3147 = vpop.f32.mrb[0].mxu0
  %3148 = vmatprep.mubr.f32.mxu0 0.0
  %3149 = vmatmul.mubr.f32.gmra.mrb[0].mxu0 %v3062
  %v3150 = vpop.f32.mrb[0].mxu0
  %v3151 = vadd.f32 0.0, %v3150
  %v3152 = vpop.f32.mrb[0].mxu0
  %3153 = vdwg.mxu0
  %v3154 = vadd.f32 %v3031, %v3131
  %v3155 = vadd.f32 %v3032, %v3136
  %v3156 = vadd.f32 %v3033, %v3141
  %v3157 = vadd.f32 %v3034, %v3146
  %v3158 = vadd.f32 %v3035, %v3151
  %v3159 = vld [vmem:[#allocation3 + $0x1] sm:$0xff]
  %v3160 = vld [vmem:[#allocation3 + $0x9] sm:$0xff]
  %v3161 = vld [vmem:[#allocation3 + $0x11] sm:$0xff]
  %v3162 = vld [vmem:[#allocation3 + $0x19] sm:$0xff]
  %v3163 = vld [vmem:[#allocation3 + $0x21] sm:$0x3]
  %s3164 = scalar_lea.vmem %s45, 64
  %v3165 = vld [vmem:[%s3164] sm:$0xff]
  %v3166 = vld [vmem:[%s3164 + $0x8] sm:$0xff]
  %v3167 = vld [vmem:[%s3164 + $0x10] sm:$0xff]
  %v3168 = vld [vmem:[%s3164 + $0x18] sm:$0xff]
  %v3169 = vld [vmem:[%s3164 + $0x20] sm:$0xff]
  %v3170 = vld [vmem:[%s3164 + $0x28] sm:$0xff]
  %v3171 = vld [vmem:[%s3164 + $0x30] sm:$0xff]
  %v3172 = vld [vmem:[%s3164 + $0x38] sm:$0xff]
  %v3174 = vsel %vm131, %v3159, 0
  %v3177 = vsel %vm131, %v3160, 0
  %v3180 = vsel %vm131, %v3161, 0
  %v3183 = vsel %vm131, %v3162, 0
  %v3186 = vsel %vm131, %v3163, 0
  %3188 = vmatprep.subr.mxu0 0.0
  %3189 = vmatpush1.msra.mxu0 %v3165
  %3190 = vmatprep.subr.mxu0 0.0
  %3191 = vmatpush1.msra.mxu0 %v3166
  %3192 = vmatprep.subr.mxu0 0.0
  %3193 = vmatpush1.msra.mxu0 %v3167
  %3194 = vmatprep.subr.mxu0 0.0
  %3195 = vmatpush1.msra.mxu0 %v3168
  %3196 = vmatprep.subr.mxu0 0.0
  %3197 = vmatpush1.msra.mxu0 %v3169
  %3198 = vmatprep.subr.mxu0 0.0
  %3199 = vmatpush1.msra.mxu0 %v3170
  %3200 = vmatprep.subr.mxu0 0.0
  %3201 = vmatpush1.msra.mxu0 %v3171
  %3202 = vmatprep.subr.mxu0 0.0
  %3203 = vmatpush1.msra.mxu0 %v3172
  %3204 = vmatprep.subr.mxu0 0.0
  %3205 = vmatpush1.msra.mxu0 0.0
  %3206 = vmatprep.subr.mxu0 0.0
  %3207 = vmatpush1.msra.mxu0 0.0
  %3208 = vmatprep.subr.mxu0 0.0
  %3209 = vmatpush1.msra.mxu0 0.0
  %3210 = vmatprep.subr.mxu0 0.0
  %3211 = vmatpush1.msra.mxu0 0.0
  %3212 = vmatprep.subr.mxu0 0.0
  %3213 = vmatpush1.msra.mxu0 0.0
  %3214 = vmatprep.subr.mxu0 0.0
  %3215 = vmatpush1.msra.mxu0 0.0
  %3216 = vmatprep.subr.mxu0 0.0
  %3217 = vmatpush1.msra.mxu0 0.0
  %3218 = vmatprep.subr.mxu0 0.0
  %3219 = vmatpush1.msra.mxu0 0.0
  %3220 = vmatprep.subr.mxu0 0.0
  %3221 = vmatpush1.msra.mxu0 0.0
  %3222 = vmatprep.subr.mxu0 0.0
  %3223 = vmatpush1.msra.mxu0 0.0
  %3224 = vmatprep.subr.mxu0 0.0
  %3225 = vmatpush1.msra.mxu0 0.0
  %3226 = vmatprep.subr.mxu0 0.0
  %3227 = vmatpush1.msra.mxu0 0.0
  %3228 = vmatprep.subr.mxu0 0.0
  %3229 = vmatpush1.msra.mxu0 0.0
  %3230 = vmatprep.subr.mxu0 0.0
  %3231 = vmatpush1.msra.mxu0 0.0
  %3232 = vmatprep.subr.mxu0 0.0
  %3233 = vmatpush1.msra.mxu0 0.0
  %3234 = vmatprep.subr.mxu0 0.0
  %3235 = vmatpush1.msra.mxu0 0.0
  %3236 = vmatprep.subr.mxu0 0.0
  %3237 = vmatpush1.msra.mxu0 0.0
  %3238 = vmatprep.subr.mxu0 0.0
  %3239 = vmatpush1.msra.mxu0 0.0
  %3240 = vmatprep.subr.mxu0 0.0
  %3241 = vmatpush1.msra.mxu0 0.0
  %3242 = vmatprep.subr.mxu0 0.0
  %3243 = vmatpush1.msra.mxu0 0.0
  %3244 = vmatprep.subr.mxu0 0.0
  %3245 = vmatpush1.msra.mxu0 0.0
  %3246 = vmatprep.subr.mxu0 0.0
  %3247 = vmatpush1.msra.mxu0 0.0
  %3248 = vmatprep.subr.mxu0 0.0
  %3249 = vmatpush1.msra.mxu0 0.0
  %3250 = vmatprep.subr.mxu0 0.0
  %3251 = vmatpush1.msra.mxu0 0.0
  %3252 = vmatprep.mubr.f32.mxu0 0.0
  %3253 = vmatmul.mubr.f32.gmra.mrb[0].mxu0 %v3174
  %v3254 = vpop.f32.mrb[0].mxu0
  %v3255 = vadd.f32 0.0, %v3254
  %v3256 = vpop.f32.mrb[0].mxu0
  %3257 = vmatprep.mubr.f32.mxu0 0.0
  %3258 = vmatmul.mubr.f32.gmra.mrb[0].mxu0 %v3177
  %v3259 = vpop.f32.mrb[0].mxu0
  %v3260 = vadd.f32 0.0, %v3259
  %v3261 = vpop.f32.mrb[0].mxu0
  %3262 = vmatprep.mubr.f32.mxu0 0.0
  %3263 = vmatmul.mubr.f32.gmra.mrb[0].mxu0 %v3180
  %v3264 = vpop.f32.mrb[0].mxu0
  %v3265 = vadd.f32 0.0, %v3264
  %v3266 = vpop.f32.mrb[0].mxu0
  %3267 = vmatprep.mubr.f32.mxu0 0.0
  %3268 = vmatmul.mubr.f32.gmra.mrb[0].mxu0 %v3183
  %v3269 = vpop.f32.mrb[0].mxu0
  %v3270 = vadd.f32 0.0, %v3269
  %v3271 = vpop.f32.mrb[0].mxu0
  %3272 = vmatprep.mubr.f32.mxu0 0.0
  %3273 = vmatmul.mubr.f32.gmra.mrb[0].mxu0 %v3186
  %v3274 = vpop.f32.mrb[0].mxu0
  %v3275 = vadd.f32 0.0, %v3274
  %v3276 = vpop.f32.mrb[0].mxu0
  %3277 = vdwg.mxu0
  %v3278 = vadd.f32 %v3154, %v3255
  %v3279 = vadd.f32 %v3155, %v3260
  %v3280 = vadd.f32 %v3156, %v3265
  %v3281 = vadd.f32 %v3157, %v3270
  %v3282 = vadd.f32 %v3158, %v3275
  %v3283 = vld [vmem:[#allocation3 + $0x2] sm:$0xff]
  %v3284 = vld [vmem:[#allocation3 + $0xa] sm:$0xff]
  %v3285 = vld [vmem:[#allocation3 + $0x12] sm:$0xff]
  %v3286 = vld [vmem:[#allocation3 + $0x1a] sm:$0xff]
  %v3287 = vld [vmem:[#allocation3 + $0x22] sm:$0x3]
  %s3288 = scalar_lea.vmem %s45, 128
  %v3289 = vld [vmem:[%s3288] sm:$0xff]
  %v3290 = vld [vmem:[%s3288 + $0x8] sm:$0xff]
  %v3291 = vld [vmem:[%s3288 + $0x10] sm:$0xff]
  %v3292 = vld [vmem:[%s3288 + $0x18] sm:$0xff]
  %v3293 = vld [vmem:[%s3288 + $0x20] sm:$0xff]
  %v3294 = vld [vmem:[%s3288 + $0x28] sm:$0xff]
  %v3295 = vld [vmem:[%s3288 + $0x30] sm:$0xff]
  %v3296 = vld [vmem:[%s3288 + $0x38] sm:$0xff]
  %v3298 = vsel %vm131, %v3283, 0
  %v3301 = vsel %vm131, %v3284, 0
  %v3304 = vsel %vm131, %v3285, 0
  %v3307 = vsel %vm131, %v3286, 0
  %v3310 = vsel %vm131, %v3287, 0
  %3312 = vmatprep.subr.mxu0 0.0
  %3313 = vmatpush1.msra.mxu0 %v3289
  %3314 = vmatprep.subr.mxu0 0.0
  %3315 = vmatpush1.msra.mxu0 %v3290
  %3316 = vmatprep.subr.mxu0 0.0
  %3317 = vmatpush1.msra.mxu0 %v3291
  %3318 = vmatprep.subr.mxu0 0.0
  %3319 = vmatpush1.msra.mxu0 %v3292
  %3320 = vmatprep.subr.mxu0 0.0
  %3321 = vmatpush1.msra.mxu0 %v3293
  %3322 = vmatprep.subr.mxu0 0.0
  %3323 = vmatpush1.msra.mxu0 %v3294
  %3324 = vmatprep.subr.mxu0 0.0
  %3325 = vmatpush1.msra.mxu0 %v3295
  %3326 = vmatprep.subr.mxu0 0.0
  %3327 = vmatpush1.msra.mxu0 %v3296
  %3328 = vmatprep.subr.mxu0 0.0
  %3329 = vmatpush1.msra.mxu0 0.0
  %3330 = vmatprep.subr.mxu0 0.0
  %3331 = vmatpush1.msra.mxu0 0.0
  %3332 = vmatprep.subr.mxu0 0.0
  %3333 = vmatpush1.msra.mxu0 0.0
  %3334 = vmatprep.subr.mxu0 0.0
  %3335 = vmatpush1.msra.mxu0 0.0
  %3336 = vmatprep.subr.mxu0 0.0
  %3337 = vmatpush1.msra.mxu0 0.0
  %3338 = vmatprep.subr.mxu0 0.0
  %3339 = vmatpush1.msra.mxu0 0.0
  %3340 = vmatprep.subr.mxu0 0.0
  %3341 = vmatpush1.msra.mxu0 0.0
  %3342 = vmatprep.subr.mxu0 0.0
  %3343 = vmatpush1.msra.mxu0 0.0
  %3344 = vmatprep.subr.mxu0 0.0
  %3345 = vmatpush1.msra.mxu0 0.0
  %3346 = vmatprep.subr.mxu0 0.0
  %3347 = vmatpush1.msra.mxu0 0.0
  %3348 = vmatprep.subr.mxu0 0.0
  %3349 = vmatpush1.msra.mxu0 0.0
  %3350 = vmatprep.subr.mxu0 0.0
  %3351 = vmatpush1.msra.mxu0 0.0
  %3352 = vmatprep.subr.mxu0 0.0
  %3353 = vmatpush1.msra.mxu0 0.0
  %3354 = vmatprep.subr.mxu0 0.0
  %3355 = vmatpush1.msra.mxu0 0.0
  %3356 = vmatprep.subr.mxu0 0.0
  %3357 = vmatpush1.msra.mxu0 0.0
  %3358 = vmatprep.subr.mxu0 0.0
  %3359 = vmatpush1.msra.mxu0 0.0
  %3360 = vmatprep.subr.mxu0 0.0
  %3361 = vmatpush1.msra.mxu0 0.0
  %3362 = vmatprep.subr.mxu0 0.0
  %3363 = vmatpush1.msra.mxu0 0.0
  %3364 = vmatprep.subr.mxu0 0.0
  %3365 = vmatpush1.msra.mxu0 0.0
  %3366 = vmatprep.subr.mxu0 0.0
  %3367 = vmatpush1.msra.mxu0 0.0
  %3368 = vmatprep.subr.mxu0 0.0
  %3369 = vmatpush1.msra.mxu0 0.0
  %3370 = vmatprep.subr.mxu0 0.0
  %3371 = vmatpush1.msra.mxu0 0.0
  %3372 = vmatprep.subr.mxu0 0.0
  %3373 = vmatpush1.msra.mxu0 0.0
  %3374 = vmatprep.subr.mxu0 0.0
  %3375 = vmatpush1.msra.mxu0 0.0
  %3376 = vmatprep.mubr.f32.mxu0 0.0
  %3377 = vmatmul.mubr.f32.gmra.mrb[0].mxu0 %v3298
  %v3378 = vpop.f32.mrb[0].mxu0
  %v3379 = vadd.f32 0.0, %v3378
  %v3380 = vpop.f32.mrb[0].mxu0
  %3381 = vmatprep.mubr.f32.mxu0 0.0
  %3382 = vmatmul.mubr.f32.gmra.mrb[0].mxu0 %v3301
  %v3383 = vpop.f32.mrb[0].mxu0
  %v3384 = vadd.f32 0.0, %v3383
  %v3385 = vpop.f32.mrb[0].mxu0
  %3386 = vmatprep.mubr.f32.mxu0 0.0
  %3387 = vmatmul.mubr.f32.gmra.mrb[0].mxu0 %v3304
  %v3388 = vpop.f32.mrb[0].mxu0
  %v3389 = vadd.f32 0.0, %v3388
  %v3390 = vpop.f32.mrb[0].mxu0
  %3391 = vmatprep.mubr.f32.mxu0 0.0
  %3392 = vmatmul.mubr.f32.gmra.mrb[0].mxu0 %v3307
  %v3393 = vpop.f32.mrb[0].mxu0
  %v3394 = vadd.f32 0.0, %v3393
  %v3395 = vpop.f32.mrb[0].mxu0
  %3396 = vmatprep.mubr.f32.mxu0 0.0
  %3397 = vmatmul.mubr.f32.gmra.mrb[0].mxu0 %v3310
  %v3398 = vpop.f32.mrb[0].mxu0
  %v3399 = vadd.f32 0.0, %v3398
  %v3400 = vpop.f32.mrb[0].mxu0
  %3401 = vdwg.mxu0
  %v3402 = vadd.f32 %v3278, %v3379
  %v3403 = vadd.f32 %v3279, %v3384
  %v3404 = vadd.f32 %v3280, %v3389
  %v3405 = vadd.f32 %v3281, %v3394
  %v3406 = vadd.f32 %v3282, %v3399
  %v3407 = vld [vmem:[%s47] sm:$0x1]
  %v3409 = vlaneseq
  %v3410 = vshrl.u32 %v3409, 7
  %v3411 = vsub.s32 0, %v3410
  %v3412 = vrot.slane %v3407, %v3411
  %v3414 = vadd.f32 %v3402, %v3412
  %v3415 = vadd.f32 %v3403, %v3412
  %v3416 = vadd.f32 %v3404, %v3412
  %v3417 = vadd.f32 %v3405, %v3412
  %v3418 = vadd.f32 %v3406, %v3412
  %vm3419 = vcmp.ge.f32.partialorder %v3414, 0.0
  %vm3420 = vcmp.ge.f32.partialorder %v3415, 0.0
  %vm3421 = vcmp.ge.f32.partialorder %v3416, 0.0
  %vm3422 = vcmp.ge.f32.partialorder %v3417, 0.0
  %vm3423 = vcmp.ge.f32.partialorder %v3418, 0.0
  %v3424 = vmul.f32 %v3414, 0.2
  %v3425 = vmul.f32 %v3415, 0.2
  %v3426 = vmul.f32 %v3416, 0.2
  %v3427 = vmul.f32 %v3417, 0.2
  %v3428 = vmul.f32 %v3418, 0.2
  %v3429 = vsel %vm3419, %v3414, %v3424
  %v3430 = vsel %vm3420, %v3415, %v3425
  %v3431 = vsel %vm3421, %v3416, %v3426
  %v3432 = vsel %vm3422, %v3417, %v3427
  %v3433 = vsel %vm3423, %v3418, %v3428
  %v3434 = vld [vmem:[%s3] sm:$0xff]
  %v3435 = vld [vmem:[%s3 + $0x8] sm:$0xff]
  %v3436 = vld [vmem:[%s3 + $0x10] sm:$0xff]
  %v3437 = vld [vmem:[%s3 + $0x18] sm:$0xff]
  %v3438 = vld [vmem:[%s3 + $0x20] sm:$0x3]
  %3440 = vset.pattern.permute.xlu0 0
  %3441 = vperm.xlu0 %3440, %v3434
  %v3442 = vpop.permute.xlu0 %3441
  %3445 = vset.pattern.permute.xlu0 0
  %3446 = vperm.xlu0 %3445, %v3435
  %v3447 = vpop.permute.xlu0 %3446
  %3450 = vset.pattern.permute.xlu0 0
  %3451 = vperm.xlu0 %3450, %v3436
  %v3452 = vpop.permute.xlu0 %3451
  %3455 = vset.pattern.permute.xlu0 0
  %3456 = vperm.xlu0 %3455, %v3437
  %v3457 = vpop.permute.xlu0 %3456
  %3460 = vset.pattern.permute.xlu0 0
  %3461 = vperm.xlu0 %3460, %v3438
  %v3462 = vpop.permute.xlu0 %3461
  %v3464 = vmul.f32 %v3429, %v3442
  %v3465 = vmul.f32 %v3430, %v3447
  %v3466 = vmul.f32 %v3431, %v3452
  %v3467 = vmul.f32 %v3432, %v3457
  %v3468 = vmul.f32 %v3433, %v3462
  %3469 = vst [vmem:[#allocation4 + $0x1] sm:$0xff] %v3464
  %3470 = vst [vmem:[#allocation4 + $0x9] sm:$0xff] %v3465
  %3471 = vst [vmem:[#allocation4 + $0x11] sm:$0xff] %v3466
  %3472 = vst [vmem:[#allocation4 + $0x19] sm:$0xff] %v3467
  %3473 = vst [vmem:[#allocation4 + $0x21] sm:$0x3] %v3468
  %v3474 = vld [vmem:[#allocation4] sm:$0xff]
  %v3475 = vld [vmem:[#allocation4 + $0x8] sm:$0xff]
  %v3476 = vld [vmem:[#allocation4 + $0x10] sm:$0xff]
  %v3477 = vld [vmem:[#allocation4 + $0x18] sm:$0xff]
  %v3478 = vld [vmem:[#allocation4 + $0x20] sm:$0x3]
  %v3479 = vld [vmem:[%s49] sm:$0xff]
  %v3480 = vld [vmem:[%s49 + $0x8] sm:$0xff]
  %v3481 = vld [vmem:[%s49 + $0x10] sm:$0xff]
  %v3482 = vld [vmem:[%s49 + $0x18] sm:$0xff]
  %v3483 = vld [vmem:[%s49 + $0x20] sm:$0xff]
  %v3484 = vld [vmem:[%s49 + $0x28] sm:$0xff]
  %v3485 = vld [vmem:[%s49 + $0x30] sm:$0xff]
  %v3486 = vld [vmem:[%s49 + $0x38] sm:$0xff]
  %v3487 = vld [vmem:[%s49 + $0x40] sm:$0xff]
  %v3488 = vld [vmem:[%s49 + $0x48] sm:$0xff]
  %v3489 = vld [vmem:[%s49 + $0x50] sm:$0xff]
  %v3490 = vld [vmem:[%s49 + $0x58] sm:$0xff]
  %v3491 = vld [vmem:[%s49 + $0x60] sm:$0xff]
  %v3492 = vld [vmem:[%s49 + $0x68] sm:$0xff]
  %v3493 = vld [vmem:[%s49 + $0x70] sm:$0xff]
  %v3494 = vld [vmem:[%s49 + $0x78] sm:$0xff]
  %v3495 = vld [vmem:[#allocation4 + $0x1] sm:$0xff]
  %v3496 = vld [vmem:[#allocation4 + $0x9] sm:$0xff]
  %v3497 = vld [vmem:[#allocation4 + $0x11] sm:$0xff]
  %v3498 = vld [vmem:[#allocation4 + $0x19] sm:$0xff]
  %v3499 = vld [vmem:[#allocation4 + $0x21] sm:$0x3]
  %s3500 = scalar_lea.vmem %s49, 128
  %v3501 = vld [vmem:[%s3500] sm:$0xff]
  %v3502 = vld [vmem:[%s3500 + $0x8] sm:$0xff]
  %v3503 = vld [vmem:[%s3500 + $0x10] sm:$0xff]
  %v3504 = vld [vmem:[%s3500 + $0x18] sm:$0xff]
  %v3505 = vld [vmem:[%s3500 + $0x20] sm:$0xff]
  %v3506 = vld [vmem:[%s3500 + $0x28] sm:$0xff]
  %v3507 = vld [vmem:[%s3500 + $0x30] sm:$0xff]
  %v3508 = vld [vmem:[%s3500 + $0x38] sm:$0xff]
  %v3509 = vld [vmem:[%s3500 + $0x40] sm:$0xff]
  %v3510 = vld [vmem:[%s3500 + $0x48] sm:$0xff]
  %v3511 = vld [vmem:[%s3500 + $0x50] sm:$0xff]
  %v3512 = vld [vmem:[%s3500 + $0x58] sm:$0xff]
  %v3513 = vld [vmem:[%s3500 + $0x60] sm:$0xff]
  %v3514 = vld [vmem:[%s3500 + $0x68] sm:$0xff]
  %v3515 = vld [vmem:[%s3500 + $0x70] sm:$0xff]
  %v3516 = vld [vmem:[%s3500 + $0x78] sm:$0xff]
  %3517 = vmatprep.subr.mxu0 0.0
  %3518 = vmatpush1.msra.mxu0 %v3501
  %3519 = vmatprep.subr.mxu0 0.0
  %3520 = vmatpush1.msra.mxu0 %v3502
  %3521 = vmatprep.subr.mxu0 0.0
  %3522 = vmatpush1.msra.mxu0 %v3503
  %3523 = vmatprep.subr.mxu0 0.0
  %3524 = vmatpush1.msra.mxu0 %v3504
  %3525 = vmatprep.subr.mxu0 0.0
  %3526 = vmatpush1.msra.mxu0 %v3505
  %3527 = vmatprep.subr.mxu0 0.0
  %3528 = vmatpush1.msra.mxu0 %v3506
  %3529 = vmatprep.subr.mxu0 0.0
  %3530 = vmatpush1.msra.mxu0 %v3507
  %3531 = vmatprep.subr.mxu0 0.0
  %3532 = vmatpush1.msra.mxu0 %v3508
  %3533 = vmatprep.subr.mxu0 0.0
  %3534 = vmatpush1.msra.mxu0 %v3509
  %3535 = vmatprep.subr.mxu0 0.0
  %3536 = vmatpush1.msra.mxu0 %v3510
  %3537 = vmatprep.subr.mxu0 0.0
  %3538 = vmatpush1.msra.mxu0 %v3511
  %3539 = vmatprep.subr.mxu0 0.0
  %3540 = vmatpush1.msra.mxu0 %v3512
  %3541 = vmatprep.subr.mxu0 0.0
  %3542 = vmatpush1.msra.mxu0 %v3513
  %3543 = vmatprep.subr.mxu0 0.0
  %3544 = vmatpush1.msra.mxu0 %v3514
  %3545 = vmatprep.subr.mxu0 0.0
  %3546 = vmatpush1.msra.mxu0 %v3515
  %3547 = vmatprep.subr.mxu0 0.0
  %3548 = vmatpush1.msra.mxu0 %v3516
  %3549 = vmatprep.subr.mxu0 0.0
  %3550 = vmatpush1.msra.mxu0 0.0
  %3551 = vmatprep.subr.mxu0 0.0
  %3552 = vmatpush1.msra.mxu0 0.0
  %3553 = vmatprep.subr.mxu0 0.0
  %3554 = vmatpush1.msra.mxu0 0.0
  %3555 = vmatprep.subr.mxu0 0.0
  %3556 = vmatpush1.msra.mxu0 0.0
  %3557 = vmatprep.subr.mxu0 0.0
  %3558 = vmatpush1.msra.mxu0 0.0
  %3559 = vmatprep.subr.mxu0 0.0
  %3560 = vmatpush1.msra.mxu0 0.0
  %3561 = vmatprep.subr.mxu0 0.0
  %3562 = vmatpush1.msra.mxu0 0.0
  %3563 = vmatprep.subr.mxu0 0.0
  %3564 = vmatpush1.msra.mxu0 0.0
  %3565 = vmatprep.subr.mxu0 0.0
  %3566 = vmatpush1.msra.mxu0 0.0
  %3567 = vmatprep.subr.mxu0 0.0
  %3568 = vmatpush1.msra.mxu0 0.0
  %3569 = vmatprep.subr.mxu0 0.0
  %3570 = vmatpush1.msra.mxu0 0.0
  %3571 = vmatprep.subr.mxu0 0.0
  %3572 = vmatpush1.msra.mxu0 0.0
  %3573 = vmatprep.subr.mxu0 0.0
  %3574 = vmatpush1.msra.mxu0 0.0
  %3575 = vmatprep.subr.mxu0 0.0
  %3576 = vmatpush1.msra.mxu0 0.0
  %3577 = vmatprep.subr.mxu0 0.0
  %3578 = vmatpush1.msra.mxu0 0.0
  %3579 = vmatprep.subr.mxu0 0.0
  %3580 = vmatpush1.msra.mxu0 0.0
  %3581 = vmatprep.mubr.f32.mxu0 0.0
  %3582 = vmatmul.mubr.f32.gmra.mrb[0].mxu0 %v3495
  %v3583 = vpop.f32.mrb[0].mxu0
  %v3584 = vadd.f32 0.0, %v3583
  %v3585 = vpop.f32.mrb[0].mxu0
  %3586 = vmatprep.mubr.f32.mxu0 0.0
  %3587 = vmatmul.mubr.f32.gmra.mrb[0].mxu0 %v3496
  %v3588 = vpop.f32.mrb[0].mxu0
  %v3589 = vadd.f32 0.0, %v3588
  %v3590 = vpop.f32.mrb[0].mxu0
  %3591 = vmatprep.mubr.f32.mxu0 0.0
  %3592 = vmatmul.mubr.f32.gmra.mrb[0].mxu0 %v3497
  %v3593 = vpop.f32.mrb[0].mxu0
  %v3594 = vadd.f32 0.0, %v3593
  %v3595 = vpop.f32.mrb[0].mxu0
  %3596 = vmatprep.mubr.f32.mxu0 0.0
  %3597 = vmatmul.mubr.f32.gmra.mrb[0].mxu0 %v3498
  %v3598 = vpop.f32.mrb[0].mxu0
  %v3599 = vadd.f32 0.0, %v3598
  %v3600 = vpop.f32.mrb[0].mxu0
  %3601 = vmatprep.mubr.f32.mxu0 0.0
  %3602 = vmatmul.mubr.f32.gmra.mrb[0].mxu0 %v3499
  %v3603 = vpop.f32.mrb[0].mxu0
  %v3604 = vadd.f32 0.0, %v3603
  %v3605 = vpop.f32.mrb[0].mxu0
  %3606 = vdwg.mxu0
  %3607 = vmatprep.subr.mxu0 0.0
  %3608 = vmatpush1.msra.mxu0 %v3479
  %3609 = vmatprep.subr.mxu0 0.0
  %3610 = vmatpush1.msra.mxu0 %v3480
  %3611 = vmatprep.subr.mxu0 0.0
  %3612 = vmatpush1.msra.mxu0 %v3481
  %3613 = vmatprep.subr.mxu0 0.0
  %3614 = vmatpush1.msra.mxu0 %v3482
  %3615 = vmatprep.subr.mxu0 0.0
  %3616 = vmatpush1.msra.mxu0 %v3483
  %3617 = vmatprep.subr.mxu0 0.0
  %3618 = vmatpush1.msra.mxu0 %v3484
  %3619 = vmatprep.subr.mxu0 0.0
  %3620 = vmatpush1.msra.mxu0 %v3485
  %3621 = vmatprep.subr.mxu0 0.0
  %3622 = vmatpush1.msra.mxu0 %v3486
  %3623 = vmatprep.subr.mxu0 0.0
  %3624 = vmatpush1.msra.mxu0 %v3487
  %3625 = vmatprep.subr.mxu0 0.0
  %3626 = vmatpush1.msra.mxu0 %v3488
  %3627 = vmatprep.subr.mxu0 0.0
  %3628 = vmatpush1.msra.mxu0 %v3489
  %3629 = vmatprep.subr.mxu0 0.0
  %3630 = vmatpush1.msra.mxu0 %v3490
  %3631 = vmatprep.subr.mxu0 0.0
  %3632 = vmatpush1.msra.mxu0 %v3491
  %3633 = vmatprep.subr.mxu0 0.0
  %3634 = vmatpush1.msra.mxu0 %v3492
  %3635 = vmatprep.subr.mxu0 0.0
  %3636 = vmatpush1.msra.mxu0 %v3493
  %3637 = vmatprep.subr.mxu0 0.0
  %3638 = vmatpush1.msra.mxu0 %v3494
  %3639 = vmatprep.subr.mxu0 0.0
  %3640 = vmatpush1.msra.mxu0 0.0
  %3641 = vmatprep.subr.mxu0 0.0
  %3642 = vmatpush1.msra.mxu0 0.0
  %3643 = vmatprep.subr.mxu0 0.0
  %3644 = vmatpush1.msra.mxu0 0.0
  %3645 = vmatprep.subr.mxu0 0.0
  %3646 = vmatpush1.msra.mxu0 0.0
  %3647 = vmatprep.subr.mxu0 0.0
  %3648 = vmatpush1.msra.mxu0 0.0
  %3649 = vmatprep.subr.mxu0 0.0
  %3650 = vmatpush1.msra.mxu0 0.0
  %3651 = vmatprep.subr.mxu0 0.0
  %3652 = vmatpush1.msra.mxu0 0.0
  %3653 = vmatprep.subr.mxu0 0.0
  %3654 = vmatpush1.msra.mxu0 0.0
  %3655 = vmatprep.subr.mxu0 0.0
  %3656 = vmatpush1.msra.mxu0 0.0
  %3657 = vmatprep.subr.mxu0 0.0
  %3658 = vmatpush1.msra.mxu0 0.0
  %3659 = vmatprep.subr.mxu0 0.0
  %3660 = vmatpush1.msra.mxu0 0.0
  %3661 = vmatprep.subr.mxu0 0.0
  %3662 = vmatpush1.msra.mxu0 0.0
  %3663 = vmatprep.subr.mxu0 0.0
  %3664 = vmatpush1.msra.mxu0 0.0
  %3665 = vmatprep.subr.mxu0 0.0
  %3666 = vmatpush1.msra.mxu0 0.0
  %3667 = vmatprep.subr.mxu0 0.0
  %3668 = vmatpush1.msra.mxu0 0.0
  %3669 = vmatprep.subr.mxu0 0.0
  %3670 = vmatpush1.msra.mxu0 0.0
  %3671 = vmatprep.mubr.f32.mxu0 0.0
  %3672 = vmatmul.mubr.f32.gmra.mrb[0].mxu0 %v3474
  %v3673 = vpop.f32.mrb[0].mxu0
  %v3674 = vadd.f32 %v3584, %v3673
  %v3675 = vpop.f32.mrb[0].mxu0
  %3676 = vmatprep.mubr.f32.mxu0 0.0
  %3677 = vmatmul.mubr.f32.gmra.mrb[0].mxu0 %v3475
  %v3678 = vpop.f32.mrb[0].mxu0
  %v3679 = vadd.f32 %v3589, %v3678
  %v3680 = vpop.f32.mrb[0].mxu0
  %3681 = vmatprep.mubr.f32.mxu0 0.0
  %3682 = vmatmul.mubr.f32.gmra.mrb[0].mxu0 %v3476
  %v3683 = vpop.f32.mrb[0].mxu0
  %v3684 = vadd.f32 %v3594, %v3683
  %v3685 = vpop.f32.mrb[0].mxu0
  %3686 = vmatprep.mubr.f32.mxu0 0.0
  %3687 = vmatmul.mubr.f32.gmra.mrb[0].mxu0 %v3477
  %v3688 = vpop.f32.mrb[0].mxu0
  %v3689 = vadd.f32 %v3599, %v3688
  %v3690 = vpop.f32.mrb[0].mxu0
  %3691 = vmatprep.mubr.f32.mxu0 0.0
  %3692 = vmatmul.mubr.f32.gmra.mrb[0].mxu0 %v3478
  %v3693 = vpop.f32.mrb[0].mxu0
  %v3694 = vadd.f32 %v3604, %v3693
  %v3695 = vpop.f32.mrb[0].mxu0
  %3696 = vdwg.mxu0
  %v3697 = vld [vmem:[#allocation4 + $0x2] sm:$0xff]
  %v3698 = vld [vmem:[#allocation4 + $0xa] sm:$0xff]
  %v3699 = vld [vmem:[#allocation4 + $0x12] sm:$0xff]
  %v3700 = vld [vmem:[#allocation4 + $0x1a] sm:$0xff]
  %v3701 = vld [vmem:[#allocation4 + $0x22] sm:$0x3]
  %s3702 = scalar_lea.vmem %s49, 256
  %v3703 = vld [vmem:[%s3702] sm:$0xff]
  %v3704 = vld [vmem:[%s3702 + $0x8] sm:$0xff]
  %v3705 = vld [vmem:[%s3702 + $0x10] sm:$0xff]
  %v3706 = vld [vmem:[%s3702 + $0x18] sm:$0xff]
  %v3707 = vld [vmem:[%s3702 + $0x20] sm:$0xff]
  %v3708 = vld [vmem:[%s3702 + $0x28] sm:$0xff]
  %v3709 = vld [vmem:[%s3702 + $0x30] sm:$0xff]
  %v3710 = vld [vmem:[%s3702 + $0x38] sm:$0xff]
  %v3711 = vld [vmem:[%s3702 + $0x40] sm:$0xff]
  %v3712 = vld [vmem:[%s3702 + $0x48] sm:$0xff]
  %v3713 = vld [vmem:[%s3702 + $0x50] sm:$0xff]
  %v3714 = vld [vmem:[%s3702 + $0x58] sm:$0xff]
  %v3715 = vld [vmem:[%s3702 + $0x60] sm:$0xff]
  %v3716 = vld [vmem:[%s3702 + $0x68] sm:$0xff]
  %v3717 = vld [vmem:[%s3702 + $0x70] sm:$0xff]
  %v3718 = vld [vmem:[%s3702 + $0x78] sm:$0xff]
  %3719 = vmatprep.subr.mxu0 0.0
  %3720 = vmatpush1.msra.mxu0 %v3703
  %3721 = vmatprep.subr.mxu0 0.0
  %3722 = vmatpush1.msra.mxu0 %v3704
  %3723 = vmatprep.subr.mxu0 0.0
  %3724 = vmatpush1.msra.mxu0 %v3705
  %3725 = vmatprep.subr.mxu0 0.0
  %3726 = vmatpush1.msra.mxu0 %v3706
  %3727 = vmatprep.subr.mxu0 0.0
  %3728 = vmatpush1.msra.mxu0 %v3707
  %3729 = vmatprep.subr.mxu0 0.0
  %3730 = vmatpush1.msra.mxu0 %v3708
  %3731 = vmatprep.subr.mxu0 0.0
  %3732 = vmatpush1.msra.mxu0 %v3709
  %3733 = vmatprep.subr.mxu0 0.0
  %3734 = vmatpush1.msra.mxu0 %v3710
  %3735 = vmatprep.subr.mxu0 0.0
  %3736 = vmatpush1.msra.mxu0 %v3711
  %3737 = vmatprep.subr.mxu0 0.0
  %3738 = vmatpush1.msra.mxu0 %v3712
  %3739 = vmatprep.subr.mxu0 0.0
  %3740 = vmatpush1.msra.mxu0 %v3713
  %3741 = vmatprep.subr.mxu0 0.0
  %3742 = vmatpush1.msra.mxu0 %v3714
  %3743 = vmatprep.subr.mxu0 0.0
  %3744 = vmatpush1.msra.mxu0 %v3715
  %3745 = vmatprep.subr.mxu0 0.0
  %3746 = vmatpush1.msra.mxu0 %v3716
  %3747 = vmatprep.subr.mxu0 0.0
  %3748 = vmatpush1.msra.mxu0 %v3717
  %3749 = vmatprep.subr.mxu0 0.0
  %3750 = vmatpush1.msra.mxu0 %v3718
  %3751 = vmatprep.subr.mxu0 0.0
  %3752 = vmatpush1.msra.mxu0 0.0
  %3753 = vmatprep.subr.mxu0 0.0
  %3754 = vmatpush1.msra.mxu0 0.0
  %3755 = vmatprep.subr.mxu0 0.0
  %3756 = vmatpush1.msra.mxu0 0.0
  %3757 = vmatprep.subr.mxu0 0.0
  %3758 = vmatpush1.msra.mxu0 0.0
  %3759 = vmatprep.subr.mxu0 0.0
  %3760 = vmatpush1.msra.mxu0 0.0
  %3761 = vmatprep.subr.mxu0 0.0
  %3762 = vmatpush1.msra.mxu0 0.0
  %3763 = vmatprep.subr.mxu0 0.0
  %3764 = vmatpush1.msra.mxu0 0.0
  %3765 = vmatprep.subr.mxu0 0.0
  %3766 = vmatpush1.msra.mxu0 0.0
  %3767 = vmatprep.subr.mxu0 0.0
  %3768 = vmatpush1.msra.mxu0 0.0
  %3769 = vmatprep.subr.mxu0 0.0
  %3770 = vmatpush1.msra.mxu0 0.0
  %3771 = vmatprep.subr.mxu0 0.0
  %3772 = vmatpush1.msra.mxu0 0.0
  %3773 = vmatprep.subr.mxu0 0.0
  %3774 = vmatpush1.msra.mxu0 0.0
  %3775 = vmatprep.subr.mxu0 0.0
  %3776 = vmatpush1.msra.mxu0 0.0
  %3777 = vmatprep.subr.mxu0 0.0
  %3778 = vmatpush1.msra.mxu0 0.0
  %3779 = vmatprep.subr.mxu0 0.0
  %3780 = vmatpush1.msra.mxu0 0.0
  %3781 = vmatprep.subr.mxu0 0.0
  %3782 = vmatpush1.msra.mxu0 0.0
  %3783 = vmatprep.mubr.f32.mxu0 0.0
  %3784 = vmatmul.mubr.f32.gmra.mrb[0].mxu0 %v3697
  %v3785 = vpop.f32.mrb[0].mxu0
  %v3786 = vadd.f32 0.0, %v3785
  %v3787 = vpop.f32.mrb[0].mxu0
  %3788 = vmatprep.mubr.f32.mxu0 0.0
  %3789 = vmatmul.mubr.f32.gmra.mrb[0].mxu0 %v3698
  %v3790 = vpop.f32.mrb[0].mxu0
  %v3791 = vadd.f32 0.0, %v3790
  %v3792 = vpop.f32.mrb[0].mxu0
  %3793 = vmatprep.mubr.f32.mxu0 0.0
  %3794 = vmatmul.mubr.f32.gmra.mrb[0].mxu0 %v3699
  %v3795 = vpop.f32.mrb[0].mxu0
  %v3796 = vadd.f32 0.0, %v3795
  %v3797 = vpop.f32.mrb[0].mxu0
  %3798 = vmatprep.mubr.f32.mxu0 0.0
  %3799 = vmatmul.mubr.f32.gmra.mrb[0].mxu0 %v3700
  %v3800 = vpop.f32.mrb[0].mxu0
  %v3801 = vadd.f32 0.0, %v3800
  %v3802 = vpop.f32.mrb[0].mxu0
  %3803 = vmatprep.mubr.f32.mxu0 0.0
  %3804 = vmatmul.mubr.f32.gmra.mrb[0].mxu0 %v3701
  %v3805 = vpop.f32.mrb[0].mxu0
  %v3806 = vadd.f32 0.0, %v3805
  %v3807 = vpop.f32.mrb[0].mxu0
  %3808 = vdwg.mxu0
  %v3809 = vadd.f32 %v3674, %v3786
  %v3810 = vadd.f32 %v3679, %v3791
  %v3811 = vadd.f32 %v3684, %v3796
  %v3812 = vadd.f32 %v3689, %v3801
  %v3813 = vadd.f32 %v3694, %v3806
  %v3814 = vld [vmem:[%s51] sm:$0x1]
  %v3816 = vlaneseq
  %v3817 = vshrl.u32 %v3816, 7
  %v3818 = vsub.s32 0, %v3817
  %v3819 = vrot.slane %v3814, %v3818
  %v3821 = vadd.f32 %v3809, %v3819
  %v3822 = vadd.f32 %v3810, %v3819
  %v3823 = vadd.f32 %v3811, %v3819
  %v3824 = vadd.f32 %v3812, %v3819
  %v3825 = vadd.f32 %v3813, %v3819
  %vm3826 = vcmp.ge.f32.partialorder %v3821, 0.0
  %vm3827 = vcmp.ge.f32.partialorder %v3822, 0.0
  %vm3828 = vcmp.ge.f32.partialorder %v3823, 0.0
  %vm3829 = vcmp.ge.f32.partialorder %v3824, 0.0
  %vm3830 = vcmp.ge.f32.partialorder %v3825, 0.0
  %v3831 = vmul.f32 %v3821, 0.2
  %v3832 = vmul.f32 %v3822, 0.2
  %v3833 = vmul.f32 %v3823, 0.2
  %v3834 = vmul.f32 %v3824, 0.2
  %v3835 = vmul.f32 %v3825, 0.2
  %v3836 = vsel %vm3826, %v3821, %v3831
  %v3837 = vsel %vm3827, %v3822, %v3832
  %v3838 = vsel %vm3828, %v3823, %v3833
  %v3839 = vsel %vm3829, %v3824, %v3834
  %v3840 = vsel %vm3830, %v3825, %v3835
  %v3841 = vld [vmem:[%s3] sm:$0xff]
  %v3842 = vld [vmem:[%s3 + $0x8] sm:$0xff]
  %v3843 = vld [vmem:[%s3 + $0x10] sm:$0xff]
  %v3844 = vld [vmem:[%s3 + $0x18] sm:$0xff]
  %v3845 = vld [vmem:[%s3 + $0x20] sm:$0x3]
  %3847 = vset.pattern.permute.xlu0 0
  %3848 = vperm.xlu0 %3847, %v3841
  %v3849 = vpop.permute.xlu0 %3848
  %3852 = vset.pattern.permute.xlu0 0
  %3853 = vperm.xlu0 %3852, %v3842
  %v3854 = vpop.permute.xlu0 %3853
  %3857 = vset.pattern.permute.xlu0 0
  %3858 = vperm.xlu0 %3857, %v3843
  %v3859 = vpop.permute.xlu0 %3858
  %3862 = vset.pattern.permute.xlu0 0
  %3863 = vperm.xlu0 %3862, %v3844
  %v3864 = vpop.permute.xlu0 %3863
  %3867 = vset.pattern.permute.xlu0 0
  %3868 = vperm.xlu0 %3867, %v3845
  %v3869 = vpop.permute.xlu0 %3868
  %v3871 = vmul.f32 %v3836, %v3849
  %v3872 = vmul.f32 %v3837, %v3854
  %v3873 = vmul.f32 %v3838, %v3859
  %v3874 = vmul.f32 %v3839, %v3864
  %v3875 = vmul.f32 %v3840, %v3869
  %3876 = vst [vmem:[#allocation5 + $0x1] sm:$0xff] %v3871
  %3877 = vst [vmem:[#allocation5 + $0x9] sm:$0xff] %v3872
  %3878 = vst [vmem:[#allocation5 + $0x11] sm:$0xff] %v3873
  %3879 = vst [vmem:[#allocation5 + $0x19] sm:$0xff] %v3874
  %3880 = vst [vmem:[#allocation5 + $0x21] sm:$0x3] %v3875
  %v3881 = vld [vmem:[#allocation5] sm:$0xff]
  %v3882 = vld [vmem:[#allocation5 + $0x8] sm:$0xff]
  %v3883 = vld [vmem:[#allocation5 + $0x10] sm:$0xff]
  %v3884 = vld [vmem:[#allocation5 + $0x18] sm:$0xff]
  %v3885 = vld [vmem:[#allocation5 + $0x20] sm:$0x3]
  %v3886 = vld [vmem:[%s53] sm:$0xff]
  %v3887 = vld [vmem:[%s53 + $0x8] sm:$0xff]
  %v3888 = vld [vmem:[%s53 + $0x10] sm:$0xff]
  %v3889 = vld [vmem:[%s53 + $0x18] sm:$0xff]
  %v3890 = vld [vmem:[%s53 + $0x20] sm:$0xff]
  %v3891 = vld [vmem:[%s53 + $0x28] sm:$0xff]
  %v3892 = vld [vmem:[%s53 + $0x30] sm:$0xff]
  %v3893 = vld [vmem:[%s53 + $0x38] sm:$0xff]
  %v3894 = vld [vmem:[%s53 + $0x40] sm:$0xff]
  %v3895 = vld [vmem:[%s53 + $0x48] sm:$0xff]
  %v3896 = vld [vmem:[%s53 + $0x50] sm:$0xff]
  %v3897 = vld [vmem:[%s53 + $0x58] sm:$0xff]
  %v3898 = vld [vmem:[%s53 + $0x60] sm:$0xff]
  %v3899 = vld [vmem:[%s53 + $0x68] sm:$0xff]
  %v3900 = vld [vmem:[%s53 + $0x70] sm:$0xff]
  %v3901 = vld [vmem:[%s53 + $0x78] sm:$0xff]
  %v3902 = vld [vmem:[#allocation5 + $0x1] sm:$0xff]
  %v3903 = vld [vmem:[#allocation5 + $0x9] sm:$0xff]
  %v3904 = vld [vmem:[#allocation5 + $0x11] sm:$0xff]
  %v3905 = vld [vmem:[#allocation5 + $0x19] sm:$0xff]
  %v3906 = vld [vmem:[#allocation5 + $0x21] sm:$0x3]
  %s3907 = scalar_lea.vmem %s53, 128
  %v3908 = vld [vmem:[%s3907] sm:$0xff]
  %v3909 = vld [vmem:[%s3907 + $0x8] sm:$0xff]
  %v3910 = vld [vmem:[%s3907 + $0x10] sm:$0xff]
  %v3911 = vld [vmem:[%s3907 + $0x18] sm:$0xff]
  %v3912 = vld [vmem:[%s3907 + $0x20] sm:$0xff]
  %v3913 = vld [vmem:[%s3907 + $0x28] sm:$0xff]
  %v3914 = vld [vmem:[%s3907 + $0x30] sm:$0xff]
  %v3915 = vld [vmem:[%s3907 + $0x38] sm:$0xff]
  %v3916 = vld [vmem:[%s3907 + $0x40] sm:$0xff]
  %v3917 = vld [vmem:[%s3907 + $0x48] sm:$0xff]
  %v3918 = vld [vmem:[%s3907 + $0x50] sm:$0xff]
  %v3919 = vld [vmem:[%s3907 + $0x58] sm:$0xff]
  %v3920 = vld [vmem:[%s3907 + $0x60] sm:$0xff]
  %v3921 = vld [vmem:[%s3907 + $0x68] sm:$0xff]
  %v3922 = vld [vmem:[%s3907 + $0x70] sm:$0xff]
  %v3923 = vld [vmem:[%s3907 + $0x78] sm:$0xff]
  %3924 = vmatprep.subr.mxu0 0.0
  %3925 = vmatpush1.msra.mxu0 %v3908
  %3926 = vmatprep.subr.mxu0 0.0
  %3927 = vmatpush1.msra.mxu0 %v3909
  %3928 = vmatprep.subr.mxu0 0.0
  %3929 = vmatpush1.msra.mxu0 %v3910
  %3930 = vmatprep.subr.mxu0 0.0
  %3931 = vmatpush1.msra.mxu0 %v3911
  %3932 = vmatprep.subr.mxu0 0.0
  %3933 = vmatpush1.msra.mxu0 %v3912
  %3934 = vmatprep.subr.mxu0 0.0
  %3935 = vmatpush1.msra.mxu0 %v3913
  %3936 = vmatprep.subr.mxu0 0.0
  %3937 = vmatpush1.msra.mxu0 %v3914
  %3938 = vmatprep.subr.mxu0 0.0
  %3939 = vmatpush1.msra.mxu0 %v3915
  %3940 = vmatprep.subr.mxu0 0.0
  %3941 = vmatpush1.msra.mxu0 %v3916
  %3942 = vmatprep.subr.mxu0 0.0
  %3943 = vmatpush1.msra.mxu0 %v3917
  %3944 = vmatprep.subr.mxu0 0.0
  %3945 = vmatpush1.msra.mxu0 %v3918
  %3946 = vmatprep.subr.mxu0 0.0
  %3947 = vmatpush1.msra.mxu0 %v3919
  %3948 = vmatprep.subr.mxu0 0.0
  %3949 = vmatpush1.msra.mxu0 %v3920
  %3950 = vmatprep.subr.mxu0 0.0
  %3951 = vmatpush1.msra.mxu0 %v3921
  %3952 = vmatprep.subr.mxu0 0.0
  %3953 = vmatpush1.msra.mxu0 %v3922
  %3954 = vmatprep.subr.mxu0 0.0
  %3955 = vmatpush1.msra.mxu0 %v3923
  %3956 = vmatprep.subr.mxu0 0.0
  %3957 = vmatpush1.msra.mxu0 0.0
  %3958 = vmatprep.subr.mxu0 0.0
  %3959 = vmatpush1.msra.mxu0 0.0
  %3960 = vmatprep.subr.mxu0 0.0
  %3961 = vmatpush1.msra.mxu0 0.0
  %3962 = vmatprep.subr.mxu0 0.0
  %3963 = vmatpush1.msra.mxu0 0.0
  %3964 = vmatprep.subr.mxu0 0.0
  %3965 = vmatpush1.msra.mxu0 0.0
  %3966 = vmatprep.subr.mxu0 0.0
  %3967 = vmatpush1.msra.mxu0 0.0
  %3968 = vmatprep.subr.mxu0 0.0
  %3969 = vmatpush1.msra.mxu0 0.0
  %3970 = vmatprep.subr.mxu0 0.0
  %3971 = vmatpush1.msra.mxu0 0.0
  %3972 = vmatprep.subr.mxu0 0.0
  %3973 = vmatpush1.msra.mxu0 0.0
  %3974 = vmatprep.subr.mxu0 0.0
  %3975 = vmatpush1.msra.mxu0 0.0
  %3976 = vmatprep.subr.mxu0 0.0
  %3977 = vmatpush1.msra.mxu0 0.0
  %3978 = vmatprep.subr.mxu0 0.0
  %3979 = vmatpush1.msra.mxu0 0.0
  %3980 = vmatprep.subr.mxu0 0.0
  %3981 = vmatpush1.msra.mxu0 0.0
  %3982 = vmatprep.subr.mxu0 0.0
  %3983 = vmatpush1.msra.mxu0 0.0
  %3984 = vmatprep.subr.mxu0 0.0
  %3985 = vmatpush1.msra.mxu0 0.0
  %3986 = vmatprep.subr.mxu0 0.0
  %3987 = vmatpush1.msra.mxu0 0.0
  %3988 = vmatprep.mubr.f32.mxu0 0.0
  %3989 = vmatmul.mubr.f32.gmra.mrb[0].mxu0 %v3902
  %v3990 = vpop.f32.mrb[0].mxu0
  %v3991 = vadd.f32 0.0, %v3990
  %v3992 = vpop.f32.mrb[0].mxu0
  %3993 = vmatprep.mubr.f32.mxu0 0.0
  %3994 = vmatmul.mubr.f32.gmra.mrb[0].mxu0 %v3903
  %v3995 = vpop.f32.mrb[0].mxu0
  %v3996 = vadd.f32 0.0, %v3995
  %v3997 = vpop.f32.mrb[0].mxu0
  %3998 = vmatprep.mubr.f32.mxu0 0.0
  %3999 = vmatmul.mubr.f32.gmra.mrb[0].mxu0 %v3904
  %v4000 = vpop.f32.mrb[0].mxu0
  %v4001 = vadd.f32 0.0, %v4000
  %v4002 = vpop.f32.mrb[0].mxu0
  %4003 = vmatprep.mubr.f32.mxu0 0.0
  %4004 = vmatmul.mubr.f32.gmra.mrb[0].mxu0 %v3905
  %v4005 = vpop.f32.mrb[0].mxu0
  %v4006 = vadd.f32 0.0, %v4005
  %v4007 = vpop.f32.mrb[0].mxu0
  %4008 = vmatprep.mubr.f32.mxu0 0.0
  %4009 = vmatmul.mubr.f32.gmra.mrb[0].mxu0 %v3906
  %v4010 = vpop.f32.mrb[0].mxu0
  %v4011 = vadd.f32 0.0, %v4010
  %v4012 = vpop.f32.mrb[0].mxu0
  %4013 = vdwg.mxu0
  %4014 = vmatprep.subr.mxu0 0.0
  %4015 = vmatpush1.msra.mxu0 %v3886
  %4016 = vmatprep.subr.mxu0 0.0
  %4017 = vmatpush1.msra.mxu0 %v3887
  %4018 = vmatprep.subr.mxu0 0.0
  %4019 = vmatpush1.msra.mxu0 %v3888
  %4020 = vmatprep.subr.mxu0 0.0
  %4021 = vmatpush1.msra.mxu0 %v3889
  %4022 = vmatprep.subr.mxu0 0.0
  %4023 = vmatpush1.msra.mxu0 %v3890
  %4024 = vmatprep.subr.mxu0 0.0
  %4025 = vmatpush1.msra.mxu0 %v3891
  %4026 = vmatprep.subr.mxu0 0.0
  %4027 = vmatpush1.msra.mxu0 %v3892
  %4028 = vmatprep.subr.mxu0 0.0
  %4029 = vmatpush1.msra.mxu0 %v3893
  %4030 = vmatprep.subr.mxu0 0.0
  %4031 = vmatpush1.msra.mxu0 %v3894
  %4032 = vmatprep.subr.mxu0 0.0
  %4033 = vmatpush1.msra.mxu0 %v3895
  %4034 = vmatprep.subr.mxu0 0.0
  %4035 = vmatpush1.msra.mxu0 %v3896
  %4036 = vmatprep.subr.mxu0 0.0
  %4037 = vmatpush1.msra.mxu0 %v3897
  %4038 = vmatprep.subr.mxu0 0.0
  %4039 = vmatpush1.msra.mxu0 %v3898
  %4040 = vmatprep.subr.mxu0 0.0
  %4041 = vmatpush1.msra.mxu0 %v3899
  %4042 = vmatprep.subr.mxu0 0.0
  %4043 = vmatpush1.msra.mxu0 %v3900
  %4044 = vmatprep.subr.mxu0 0.0
  %4045 = vmatpush1.msra.mxu0 %v3901
  %4046 = vmatprep.subr.mxu0 0.0
  %4047 = vmatpush1.msra.mxu0 0.0
  %4048 = vmatprep.subr.mxu0 0.0
  %4049 = vmatpush1.msra.mxu0 0.0
  %4050 = vmatprep.subr.mxu0 0.0
  %4051 = vmatpush1.msra.mxu0 0.0
  %4052 = vmatprep.subr.mxu0 0.0
  %4053 = vmatpush1.msra.mxu0 0.0
  %4054 = vmatprep.subr.mxu0 0.0
  %4055 = vmatpush1.msra.mxu0 0.0
  %4056 = vmatprep.subr.mxu0 0.0
  %4057 = vmatpush1.msra.mxu0 0.0
  %4058 = vmatprep.subr.mxu0 0.0
  %4059 = vmatpush1.msra.mxu0 0.0
  %4060 = vmatprep.subr.mxu0 0.0
  %4061 = vmatpush1.msra.mxu0 0.0
  %4062 = vmatprep.subr.mxu0 0.0
  %4063 = vmatpush1.msra.mxu0 0.0
  %4064 = vmatprep.subr.mxu0 0.0
  %4065 = vmatpush1.msra.mxu0 0.0
  %4066 = vmatprep.subr.mxu0 0.0
  %4067 = vmatpush1.msra.mxu0 0.0
  %4068 = vmatprep.subr.mxu0 0.0
  %4069 = vmatpush1.msra.mxu0 0.0
  %4070 = vmatprep.subr.mxu0 0.0
  %4071 = vmatpush1.msra.mxu0 0.0
  %4072 = vmatprep.subr.mxu0 0.0
  %4073 = vmatpush1.msra.mxu0 0.0
  %4074 = vmatprep.subr.mxu0 0.0
  %4075 = vmatpush1.msra.mxu0 0.0
  %4076 = vmatprep.subr.mxu0 0.0
  %4077 = vmatpush1.msra.mxu0 0.0
  %4078 = vmatprep.mubr.f32.mxu0 0.0
  %4079 = vmatmul.mubr.f32.gmra.mrb[0].mxu0 %v3881
  %v4080 = vpop.f32.mrb[0].mxu0
  %v4081 = vadd.f32 %v3991, %v4080
  %v4082 = vpop.f32.mrb[0].mxu0
  %4083 = vmatprep.mubr.f32.mxu0 0.0
  %4084 = vmatmul.mubr.f32.gmra.mrb[0].mxu0 %v3882
  %v4085 = vpop.f32.mrb[0].mxu0
  %v4086 = vadd.f32 %v3996, %v4085
  %v4087 = vpop.f32.mrb[0].mxu0
  %4088 = vmatprep.mubr.f32.mxu0 0.0
  %4089 = vmatmul.mubr.f32.gmra.mrb[0].mxu0 %v3883
  %v4090 = vpop.f32.mrb[0].mxu0
  %v4091 = vadd.f32 %v4001, %v4090
  %v4092 = vpop.f32.mrb[0].mxu0
  %4093 = vmatprep.mubr.f32.mxu0 0.0
  %4094 = vmatmul.mubr.f32.gmra.mrb[0].mxu0 %v3884
  %v4095 = vpop.f32.mrb[0].mxu0
  %v4096 = vadd.f32 %v4006, %v4095
  %v4097 = vpop.f32.mrb[0].mxu0
  %4098 = vmatprep.mubr.f32.mxu0 0.0
  %4099 = vmatmul.mubr.f32.gmra.mrb[0].mxu0 %v3885
  %v4100 = vpop.f32.mrb[0].mxu0
  %v4101 = vadd.f32 %v4011, %v4100
  %v4102 = vpop.f32.mrb[0].mxu0
  %4103 = vdwg.mxu0
  %v4104 = vld [vmem:[#allocation5 + $0x2] sm:$0xff]
  %v4105 = vld [vmem:[#allocation5 + $0xa] sm:$0xff]
  %v4106 = vld [vmem:[#allocation5 + $0x12] sm:$0xff]
  %v4107 = vld [vmem:[#allocation5 + $0x1a] sm:$0xff]
  %v4108 = vld [vmem:[#allocation5 + $0x22] sm:$0x3]
  %s4109 = scalar_lea.vmem %s53, 256
  %v4110 = vld [vmem:[%s4109] sm:$0xff]
  %v4111 = vld [vmem:[%s4109 + $0x8] sm:$0xff]
  %v4112 = vld [vmem:[%s4109 + $0x10] sm:$0xff]
  %v4113 = vld [vmem:[%s4109 + $0x18] sm:$0xff]
  %v4114 = vld [vmem:[%s4109 + $0x20] sm:$0xff]
  %v4115 = vld [vmem:[%s4109 + $0x28] sm:$0xff]
  %v4116 = vld [vmem:[%s4109 + $0x30] sm:$0xff]
  %v4117 = vld [vmem:[%s4109 + $0x38] sm:$0xff]
  %v4118 = vld [vmem:[%s4109 + $0x40] sm:$0xff]
  %v4119 = vld [vmem:[%s4109 + $0x48] sm:$0xff]
  %v4120 = vld [vmem:[%s4109 + $0x50] sm:$0xff]
  %v4121 = vld [vmem:[%s4109 + $0x58] sm:$0xff]
  %v4122 = vld [vmem:[%s4109 + $0x60] sm:$0xff]
  %v4123 = vld [vmem:[%s4109 + $0x68] sm:$0xff]
  %v4124 = vld [vmem:[%s4109 + $0x70] sm:$0xff]
  %v4125 = vld [vmem:[%s4109 + $0x78] sm:$0xff]
  %4126 = vmatprep.subr.mxu0 0.0
  %4127 = vmatpush1.msra.mxu0 %v4110
  %4128 = vmatprep.subr.mxu0 0.0
  %4129 = vmatpush1.msra.mxu0 %v4111
  %4130 = vmatprep.subr.mxu0 0.0
  %4131 = vmatpush1.msra.mxu0 %v4112
  %4132 = vmatprep.subr.mxu0 0.0
  %4133 = vmatpush1.msra.mxu0 %v4113
  %4134 = vmatprep.subr.mxu0 0.0
  %4135 = vmatpush1.msra.mxu0 %v4114
  %4136 = vmatprep.subr.mxu0 0.0
  %4137 = vmatpush1.msra.mxu0 %v4115
  %4138 = vmatprep.subr.mxu0 0.0
  %4139 = vmatpush1.msra.mxu0 %v4116
  %4140 = vmatprep.subr.mxu0 0.0
  %4141 = vmatpush1.msra.mxu0 %v4117
  %4142 = vmatprep.subr.mxu0 0.0
  %4143 = vmatpush1.msra.mxu0 %v4118
  %4144 = vmatprep.subr.mxu0 0.0
  %4145 = vmatpush1.msra.mxu0 %v4119
  %4146 = vmatprep.subr.mxu0 0.0
  %4147 = vmatpush1.msra.mxu0 %v4120
  %4148 = vmatprep.subr.mxu0 0.0
  %4149 = vmatpush1.msra.mxu0 %v4121
  %4150 = vmatprep.subr.mxu0 0.0
  %4151 = vmatpush1.msra.mxu0 %v4122
  %4152 = vmatprep.subr.mxu0 0.0
  %4153 = vmatpush1.msra.mxu0 %v4123
  %4154 = vmatprep.subr.mxu0 0.0
  %4155 = vmatpush1.msra.mxu0 %v4124
  %4156 = vmatprep.subr.mxu0 0.0
  %4157 = vmatpush1.msra.mxu0 %v4125
  %4158 = vmatprep.subr.mxu0 0.0
  %4159 = vmatpush1.msra.mxu0 0.0
  %4160 = vmatprep.subr.mxu0 0.0
  %4161 = vmatpush1.msra.mxu0 0.0
  %4162 = vmatprep.subr.mxu0 0.0
  %4163 = vmatpush1.msra.mxu0 0.0
  %4164 = vmatprep.subr.mxu0 0.0
  %4165 = vmatpush1.msra.mxu0 0.0
  %4166 = vmatprep.subr.mxu0 0.0
  %4167 = vmatpush1.msra.mxu0 0.0
  %4168 = vmatprep.subr.mxu0 0.0
  %4169 = vmatpush1.msra.mxu0 0.0
  %4170 = vmatprep.subr.mxu0 0.0
  %4171 = vmatpush1.msra.mxu0 0.0
  %4172 = vmatprep.subr.mxu0 0.0
  %4173 = vmatpush1.msra.mxu0 0.0
  %4174 = vmatprep.subr.mxu0 0.0
  %4175 = vmatpush1.msra.mxu0 0.0
  %4176 = vmatprep.subr.mxu0 0.0
  %4177 = vmatpush1.msra.mxu0 0.0
  %4178 = vmatprep.subr.mxu0 0.0
  %4179 = vmatpush1.msra.mxu0 0.0
  %4180 = vmatprep.subr.mxu0 0.0
  %4181 = vmatpush1.msra.mxu0 0.0
  %4182 = vmatprep.subr.mxu0 0.0
  %4183 = vmatpush1.msra.mxu0 0.0
  %4184 = vmatprep.subr.mxu0 0.0
  %4185 = vmatpush1.msra.mxu0 0.0
  %4186 = vmatprep.subr.mxu0 0.0
  %4187 = vmatpush1.msra.mxu0 0.0
  %4188 = vmatprep.subr.mxu0 0.0
  %4189 = vmatpush1.msra.mxu0 0.0
  %4190 = vmatprep.mubr.f32.mxu0 0.0
  %4191 = vmatmul.mubr.f32.gmra.mrb[0].mxu0 %v4104
  %v4192 = vpop.f32.mrb[0].mxu0
  %v4193 = vadd.f32 0.0, %v4192
  %v4194 = vpop.f32.mrb[0].mxu0
  %4195 = vmatprep.mubr.f32.mxu0 0.0
  %4196 = vmatmul.mubr.f32.gmra.mrb[0].mxu0 %v4105
  %v4197 = vpop.f32.mrb[0].mxu0
  %v4198 = vadd.f32 0.0, %v4197
  %v4199 = vpop.f32.mrb[0].mxu0
  %4200 = vmatprep.mubr.f32.mxu0 0.0
  %4201 = vmatmul.mubr.f32.gmra.mrb[0].mxu0 %v4106
  %v4202 = vpop.f32.mrb[0].mxu0
  %v4203 = vadd.f32 0.0, %v4202
  %v4204 = vpop.f32.mrb[0].mxu0
  %4205 = vmatprep.mubr.f32.mxu0 0.0
  %4206 = vmatmul.mubr.f32.gmra.mrb[0].mxu0 %v4107
  %v4207 = vpop.f32.mrb[0].mxu0
  %v4208 = vadd.f32 0.0, %v4207
  %v4209 = vpop.f32.mrb[0].mxu0
  %4210 = vmatprep.mubr.f32.mxu0 0.0
  %4211 = vmatmul.mubr.f32.gmra.mrb[0].mxu0 %v4108
  %v4212 = vpop.f32.mrb[0].mxu0
  %v4213 = vadd.f32 0.0, %v4212
  %v4214 = vpop.f32.mrb[0].mxu0
  %4215 = vdwg.mxu0
  %v4216 = vadd.f32 %v4081, %v4193
  %v4217 = vadd.f32 %v4086, %v4198
  %v4218 = vadd.f32 %v4091, %v4203
  %v4219 = vadd.f32 %v4096, %v4208
  %v4220 = vadd.f32 %v4101, %v4213
  %v4221 = vld [vmem:[%s55] sm:$0x1]
  %v4223 = vlaneseq
  %v4224 = vshrl.u32 %v4223, 7
  %v4225 = vsub.s32 0, %v4224
  %v4226 = vrot.slane %v4221, %v4225
  %v4228 = vadd.f32 %v4216, %v4226
  %v4229 = vadd.f32 %v4217, %v4226
  %v4230 = vadd.f32 %v4218, %v4226
  %v4231 = vadd.f32 %v4219, %v4226
  %v4232 = vadd.f32 %v4220, %v4226
  %vm4233 = vcmp.ge.f32.partialorder %v4228, 0.0
  %vm4234 = vcmp.ge.f32.partialorder %v4229, 0.0
  %vm4235 = vcmp.ge.f32.partialorder %v4230, 0.0
  %vm4236 = vcmp.ge.f32.partialorder %v4231, 0.0
  %vm4237 = vcmp.ge.f32.partialorder %v4232, 0.0
  %v4238 = vmul.f32 %v4228, 0.2
  %v4239 = vmul.f32 %v4229, 0.2
  %v4240 = vmul.f32 %v4230, 0.2
  %v4241 = vmul.f32 %v4231, 0.2
  %v4242 = vmul.f32 %v4232, 0.2
  %v4243 = vsel %vm4233, %v4228, %v4238
  %v4244 = vsel %vm4234, %v4229, %v4239
  %v4245 = vsel %vm4235, %v4230, %v4240
  %v4246 = vsel %vm4236, %v4231, %v4241
  %v4247 = vsel %vm4237, %v4232, %v4242
  %v4248 = vld [vmem:[%s3] sm:$0xff]
  %v4249 = vld [vmem:[%s3 + $0x8] sm:$0xff]
  %v4250 = vld [vmem:[%s3 + $0x10] sm:$0xff]
  %v4251 = vld [vmem:[%s3 + $0x18] sm:$0xff]
  %v4252 = vld [vmem:[%s3 + $0x20] sm:$0x3]
  %4254 = vset.pattern.permute.xlu0 0
  %4255 = vperm.xlu0 %4254, %v4248
  %v4256 = vpop.permute.xlu0 %4255
  %4259 = vset.pattern.permute.xlu0 0
  %4260 = vperm.xlu0 %4259, %v4249
  %v4261 = vpop.permute.xlu0 %4260
  %4264 = vset.pattern.permute.xlu0 0
  %4265 = vperm.xlu0 %4264, %v4250
  %v4266 = vpop.permute.xlu0 %4265
  %4269 = vset.pattern.permute.xlu0 0
  %4270 = vperm.xlu0 %4269, %v4251
  %v4271 = vpop.permute.xlu0 %4270
  %4274 = vset.pattern.permute.xlu0 0
  %4275 = vperm.xlu0 %4274, %v4252
  %v4276 = vpop.permute.xlu0 %4275
  %v4278 = vmul.f32 %v4243, %v4256
  %v4279 = vmul.f32 %v4244, %v4261
  %v4280 = vmul.f32 %v4245, %v4266
  %v4281 = vmul.f32 %v4246, %v4271
  %v4282 = vmul.f32 %v4247, %v4276
  %4283 = vst [vmem:[#allocation4 + $0x1] sm:$0xff] %v4278
  %4284 = vst [vmem:[#allocation4 + $0x9] sm:$0xff] %v4279
  %4285 = vst [vmem:[#allocation4 + $0x11] sm:$0xff] %v4280
  %4286 = vst [vmem:[#allocation4 + $0x19] sm:$0xff] %v4281
  %4287 = vst [vmem:[#allocation4 + $0x21] sm:$0x3] %v4282
  %v4288 = vld [vmem:[#allocation4] sm:$0xff]
  %v4289 = vld [vmem:[#allocation4 + $0x8] sm:$0xff]
  %v4290 = vld [vmem:[#allocation4 + $0x10] sm:$0xff]
  %v4291 = vld [vmem:[#allocation4 + $0x18] sm:$0xff]
  %v4292 = vld [vmem:[#allocation4 + $0x20] sm:$0x3]
  %v4293 = vld [vmem:[%s57] sm:$0xff]
  %v4294 = vld [vmem:[%s57 + $0x8] sm:$0xff]
  %v4295 = vld [vmem:[%s57 + $0x10] sm:$0xff]
  %v4296 = vld [vmem:[%s57 + $0x18] sm:$0xff]
  %v4297 = vld [vmem:[%s57 + $0x20] sm:$0xff]
  %v4298 = vld [vmem:[%s57 + $0x28] sm:$0xff]
  %v4299 = vld [vmem:[%s57 + $0x30] sm:$0xff]
  %v4300 = vld [vmem:[%s57 + $0x38] sm:$0xff]
  %v4301 = vld [vmem:[%s57 + $0x40] sm:$0xff]
  %v4302 = vld [vmem:[%s57 + $0x48] sm:$0xff]
  %v4303 = vld [vmem:[%s57 + $0x50] sm:$0xff]
  %v4304 = vld [vmem:[%s57 + $0x58] sm:$0xff]
  %v4305 = vld [vmem:[%s57 + $0x60] sm:$0xff]
  %v4306 = vld [vmem:[%s57 + $0x68] sm:$0xff]
  %v4307 = vld [vmem:[%s57 + $0x70] sm:$0xff]
  %v4308 = vld [vmem:[%s57 + $0x78] sm:$0xff]
  %v4309 = vld [vmem:[#allocation4 + $0x1] sm:$0xff]
  %v4310 = vld [vmem:[#allocation4 + $0x9] sm:$0xff]
  %v4311 = vld [vmem:[#allocation4 + $0x11] sm:$0xff]
  %v4312 = vld [vmem:[#allocation4 + $0x19] sm:$0xff]
  %v4313 = vld [vmem:[#allocation4 + $0x21] sm:$0x3]
  %s4314 = scalar_lea.vmem %s57, 128
  %v4315 = vld [vmem:[%s4314] sm:$0xff]
  %v4316 = vld [vmem:[%s4314 + $0x8] sm:$0xff]
  %v4317 = vld [vmem:[%s4314 + $0x10] sm:$0xff]
  %v4318 = vld [vmem:[%s4314 + $0x18] sm:$0xff]
  %v4319 = vld [vmem:[%s4314 + $0x20] sm:$0xff]
  %v4320 = vld [vmem:[%s4314 + $0x28] sm:$0xff]
  %v4321 = vld [vmem:[%s4314 + $0x30] sm:$0xff]
  %v4322 = vld [vmem:[%s4314 + $0x38] sm:$0xff]
  %v4323 = vld [vmem:[%s4314 + $0x40] sm:$0xff]
  %v4324 = vld [vmem:[%s4314 + $0x48] sm:$0xff]
  %v4325 = vld [vmem:[%s4314 + $0x50] sm:$0xff]
  %v4326 = vld [vmem:[%s4314 + $0x58] sm:$0xff]
  %v4327 = vld [vmem:[%s4314 + $0x60] sm:$0xff]
  %v4328 = vld [vmem:[%s4314 + $0x68] sm:$0xff]
  %v4329 = vld [vmem:[%s4314 + $0x70] sm:$0xff]
  %v4330 = vld [vmem:[%s4314 + $0x78] sm:$0xff]
  %4331 = vmatprep.subr.mxu0 0.0
  %4332 = vmatpush1.msra.mxu0 %v4315
  %4333 = vmatprep.subr.mxu0 0.0
  %4334 = vmatpush1.msra.mxu0 %v4316
  %4335 = vmatprep.subr.mxu0 0.0
  %4336 = vmatpush1.msra.mxu0 %v4317
  %4337 = vmatprep.subr.mxu0 0.0
  %4338 = vmatpush1.msra.mxu0 %v4318
  %4339 = vmatprep.subr.mxu0 0.0
  %4340 = vmatpush1.msra.mxu0 %v4319
  %4341 = vmatprep.subr.mxu0 0.0
  %4342 = vmatpush1.msra.mxu0 %v4320
  %4343 = vmatprep.subr.mxu0 0.0
  %4344 = vmatpush1.msra.mxu0 %v4321
  %4345 = vmatprep.subr.mxu0 0.0
  %4346 = vmatpush1.msra.mxu0 %v4322
  %4347 = vmatprep.subr.mxu0 0.0
  %4348 = vmatpush1.msra.mxu0 %v4323
  %4349 = vmatprep.subr.mxu0 0.0
  %4350 = vmatpush1.msra.mxu0 %v4324
  %4351 = vmatprep.subr.mxu0 0.0
  %4352 = vmatpush1.msra.mxu0 %v4325
  %4353 = vmatprep.subr.mxu0 0.0
  %4354 = vmatpush1.msra.mxu0 %v4326
  %4355 = vmatprep.subr.mxu0 0.0
  %4356 = vmatpush1.msra.mxu0 %v4327
  %4357 = vmatprep.subr.mxu0 0.0
  %4358 = vmatpush1.msra.mxu0 %v4328
  %4359 = vmatprep.subr.mxu0 0.0
  %4360 = vmatpush1.msra.mxu0 %v4329
  %4361 = vmatprep.subr.mxu0 0.0
  %4362 = vmatpush1.msra.mxu0 %v4330
  %4363 = vmatprep.subr.mxu0 0.0
  %4364 = vmatpush1.msra.mxu0 0.0
  %4365 = vmatprep.subr.mxu0 0.0
  %4366 = vmatpush1.msra.mxu0 0.0
  %4367 = vmatprep.subr.mxu0 0.0
  %4368 = vmatpush1.msra.mxu0 0.0
  %4369 = vmatprep.subr.mxu0 0.0
  %4370 = vmatpush1.msra.mxu0 0.0
  %4371 = vmatprep.subr.mxu0 0.0
  %4372 = vmatpush1.msra.mxu0 0.0
  %4373 = vmatprep.subr.mxu0 0.0
  %4374 = vmatpush1.msra.mxu0 0.0
  %4375 = vmatprep.subr.mxu0 0.0
  %4376 = vmatpush1.msra.mxu0 0.0
  %4377 = vmatprep.subr.mxu0 0.0
  %4378 = vmatpush1.msra.mxu0 0.0
  %4379 = vmatprep.subr.mxu0 0.0
  %4380 = vmatpush1.msra.mxu0 0.0
  %4381 = vmatprep.subr.mxu0 0.0
  %4382 = vmatpush1.msra.mxu0 0.0
  %4383 = vmatprep.subr.mxu0 0.0
  %4384 = vmatpush1.msra.mxu0 0.0
  %4385 = vmatprep.subr.mxu0 0.0
  %4386 = vmatpush1.msra.mxu0 0.0
  %4387 = vmatprep.subr.mxu0 0.0
  %4388 = vmatpush1.msra.mxu0 0.0
  %4389 = vmatprep.subr.mxu0 0.0
  %4390 = vmatpush1.msra.mxu0 0.0
  %4391 = vmatprep.subr.mxu0 0.0
  %4392 = vmatpush1.msra.mxu0 0.0
  %4393 = vmatprep.subr.mxu0 0.0
  %4394 = vmatpush1.msra.mxu0 0.0
  %4395 = vmatprep.mubr.f32.mxu0 0.0
  %4396 = vmatmul.mubr.f32.gmra.mrb[0].mxu0 %v4309
  %v4397 = vpop.f32.mrb[0].mxu0
  %v4398 = vadd.f32 0.0, %v4397
  %v4399 = vpop.f32.mrb[0].mxu0
  %4400 = vmatprep.mubr.f32.mxu0 0.0
  %4401 = vmatmul.mubr.f32.gmra.mrb[0].mxu0 %v4310
  %v4402 = vpop.f32.mrb[0].mxu0
  %v4403 = vadd.f32 0.0, %v4402
  %v4404 = vpop.f32.mrb[0].mxu0
  %4405 = vmatprep.mubr.f32.mxu0 0.0
  %4406 = vmatmul.mubr.f32.gmra.mrb[0].mxu0 %v4311
  %v4407 = vpop.f32.mrb[0].mxu0
  %v4408 = vadd.f32 0.0, %v4407
  %v4409 = vpop.f32.mrb[0].mxu0
  %4410 = vmatprep.mubr.f32.mxu0 0.0
  %4411 = vmatmul.mubr.f32.gmra.mrb[0].mxu0 %v4312
  %v4412 = vpop.f32.mrb[0].mxu0
  %v4413 = vadd.f32 0.0, %v4412
  %v4414 = vpop.f32.mrb[0].mxu0
  %4415 = vmatprep.mubr.f32.mxu0 0.0
  %4416 = vmatmul.mubr.f32.gmra.mrb[0].mxu0 %v4313
  %v4417 = vpop.f32.mrb[0].mxu0
  %v4418 = vadd.f32 0.0, %v4417
  %v4419 = vpop.f32.mrb[0].mxu0
  %4420 = vdwg.mxu0
  %4421 = vmatprep.subr.mxu0 0.0
  %4422 = vmatpush1.msra.mxu0 %v4293
  %4423 = vmatprep.subr.mxu0 0.0
  %4424 = vmatpush1.msra.mxu0 %v4294
  %4425 = vmatprep.subr.mxu0 0.0
  %4426 = vmatpush1.msra.mxu0 %v4295
  %4427 = vmatprep.subr.mxu0 0.0
  %4428 = vmatpush1.msra.mxu0 %v4296
  %4429 = vmatprep.subr.mxu0 0.0
  %4430 = vmatpush1.msra.mxu0 %v4297
  %4431 = vmatprep.subr.mxu0 0.0
  %4432 = vmatpush1.msra.mxu0 %v4298
  %4433 = vmatprep.subr.mxu0 0.0
  %4434 = vmatpush1.msra.mxu0 %v4299
  %4435 = vmatprep.subr.mxu0 0.0
  %4436 = vmatpush1.msra.mxu0 %v4300
  %4437 = vmatprep.subr.mxu0 0.0
  %4438 = vmatpush1.msra.mxu0 %v4301
  %4439 = vmatprep.subr.mxu0 0.0
  %4440 = vmatpush1.msra.mxu0 %v4302
  %4441 = vmatprep.subr.mxu0 0.0
  %4442 = vmatpush1.msra.mxu0 %v4303
  %4443 = vmatprep.subr.mxu0 0.0
  %4444 = vmatpush1.msra.mxu0 %v4304
  %4445 = vmatprep.subr.mxu0 0.0
  %4446 = vmatpush1.msra.mxu0 %v4305
  %4447 = vmatprep.subr.mxu0 0.0
  %4448 = vmatpush1.msra.mxu0 %v4306
  %4449 = vmatprep.subr.mxu0 0.0
  %4450 = vmatpush1.msra.mxu0 %v4307
  %4451 = vmatprep.subr.mxu0 0.0
  %4452 = vmatpush1.msra.mxu0 %v4308
  %4453 = vmatprep.subr.mxu0 0.0
  %4454 = vmatpush1.msra.mxu0 0.0
  %4455 = vmatprep.subr.mxu0 0.0
  %4456 = vmatpush1.msra.mxu0 0.0
  %4457 = vmatprep.subr.mxu0 0.0
  %4458 = vmatpush1.msra.mxu0 0.0
  %4459 = vmatprep.subr.mxu0 0.0
  %4460 = vmatpush1.msra.mxu0 0.0
  %4461 = vmatprep.subr.mxu0 0.0
  %4462 = vmatpush1.msra.mxu0 0.0
  %4463 = vmatprep.subr.mxu0 0.0
  %4464 = vmatpush1.msra.mxu0 0.0
  %4465 = vmatprep.subr.mxu0 0.0
  %4466 = vmatpush1.msra.mxu0 0.0
  %4467 = vmatprep.subr.mxu0 0.0
  %4468 = vmatpush1.msra.mxu0 0.0
  %4469 = vmatprep.subr.mxu0 0.0
  %4470 = vmatpush1.msra.mxu0 0.0
  %4471 = vmatprep.subr.mxu0 0.0
  %4472 = vmatpush1.msra.mxu0 0.0
  %4473 = vmatprep.subr.mxu0 0.0
  %4474 = vmatpush1.msra.mxu0 0.0
  %4475 = vmatprep.subr.mxu0 0.0
  %4476 = vmatpush1.msra.mxu0 0.0
  %4477 = vmatprep.subr.mxu0 0.0
  %4478 = vmatpush1.msra.mxu0 0.0
  %4479 = vmatprep.subr.mxu0 0.0
  %4480 = vmatpush1.msra.mxu0 0.0
  %4481 = vmatprep.subr.mxu0 0.0
  %4482 = vmatpush1.msra.mxu0 0.0
  %4483 = vmatprep.subr.mxu0 0.0
  %4484 = vmatpush1.msra.mxu0 0.0
  %4485 = vmatprep.mubr.f32.mxu0 0.0
  %4486 = vmatmul.mubr.f32.gmra.mrb[0].mxu0 %v4288
  %v4487 = vpop.f32.mrb[0].mxu0
  %v4488 = vadd.f32 %v4398, %v4487
  %v4489 = vpop.f32.mrb[0].mxu0
  %4490 = vmatprep.mubr.f32.mxu0 0.0
  %4491 = vmatmul.mubr.f32.gmra.mrb[0].mxu0 %v4289
  %v4492 = vpop.f32.mrb[0].mxu0
  %v4493 = vadd.f32 %v4403, %v4492
  %v4494 = vpop.f32.mrb[0].mxu0
  %4495 = vmatprep.mubr.f32.mxu0 0.0
  %4496 = vmatmul.mubr.f32.gmra.mrb[0].mxu0 %v4290
  %v4497 = vpop.f32.mrb[0].mxu0
  %v4498 = vadd.f32 %v4408, %v4497
  %v4499 = vpop.f32.mrb[0].mxu0
  %4500 = vmatprep.mubr.f32.mxu0 0.0
  %4501 = vmatmul.mubr.f32.gmra.mrb[0].mxu0 %v4291
  %v4502 = vpop.f32.mrb[0].mxu0
  %v4503 = vadd.f32 %v4413, %v4502
  %v4504 = vpop.f32.mrb[0].mxu0
  %4505 = vmatprep.mubr.f32.mxu0 0.0
  %4506 = vmatmul.mubr.f32.gmra.mrb[0].mxu0 %v4292
  %v4507 = vpop.f32.mrb[0].mxu0
  %v4508 = vadd.f32 %v4418, %v4507
  %v4509 = vpop.f32.mrb[0].mxu0
  %4510 = vdwg.mxu0
  %v4511 = vld [vmem:[#allocation4 + $0x2] sm:$0xff]
  %v4512 = vld [vmem:[#allocation4 + $0xa] sm:$0xff]
  %v4513 = vld [vmem:[#allocation4 + $0x12] sm:$0xff]
  %v4514 = vld [vmem:[#allocation4 + $0x1a] sm:$0xff]
  %v4515 = vld [vmem:[#allocation4 + $0x22] sm:$0x3]
  %s4516 = scalar_lea.vmem %s57, 256
  %v4517 = vld [vmem:[%s4516] sm:$0xff]
  %v4518 = vld [vmem:[%s4516 + $0x8] sm:$0xff]
  %v4519 = vld [vmem:[%s4516 + $0x10] sm:$0xff]
  %v4520 = vld [vmem:[%s4516 + $0x18] sm:$0xff]
  %v4521 = vld [vmem:[%s4516 + $0x20] sm:$0xff]
  %v4522 = vld [vmem:[%s4516 + $0x28] sm:$0xff]
  %v4523 = vld [vmem:[%s4516 + $0x30] sm:$0xff]
  %v4524 = vld [vmem:[%s4516 + $0x38] sm:$0xff]
  %v4525 = vld [vmem:[%s4516 + $0x40] sm:$0xff]
  %v4526 = vld [vmem:[%s4516 + $0x48] sm:$0xff]
  %v4527 = vld [vmem:[%s4516 + $0x50] sm:$0xff]
  %v4528 = vld [vmem:[%s4516 + $0x58] sm:$0xff]
  %v4529 = vld [vmem:[%s4516 + $0x60] sm:$0xff]
  %v4530 = vld [vmem:[%s4516 + $0x68] sm:$0xff]
  %v4531 = vld [vmem:[%s4516 + $0x70] sm:$0xff]
  %v4532 = vld [vmem:[%s4516 + $0x78] sm:$0xff]
  %4533 = vmatprep.subr.mxu0 0.0
  %4534 = vmatpush1.msra.mxu0 %v4517
  %4535 = vmatprep.subr.mxu0 0.0
  %4536 = vmatpush1.msra.mxu0 %v4518
  %4537 = vmatprep.subr.mxu0 0.0
  %4538 = vmatpush1.msra.mxu0 %v4519
  %4539 = vmatprep.subr.mxu0 0.0
  %4540 = vmatpush1.msra.mxu0 %v4520
  %4541 = vmatprep.subr.mxu0 0.0
  %4542 = vmatpush1.msra.mxu0 %v4521
  %4543 = vmatprep.subr.mxu0 0.0
  %4544 = vmatpush1.msra.mxu0 %v4522
  %4545 = vmatprep.subr.mxu0 0.0
  %4546 = vmatpush1.msra.mxu0 %v4523
  %4547 = vmatprep.subr.mxu0 0.0
  %4548 = vmatpush1.msra.mxu0 %v4524
  %4549 = vmatprep.subr.mxu0 0.0
  %4550 = vmatpush1.msra.mxu0 %v4525
  %4551 = vmatprep.subr.mxu0 0.0
  %4552 = vmatpush1.msra.mxu0 %v4526
  %4553 = vmatprep.subr.mxu0 0.0
  %4554 = vmatpush1.msra.mxu0 %v4527
  %4555 = vmatprep.subr.mxu0 0.0
  %4556 = vmatpush1.msra.mxu0 %v4528
  %4557 = vmatprep.subr.mxu0 0.0
  %4558 = vmatpush1.msra.mxu0 %v4529
  %4559 = vmatprep.subr.mxu0 0.0
  %4560 = vmatpush1.msra.mxu0 %v4530
  %4561 = vmatprep.subr.mxu0 0.0
  %4562 = vmatpush1.msra.mxu0 %v4531
  %4563 = vmatprep.subr.mxu0 0.0
  %4564 = vmatpush1.msra.mxu0 %v4532
  %4565 = vmatprep.subr.mxu0 0.0
  %4566 = vmatpush1.msra.mxu0 0.0
  %4567 = vmatprep.subr.mxu0 0.0
  %4568 = vmatpush1.msra.mxu0 0.0
  %4569 = vmatprep.subr.mxu0 0.0
  %4570 = vmatpush1.msra.mxu0 0.0
  %4571 = vmatprep.subr.mxu0 0.0
  %4572 = vmatpush1.msra.mxu0 0.0
  %4573 = vmatprep.subr.mxu0 0.0
  %4574 = vmatpush1.msra.mxu0 0.0
  %4575 = vmatprep.subr.mxu0 0.0
  %4576 = vmatpush1.msra.mxu0 0.0
  %4577 = vmatprep.subr.mxu0 0.0
  %4578 = vmatpush1.msra.mxu0 0.0
  %4579 = vmatprep.subr.mxu0 0.0
  %4580 = vmatpush1.msra.mxu0 0.0
  %4581 = vmatprep.subr.mxu0 0.0
  %4582 = vmatpush1.msra.mxu0 0.0
  %4583 = vmatprep.subr.mxu0 0.0
  %4584 = vmatpush1.msra.mxu0 0.0
  %4585 = vmatprep.subr.mxu0 0.0
  %4586 = vmatpush1.msra.mxu0 0.0
  %4587 = vmatprep.subr.mxu0 0.0
  %4588 = vmatpush1.msra.mxu0 0.0
  %4589 = vmatprep.subr.mxu0 0.0
  %4590 = vmatpush1.msra.mxu0 0.0
  %4591 = vmatprep.subr.mxu0 0.0
  %4592 = vmatpush1.msra.mxu0 0.0
  %4593 = vmatprep.subr.mxu0 0.0
  %4594 = vmatpush1.msra.mxu0 0.0
  %4595 = vmatprep.subr.mxu0 0.0
  %4596 = vmatpush1.msra.mxu0 0.0
  %4597 = vmatprep.mubr.f32.mxu0 0.0
  %4598 = vmatmul.mubr.f32.gmra.mrb[0].mxu0 %v4511
  %v4599 = vpop.f32.mrb[0].mxu0
  %v4600 = vadd.f32 0.0, %v4599
  %v4601 = vpop.f32.mrb[0].mxu0
  %4602 = vmatprep.mubr.f32.mxu0 0.0
  %4603 = vmatmul.mubr.f32.gmra.mrb[0].mxu0 %v4512
  %v4604 = vpop.f32.mrb[0].mxu0
  %v4605 = vadd.f32 0.0, %v4604
  %v4606 = vpop.f32.mrb[0].mxu0
  %4607 = vmatprep.mubr.f32.mxu0 0.0
  %4608 = vmatmul.mubr.f32.gmra.mrb[0].mxu0 %v4513
  %v4609 = vpop.f32.mrb[0].mxu0
  %v4610 = vadd.f32 0.0, %v4609
  %v4611 = vpop.f32.mrb[0].mxu0
  %4612 = vmatprep.mubr.f32.mxu0 0.0
  %4613 = vmatmul.mubr.f32.gmra.mrb[0].mxu0 %v4514
  %v4614 = vpop.f32.mrb[0].mxu0
  %v4615 = vadd.f32 0.0, %v4614
  %v4616 = vpop.f32.mrb[0].mxu0
  %4617 = vmatprep.mubr.f32.mxu0 0.0
  %4618 = vmatmul.mubr.f32.gmra.mrb[0].mxu0 %v4515
  %v4619 = vpop.f32.mrb[0].mxu0
  %v4620 = vadd.f32 0.0, %v4619
  %v4621 = vpop.f32.mrb[0].mxu0
  %4622 = vdwg.mxu0
  %v4623 = vadd.f32 %v4488, %v4600
  %v4624 = vadd.f32 %v4493, %v4605
  %v4625 = vadd.f32 %v4498, %v4610
  %v4626 = vadd.f32 %v4503, %v4615
  %v4627 = vadd.f32 %v4508, %v4620
  %v4628 = vld [vmem:[%s59] sm:$0x1]
  %v4630 = vlaneseq
  %v4631 = vshrl.u32 %v4630, 7
  %v4632 = vsub.s32 0, %v4631
  %v4633 = vrot.slane %v4628, %v4632
  %v4635 = vadd.f32 %v4623, %v4633
  %v4636 = vadd.f32 %v4624, %v4633
  %v4637 = vadd.f32 %v4625, %v4633
  %v4638 = vadd.f32 %v4626, %v4633
  %v4639 = vadd.f32 %v4627, %v4633
  %v4640 = vld [vmem:[%s3] sm:$0xff]
  %v4641 = vld [vmem:[%s3 + $0x8] sm:$0xff]
  %v4642 = vld [vmem:[%s3 + $0x10] sm:$0xff]
  %v4643 = vld [vmem:[%s3 + $0x18] sm:$0xff]
  %v4644 = vld [vmem:[%s3 + $0x20] sm:$0x3]
  %4646 = vset.pattern.permute.xlu0 0
  %4647 = vperm.xlu0 %4646, %v4640
  %v4648 = vpop.permute.xlu0 %4647
  %4651 = vset.pattern.permute.xlu0 0
  %4652 = vperm.xlu0 %4651, %v4641
  %v4653 = vpop.permute.xlu0 %4652
  %4656 = vset.pattern.permute.xlu0 0
  %4657 = vperm.xlu0 %4656, %v4642
  %v4658 = vpop.permute.xlu0 %4657
  %4661 = vset.pattern.permute.xlu0 0
  %4662 = vperm.xlu0 %4661, %v4643
  %v4663 = vpop.permute.xlu0 %4662
  %4666 = vset.pattern.permute.xlu0 0
  %4667 = vperm.xlu0 %4666, %v4644
  %v4668 = vpop.permute.xlu0 %4667
  %v4670 = vmul.f32 %v4635, %v4648
  %v4671 = vmul.f32 %v4636, %v4653
  %v4672 = vmul.f32 %v4637, %v4658
  %v4673 = vmul.f32 %v4638, %v4663
  %v4674 = vmul.f32 %v4639, %v4668
  %4675 = vst [vmem:[%s61] sm:$0xff] %v4670
  %4676 = vst [vmem:[%s61 + $0x8] sm:$0xff] %v4671
  %4677 = vst [vmem:[%s61 + $0x10] sm:$0xff] %v4672
  %4678 = vst [vmem:[%s61 + $0x18] sm:$0xff] %v4673
  %4679 = vst [vmem:[%s61 + $0x20] sm:$0x3] %v4674
  // Predicated region
  $region122: #{_lambda_.1} parent=0 // pred_check
    _
  $region123: #{_lambda_.1} parent=0 // pred_check_branch
    %4681 = sbr.rel (0) target = $region125
  $region124: #{_lambda_.1} parent=0 // pred_region
    _
  $region125: #{_lambda_.1} parent=0 // pred_fallthru
    _
  // Predicated region
  $region126: #{_lambda_.1} parent=0 // pred_check
    _
  $region127: #{_lambda_.1} parent=0 // pred_check_branch
    %4683 = sbr.rel (0) target = $region129
  $region128: #{_lambda_.1} parent=0 // pred_region
    _
  $region129: #{_lambda_.1} parent=0 // pred_fallthru
    _

</llo_original>
